<compile_context>
chip_gen: v7x
topology: tpu7x:2x2x1
jax: 0.10.0
libtpu: 0.0.40
codegen_flags: <defaults>
</compile_context>

<pallas_src>
import functools

import jax
import jax.numpy as jnp
from jax import lax
from jax.experimental import pallas as pl
from jax.experimental.pallas import tpu as pltpu

LANE = 128     # channel dims are padded to lane-dense multiples of this
SUBLANE = 8    # padded image width is kept a multiple of this


def _round_up(x, m):
    return ((x + m - 1) // m) * m


def _vmem_limit_bytes():
    """~75% of physical VMEM per generation; None (compiler default) if the
    hardware query is unavailable."""
    try:
        cap = int(pltpu.get_tpu_info().vmem_capacity_bytes)
        return (cap * 3) // 4
    except Exception:
        return None


# ------------------------------ Pallas kernel --------------------------------

def _resnet_block_kernel(*refs, stride, H, W, Hp, Wp, Ho, Wo, identity_shortcut):
    """One whole bottleneck block for one image.

    x_ref   : (1, Hp*Wp, Cin_p) bf16 NHWC image, spatially padded by the +1
              halo (width right-padded so Wp % 8 == 0), channels padded to 128k.
    mask_ref: (Hp*Wp, 1) f32 interior mask (1 inside the image, 0 on the halo).
    w*_ref  : bf16 weights with eval-mode BN scale folded in; b*_ref are the
              matching f32 BN shifts, shape (1, C).
    o_ref   : (1, Ho*Wo, Cout_p) bf16 block output (post-residual ReLU).
    """
    if identity_shortcut:
        (x_ref, mask_ref, w1_ref, b1_ref, w2_ref, b2_ref,
         w3_ref, b3_ref, o_ref) = refs
        ws_ref = None
    else:
        (x_ref, mask_ref, w1_ref, b1_ref, w2_ref, b2_ref,
         w3_ref, b3_ref, ws_ref, o_ref) = refs

    cinp = w1_ref.shape[0]
    midp = w1_ref.shape[1]

    xm = x_ref[0]                                            # (Hp*Wp, Cin_p) bf16

    # ---- conv1: 1x1 (+folded BN) + shift + ReLU; one mask-mul halo re-zero ---
    h = jnp.dot(xm, w1_ref[...], preferred_element_type=jnp.float32)
    h = jnp.maximum(h + b1_ref[...], 0.0) * mask_ref[...]    # single broadcast mul
    h3 = h.astype(jnp.bfloat16).reshape(Hp, Wp, midp)        # single bf16 cast

    # ---- conv2: 3x3 / stride s / pad 1 as 9 shifted MXU matmuls --------------
    if stride == 1:
        def tap(dy, dx):
            return h3[dy:dy + Ho, dx:dx + Wo, :]
    else:
        # Extract the stride x stride phase sub-images once; each tap is then a
        # contiguous slice (avoids 9 independent strided slices).
        phase = [[lax.slice(h3, (py, px, 0), (Hp, Wp, midp), (stride, stride, 1))
                  for px in range(stride)] for py in range(stride)]

        def tap(dy, dx):
            p = phase[dy % stride][dx % stride]
            return p[dy // stride:dy // stride + Ho,
                     dx // stride:dx // stride + Wo, :]

    acc = None
    for t in range(9):
        dy, dx = divmod(t, 3)
        d = jnp.dot(tap(dy, dx).reshape(Ho * Wo, midp), w2_ref[t],
                    preferred_element_type=jnp.float32)
        acc = d if acc is None else acc + d                  # tap 0 initializes acc
    h2 = jnp.maximum(acc + b2_ref[...], 0.0).astype(jnp.bfloat16)

    # ---- conv3 (1x1 + folded BN) ---------------------------------------------
    main = jnp.dot(h2, w3_ref[...], preferred_element_type=jnp.float32)

    # ---- shortcut: pre-slice valid (strided) pixels BEFORE any matmul --------
    x3 = xm.reshape(Hp, Wp, cinp)
    if stride == 1:
        xv = x3[1:H + 1, 1:W + 1, :]
    else:
        xv = lax.slice(x3, (1, 1, 0),
                       (2 + (Ho - 1) * stride, 2 + (Wo - 1) * stride, cinp),
                       (stride, stride, 1))
    xv = xv.reshape(Ho * Wo, cinp)
    if identity_shortcut:
        sc = xv.astype(jnp.float32)     # nn.Identity(): no projection matmul
    else:
        sc = jnp.dot(xv, ws_ref[...], preferred_element_type=jnp.float32)

    # residual add + final ReLU in f32; bf16 writeback
    o_ref[0] = jnp.maximum(main + sc + b3_ref[...], 0.0).astype(o_ref.dtype)


# --------------------------------- wrapper -----------------------------------

def resnet_block_forward(x_nchw, packed):
    """Forward pass of the bottleneck ResNetBlock via one fused Pallas kernel.

    Returns NCHW bf16 (a following block would consume bf16 activations; the
    in-kernel residual add and accumulations are f32)."""
    N, Cin, H, W = x_nchw.shape
    assert Cin == packed["cin"], (Cin, packed["cin"])
    stride = packed["stride"]
    identity = packed["identity_shortcut"]
    cinp, midp = packed["w1"].shape
    coutp = packed["w3"].shape[1]
    cout = packed["cout"]

    Ho = (H - 1) // stride + 1
    Wo = (W - 1) // stride + 1
    Hp = H + 2                              # +1 halo row on each side
    Wp = _round_up(W + 2, SUBLANE)          # halo cols, kept sublane-aligned

    # NCHW -> NHWC, one fused pad (spatial halo + lane-dense channel pad), bf16.
    x = jnp.transpose(x_nchw, (0, 2, 3, 1))
    x = jnp.pad(x, ((0, 0), (1, 1), (1, Wp - W - 1), (0, cinp - Cin)))
    x = x.astype(jnp.bfloat16).reshape(N, Hp * Wp, cinp)

    # Interior mask: re-zeroes conv1's halo output with one broadcast multiply.
    row_ok = (jnp.arange(Hp) >= 1) & (jnp.arange(Hp) <= H)
    col_ok = (jnp.arange(Wp) >= 1) & (jnp.arange(Wp) <= W)
    mask = (row_ok[:, None] & col_ok[None, :]).astype(jnp.float32)
    mask = mask.reshape(Hp * Wp, 1)

    kernel = functools.partial(
        _resnet_block_kernel, stride=stride, H=H, W=W, Hp=Hp, Wp=Wp,
        Ho=Ho, Wo=Wo, identity_shortcut=identity)

    in_specs = [
        pl.BlockSpec((1, Hp * Wp, cinp), lambda n: (n, 0, 0)),   # padded image n
        pl.BlockSpec((Hp * Wp, 1), lambda n: (0, 0)),            # interior mask
        pl.BlockSpec((cinp, midp), lambda n: (0, 0)),            # w1 (BN1 folded)
        pl.BlockSpec((1, midp), lambda n: (0, 0)),               # b1
        pl.BlockSpec((9, midp, midp), lambda n: (0, 0, 0)),      # w2 (BN2 folded)
        pl.BlockSpec((1, midp), lambda n: (0, 0)),               # b2
        pl.BlockSpec((midp, coutp), lambda n: (0, 0)),           # w3 (BN3 folded)
        pl.BlockSpec((1, coutp), lambda n: (0, 0)),              # b3
    ]
    args = [x, mask, packed["w1"], packed["b1"], packed["w2"], packed["b2"],
            packed["w3"], packed["b3"]]
    if not identity:
        in_specs.append(pl.BlockSpec((cinp, coutp), lambda n: (0, 0)))  # ws
        args.append(packed["ws"])

    out = pl.pallas_call(
        kernel,
        out_shape=jax.ShapeDtypeStruct((N, Ho * Wo, coutp), jnp.bfloat16),
        grid=(N,),
        in_specs=in_specs,
        out_specs=pl.BlockSpec((1, Ho * Wo, coutp), lambda n: (n, 0, 0)),
        compiler_params=pltpu.CompilerParams(
            dimension_semantics=("parallel",),
            vmem_limit_bytes=_vmem_limit_bytes()),
    )(*args)

    out = out.reshape(N, Ho, Wo, coutp)[..., :cout]
    return jnp.transpose(out, (0, 3, 1, 2))                 # NCHW, bf16


# -------------------------- parameters & packing -----------------------------

def init_params(key, in_c, out_c, *, stride=1, bottleneck_ratio=4):
    """Random PyTorch-layout params: conv weights OIHW, BN (gamma,beta,mean,var)."""
    assert bottleneck_ratio > 1, "only the bottleneck (ratio > 1) variant is implemented"
    mid = out_c // bottleneck_ratio
    assert mid > 0
    ks = jax.random.split(key, 8)

    def conv_w(k, o, i, kh, kw):
        fan_in = i * kh * kw
        return jax.random.normal(k, (o, i, kh, kw), jnp.float32) / jnp.sqrt(float(fan_in))

    def bn(k, c):
        k1, k2, k3, k4 = jax.random.split(k, 4)
        return (1.0 + 0.1 * jax.random.normal(k1, (c,), jnp.float32),   # gamma
                0.1 * jax.random.normal(k2, (c,), jnp.float32),         # beta
                0.1 * jax.random.normal(k3, (c,), jnp.float32),         # running mean
                jax.random.uniform(k4, (c,), jnp.float32, 0.5, 1.5))    # running var

    raw = {
        "w1": conv_w(ks[0], mid, in_c, 1, 1),  "bn1": bn(ks[1], mid),
        "w2": conv_w(ks[2], mid, mid, 3, 3),   "bn2": bn(ks[3], mid),
        "w3": conv_w(ks[4], out_c, mid, 1, 1), "bn3": bn(ks[5], out_c),
        "stride": stride,
    }
    if stride != 1 or in_c != out_c:
        raw["ws"] = conv_w(ks[6], out_c, in_c, 1, 1)   # projection shortcut
    return raw


def fold_and_pack(raw, *, eps=1e-5, lane=LANE):
    """Fold eval-mode BN into the conv weights and pack into lane-dense,
    (in_ch, out_ch)-layout bf16 blocks (+ f32 shifts) for the kernel."""
    mid, cin = raw["w1"].shape[:2]
    cout = raw["w3"].shape[0]
    cinp, midp, coutp = (_round_up(ch, lane) for ch in (cin, mid, cout))
    identity = "ws" not in raw
    if identity:
        assert cin == cout and cinp == coutp

    def bn_fold(gamma, beta, mean, var):
        scale = gamma / jnp.sqrt(var + eps)
        return scale, beta - mean * scale

    s1, t1 = bn_fold(*raw["bn1"])
    s2, t2 = bn_fold(*raw["bn2"])
    s3, t3 = bn_fold(*raw["bn3"])

    def pad2(w, rows, cols):
        return jnp.pad(w, ((0, rows - w.shape[0]), (0, cols - w.shape[1])))

    w1 = pad2(raw["w1"][:, :, 0, 0].T * s1[None, :], cinp, midp)      # (Cin, mid)
    w3 = pad2(raw["w3"][:, :, 0, 0].T * s3[None, :], midp, coutp)     # (mid, Cout)
    w2 = jnp.transpose(raw["w2"], (2, 3, 1, 0)).reshape(9, mid, mid) * s2[None, None, :]
    w2 = jnp.pad(w2, ((0, 0), (0, midp - mid), (0, midp - mid)))      # (9, in, out)

    def shift(t, cp):
        return jnp.pad(t, (0, cp - t.shape[0])).reshape(1, cp).astype(jnp.float32)

    packed = {
        "w1": w1.astype(jnp.bfloat16), "b1": shift(t1, midp),
        "w2": w2.astype(jnp.bfloat16), "b2": shift(t2, midp),
        "w3": w3.astype(jnp.bfloat16), "b3": shift(t3, coutp),
        "cin": int(cin), "cout": int(cout),
        "stride": int(raw["stride"]),
        "identity_shortcut": identity,
    }
    if not identity:
        packed["ws"] = pad2(raw["ws"][:, :, 0, 0].T, cinp, coutp).astype(jnp.bfloat16)
    return packed


# ----------------------------- pure-JAX reference ----------------------------

def ref_forward(x, raw, *, eps=1e-5):
    """Pure-JAX f32 reference with the PyTorch module's (eval-mode BN) semantics."""
    stride = raw["stride"]
    dn = ("NCHW", "OIHW", "NCHW")

    def conv(a, w, s, pad):
        return jax.lax.conv_general_dilated(a, w, (s, s), pad, dimension_numbers=dn)

    def bn(a, p):
        gamma, beta, mean, var = p
        inv = gamma / jnp.sqrt(var + eps)
        return a * inv[None, :, None, None] + (beta - mean * inv)[None, :, None, None]

    h = jax.nn.relu(bn(conv(x, raw["w1"], 1, "VALID"), raw["bn1"]))
    h = jax.nn.relu(bn(conv(h, raw["w2"], stride, [(1, 1), (1, 1)]), raw["bn2"]))
    h = bn(conv(h, raw["w3"], 1, "VALID"), raw["bn3"])
    sc = conv(x, raw["ws"], stride, "VALID") if "ws" in raw else x
    return jax.nn.relu(h + sc)


# ------------------------------------ main ------------------------------------

if __name__ == "__main__":
    key = jax.random.PRNGKey(0)
    kx1, kx2, kp1, kp2 = jax.random.split(key, 4)

    # Case 1: projection (1x1 conv) shortcut: in_channels != out_channels.
    x1 = jax.random.normal(kx1, (2, 4, 16, 16), jnp.float32)
    raw1 = init_params(kp1, 4, 8, stride=1, bottleneck_ratio=4)
    out1 = jax.block_until_ready(resnet_block_forward(x1, fold_and_pack(raw1)))
    ref1 = ref_forward(x1, raw1)
    assert out1.shape == (2, 8, 16, 16), out1.shape
    assert bool(jnp.all(out1 >= 0.0))
    err1 = float(jnp.max(jnp.abs(out1.astype(jnp.float32) - ref1)))
    assert bool(jnp.allclose(out1.astype(jnp.float32), ref1, atol=5e-2, rtol=5e-2)), err1

    # Case 2: identity shortcut fast path (stride==1, in_channels == out_channels).
    x2 = jax.random.normal(kx2, (2, 8, 16, 16), jnp.float32)
    raw2 = init_params(kp2, 8, 8, stride=1, bottleneck_ratio=4)
    out2 = jax.block_until_ready(resnet_block_forward(x2, fold_and_pack(raw2)))
    ref2 = ref_forward(x2, raw2)
    assert out2.shape == (2, 8, 16, 16), out2.shape
    err2 = float(jnp.max(jnp.abs(out2.astype(jnp.float32) - ref2)))
    assert bool(jnp.allclose(out2.astype(jnp.float32), ref2, atol=5e-2, rtol=5e-2)), err2

    print("KERNEL_OK")
</pallas_src>

<mosaic_0001>
module attributes {stable_mosaic.version = 11 : i64} {
  func.func @_resnet_block_kernel(%arg0: i32, %arg1: memref<1x432x128xbf16, #tpu.memory_space<vmem>>, %arg2: memref<432x1xf32, #tpu.memory_space<vmem>>, %arg3: memref<128x128xbf16, #tpu.memory_space<vmem>>, %arg4: memref<1x128xf32, #tpu.memory_space<vmem>>, %arg5: memref<9x128x128xbf16, #tpu.memory_space<vmem>>, %arg6: memref<1x128xf32, #tpu.memory_space<vmem>>, %arg7: memref<128x128xbf16, #tpu.memory_space<vmem>>, %arg8: memref<1x128xf32, #tpu.memory_space<vmem>>, %arg9: memref<128x128xbf16, #tpu.memory_space<vmem>>, %arg10: memref<1x256x128xbf16, #tpu.memory_space<vmem>>) attributes {dimension_semantics = [#tpu.dimension_semantics<parallel>], iteration_bounds = array<i64: 2>, scalar_prefetch = 0 : i64, scratch_operands = 0 : i64, tpu.core_type = #tpu.core_type<tc>, window_params = [{transform_indices = @transform_0, window_bounds = array<i64: 1, 432, 128>}, {pipeline_mode = #tpu.pipeline_mode<synchronous>, transform_indices = @transform_1, window_bounds = array<i64: 432, 1>}, {pipeline_mode = #tpu.pipeline_mode<synchronous>, transform_indices = @transform_2, window_bounds = array<i64: 128, 128>}, {pipeline_mode = #tpu.pipeline_mode<synchronous>, transform_indices = @transform_3, window_bounds = array<i64: 1, 128>}, {pipeline_mode = #tpu.pipeline_mode<synchronous>, transform_indices = @transform_4, window_bounds = array<i64: 9, 128, 128>}, {pipeline_mode = #tpu.pipeline_mode<synchronous>, transform_indices = @transform_5, window_bounds = array<i64: 1, 128>}, {pipeline_mode = #tpu.pipeline_mode<synchronous>, transform_indices = @transform_6, window_bounds = array<i64: 128, 128>}, {pipeline_mode = #tpu.pipeline_mode<synchronous>, transform_indices = @transform_7, window_bounds = array<i64: 1, 128>}, {pipeline_mode = #tpu.pipeline_mode<synchronous>, transform_indices = @transform_8, window_bounds = array<i64: 128, 128>}, {transform_indices = @transform_9, window_bounds = array<i64: 1, 256, 128>}]} {
    %c0 = arith.constant 0 : index
    %c0_0 = arith.constant 0 : index
    %c0_1 = arith.constant 0 : index
    %0 = vector.load %arg1[%c0, %c0_0, %c0_1] : memref<1x432x128xbf16, #tpu.memory_space<vmem>>, vector<1x432x128xbf16>
    %1 = vector.shape_cast %0 : vector<1x432x128xbf16> to vector<432x128xbf16>
    %c0_2 = arith.constant 0 : index
    %c0_3 = arith.constant 0 : index
    %2 = vector.load %arg3[%c0_2, %c0_3] : memref<128x128xbf16, #tpu.memory_space<vmem>>, vector<128x128xbf16>
    %cst = arith.constant dense<0.000000e+00> : vector<432x128xf32>
    %3 = tpu.matmul %1, %2, %cst {dimension_numbers = #tpu.dot_dimension_numbers<[1], [0], [0], [1], [0, 0, 1, 1], [], []>} : vector<432x128xbf16>, vector<128x128xbf16>, vector<432x128xf32> -> vector<432x128xf32>
    %c0_4 = arith.constant 0 : index
    %c0_5 = arith.constant 0 : index
    %4 = vector.load %arg4[%c0_4, %c0_5] : memref<1x128xf32, #tpu.memory_space<vmem>>, vector<1x128xf32>
    %5 = vector.broadcast %4 : vector<1x128xf32> to vector<432x128xf32>
    %6 = arith.addf %3, %5 : vector<432x128xf32>
    %cst_6 = arith.constant 0.000000e+00 : f32
    %7 = vector.broadcast %cst_6 : f32 to vector<432x128xf32>
    %8 = arith.maximumf %6, %7 : vector<432x128xf32>
    %c0_7 = arith.constant 0 : index
    %c0_8 = arith.constant 0 : index
    %9 = vector.load %arg2[%c0_7, %c0_8] : memref<432x1xf32, #tpu.memory_space<vmem>>, vector<432x1xf32>
    %10 = vector.broadcast %9 : vector<432x1xf32> to vector<432x128xf32>
    %11 = arith.mulf %8, %10 : vector<432x128xf32>
    %12 = arith.truncf %11 : vector<432x128xf32> to vector<432x128xbf16>
    %13 = vector.shape_cast %12 : vector<432x128xbf16> to vector<18x24x128xbf16>
    %14 = vector.extract_strided_slice %13 {offsets = [0, 0, 0], sizes = [16, 16, 128], strides = [1, 1, 1]} : vector<18x24x128xbf16> to vector<16x16x128xbf16>
    %15 = vector.shape_cast %14 : vector<16x16x128xbf16> to vector<256x128xbf16>
    %c0_9 = arith.constant 0 : index
    %c0_10 = arith.constant 0 : index
    %c0_11 = arith.constant 0 : index
    %16 = vector.load %arg5[%c0_9, %c0_10, %c0_11] : memref<9x128x128xbf16, #tpu.memory_space<vmem>>, vector<1x128x128xbf16>
    %17 = vector.shape_cast %16 : vector<1x128x128xbf16> to vector<128x128xbf16>
    %cst_12 = arith.constant dense<0.000000e+00> : vector<256x128xf32>
    %18 = tpu.matmul %15, %17, %cst_12 {dimension_numbers = #tpu.dot_dimension_numbers<[1], [0], [0], [1], [0, 0, 1, 1], [], []>} : vector<256x128xbf16>, vector<128x128xbf16>, vector<256x128xf32> -> vector<256x128xf32>
    %19 = vector.extract_strided_slice %13 {offsets = [0, 1, 0], sizes = [16, 16, 128], strides = [1, 1, 1]} : vector<18x24x128xbf16> to vector<16x16x128xbf16>
    %20 = vector.shape_cast %19 : vector<16x16x128xbf16> to vector<256x128xbf16>
    %c1 = arith.constant 1 : index
    %c0_13 = arith.constant 0 : index
    %c0_14 = arith.constant 0 : index
    %21 = vector.load %arg5[%c1, %c0_13, %c0_14] : memref<9x128x128xbf16, #tpu.memory_space<vmem>>, vector<1x128x128xbf16>
    %22 = vector.shape_cast %21 : vector<1x128x128xbf16> to vector<128x128xbf16>
    %cst_15 = arith.constant dense<0.000000e+00> : vector<256x128xf32>
    %23 = tpu.matmul %20, %22, %cst_15 {dimension_numbers = #tpu.dot_dimension_numbers<[1], [0], [0], [1], [0, 0, 1, 1], [], []>} : vector<256x128xbf16>, vector<128x128xbf16>, vector<256x128xf32> -> vector<256x128xf32>
    %24 = arith.addf %18, %23 : vector<256x128xf32>
    %25 = vector.extract_strided_slice %13 {offsets = [0, 2, 0], sizes = [16, 16, 128], strides = [1, 1, 1]} : vector<18x24x128xbf16> to vector<16x16x128xbf16>
    %26 = vector.shape_cast %25 : vector<16x16x128xbf16> to vector<256x128xbf16>
    %c2 = arith.constant 2 : index
    %c0_16 = arith.constant 0 : index
    %c0_17 = arith.constant 0 : index
    %27 = vector.load %arg5[%c2, %c0_16, %c0_17] : memref<9x128x128xbf16, #tpu.memory_space<vmem>>, vector<1x128x128xbf16>
    %28 = vector.shape_cast %27 : vector<1x128x128xbf16> to vector<128x128xbf16>
    %cst_18 = arith.constant dense<0.000000e+00> : vector<256x128xf32>
    %29 = tpu.matmul %26, %28, %cst_18 {dimension_numbers = #tpu.dot_dimension_numbers<[1], [0], [0], [1], [0, 0, 1, 1], [], []>} : vector<256x128xbf16>, vector<128x128xbf16>, vector<256x128xf32> -> vector<256x128xf32>
    %30 = arith.addf %24, %29 : vector<256x128xf32>
    %31 = vector.extract_strided_slice %13 {offsets = [1, 0, 0], sizes = [16, 16, 128], strides = [1, 1, 1]} : vector<18x24x128xbf16> to vector<16x16x128xbf16>
    %32 = vector.shape_cast %31 : vector<16x16x128xbf16> to vector<256x128xbf16>
    %c3 = arith.constant 3 : index
    %c0_19 = arith.constant 0 : index
    %c0_20 = arith.constant 0 : index
    %33 = vector.load %arg5[%c3, %c0_19, %c0_20] : memref<9x128x128xbf16, #tpu.memory_space<vmem>>, vector<1x128x128xbf16>
    %34 = vector.shape_cast %33 : vector<1x128x128xbf16> to vector<128x128xbf16>
    %cst_21 = arith.constant dense<0.000000e+00> : vector<256x128xf32>
    %35 = tpu.matmul %32, %34, %cst_21 {dimension_numbers = #tpu.dot_dimension_numbers<[1], [0], [0], [1], [0, 0, 1, 1], [], []>} : vector<256x128xbf16>, vector<128x128xbf16>, vector<256x128xf32> -> vector<256x128xf32>
    %36 = arith.addf %30, %35 : vector<256x128xf32>
    %37 = vector.extract_strided_slice %13 {offsets = [1, 1, 0], sizes = [16, 16, 128], strides = [1, 1, 1]} : vector<18x24x128xbf16> to vector<16x16x128xbf16>
    %38 = vector.shape_cast %37 : vector<16x16x128xbf16> to vector<256x128xbf16>
    %c4 = arith.constant 4 : index
    %c0_22 = arith.constant 0 : index
    %c0_23 = arith.constant 0 : index
    %39 = vector.load %arg5[%c4, %c0_22, %c0_23] : memref<9x128x128xbf16, #tpu.memory_space<vmem>>, vector<1x128x128xbf16>
    %40 = vector.shape_cast %39 : vector<1x128x128xbf16> to vector<128x128xbf16>
    %cst_24 = arith.constant dense<0.000000e+00> : vector<256x128xf32>
    %41 = tpu.matmul %38, %40, %cst_24 {dimension_numbers = #tpu.dot_dimension_numbers<[1], [0], [0], [1], [0, 0, 1, 1], [], []>} : vector<256x128xbf16>, vector<128x128xbf16>, vector<256x128xf32> -> vector<256x128xf32>
    %42 = arith.addf %36, %41 : vector<256x128xf32>
    %43 = vector.extract_strided_slice %13 {offsets = [1, 2, 0], sizes = [16, 16, 128], strides = [1, 1, 1]} : vector<18x24x128xbf16> to vector<16x16x128xbf16>
    %44 = vector.shape_cast %43 : vector<16x16x128xbf16> to vector<256x128xbf16>
    %c5 = arith.constant 5 : index
    %c0_25 = arith.constant 0 : index
    %c0_26 = arith.constant 0 : index
    %45 = vector.load %arg5[%c5, %c0_25, %c0_26] : memref<9x128x128xbf16, #tpu.memory_space<vmem>>, vector<1x128x128xbf16>
    %46 = vector.shape_cast %45 : vector<1x128x128xbf16> to vector<128x128xbf16>
    %cst_27 = arith.constant dense<0.000000e+00> : vector<256x128xf32>
    %47 = tpu.matmul %44, %46, %cst_27 {dimension_numbers = #tpu.dot_dimension_numbers<[1], [0], [0], [1], [0, 0, 1, 1], [], []>} : vector<256x128xbf16>, vector<128x128xbf16>, vector<256x128xf32> -> vector<256x128xf32>
    %48 = arith.addf %42, %47 : vector<256x128xf32>
    %49 = vector.extract_strided_slice %13 {offsets = [2, 0, 0], sizes = [16, 16, 128], strides = [1, 1, 1]} : vector<18x24x128xbf16> to vector<16x16x128xbf16>
    %50 = vector.shape_cast %49 : vector<16x16x128xbf16> to vector<256x128xbf16>
    %c6 = arith.constant 6 : index
    %c0_28 = arith.constant 0 : index
    %c0_29 = arith.constant 0 : index
    %51 = vector.load %arg5[%c6, %c0_28, %c0_29] : memref<9x128x128xbf16, #tpu.memory_space<vmem>>, vector<1x128x128xbf16>
    %52 = vector.shape_cast %51 : vector<1x128x128xbf16> to vector<128x128xbf16>
    %cst_30 = arith.constant dense<0.000000e+00> : vector<256x128xf32>
    %53 = tpu.matmul %50, %52, %cst_30 {dimension_numbers = #tpu.dot_dimension_numbers<[1], [0], [0], [1], [0, 0, 1, 1], [], []>} : vector<256x128xbf16>, vector<128x128xbf16>, vector<256x128xf32> -> vector<256x128xf32>
    %54 = arith.addf %48, %53 : vector<256x128xf32>
    %55 = vector.extract_strided_slice %13 {offsets = [2, 1, 0], sizes = [16, 16, 128], strides = [1, 1, 1]} : vector<18x24x128xbf16> to vector<16x16x128xbf16>
    %56 = vector.shape_cast %55 : vector<16x16x128xbf16> to vector<256x128xbf16>
    %c7 = arith.constant 7 : index
    %c0_31 = arith.constant 0 : index
    %c0_32 = arith.constant 0 : index
    %57 = vector.load %arg5[%c7, %c0_31, %c0_32] : memref<9x128x128xbf16, #tpu.memory_space<vmem>>, vector<1x128x128xbf16>
    %58 = vector.shape_cast %57 : vector<1x128x128xbf16> to vector<128x128xbf16>
    %cst_33 = arith.constant dense<0.000000e+00> : vector<256x128xf32>
    %59 = tpu.matmul %56, %58, %cst_33 {dimension_numbers = #tpu.dot_dimension_numbers<[1], [0], [0], [1], [0, 0, 1, 1], [], []>} : vector<256x128xbf16>, vector<128x128xbf16>, vector<256x128xf32> -> vector<256x128xf32>
    %60 = arith.addf %54, %59 : vector<256x128xf32>
    %61 = vector.extract_strided_slice %13 {offsets = [2, 2, 0], sizes = [16, 16, 128], strides = [1, 1, 1]} : vector<18x24x128xbf16> to vector<16x16x128xbf16>
    %62 = vector.shape_cast %61 : vector<16x16x128xbf16> to vector<256x128xbf16>
    %c8 = arith.constant 8 : index
    %c0_34 = arith.constant 0 : index
    %c0_35 = arith.constant 0 : index
    %63 = vector.load %arg5[%c8, %c0_34, %c0_35] : memref<9x128x128xbf16, #tpu.memory_space<vmem>>, vector<1x128x128xbf16>
    %64 = vector.shape_cast %63 : vector<1x128x128xbf16> to vector<128x128xbf16>
    %cst_36 = arith.constant dense<0.000000e+00> : vector<256x128xf32>
    %65 = tpu.matmul %62, %64, %cst_36 {dimension_numbers = #tpu.dot_dimension_numbers<[1], [0], [0], [1], [0, 0, 1, 1], [], []>} : vector<256x128xbf16>, vector<128x128xbf16>, vector<256x128xf32> -> vector<256x128xf32>
    %66 = arith.addf %60, %65 : vector<256x128xf32>
    %c0_37 = arith.constant 0 : index
    %c0_38 = arith.constant 0 : index
    %67 = vector.load %arg6[%c0_37, %c0_38] : memref<1x128xf32, #tpu.memory_space<vmem>>, vector<1x128xf32>
    %68 = vector.broadcast %67 : vector<1x128xf32> to vector<256x128xf32>
    %69 = arith.addf %66, %68 : vector<256x128xf32>
    %cst_39 = arith.constant 0.000000e+00 : f32
    %70 = vector.broadcast %cst_39 : f32 to vector<256x128xf32>
    %71 = arith.maximumf %69, %70 : vector<256x128xf32>
    %72 = arith.truncf %71 : vector<256x128xf32> to vector<256x128xbf16>
    %c0_40 = arith.constant 0 : index
    %c0_41 = arith.constant 0 : index
    %73 = vector.load %arg7[%c0_40, %c0_41] : memref<128x128xbf16, #tpu.memory_space<vmem>>, vector<128x128xbf16>
    %cst_42 = arith.constant dense<0.000000e+00> : vector<256x128xf32>
    %74 = tpu.matmul %72, %73, %cst_42 {dimension_numbers = #tpu.dot_dimension_numbers<[1], [0], [0], [1], [0, 0, 1, 1], [], []>} : vector<256x128xbf16>, vector<128x128xbf16>, vector<256x128xf32> -> vector<256x128xf32>
    %75 = vector.shape_cast %1 : vector<432x128xbf16> to vector<18x24x128xbf16>
    %76 = vector.extract_strided_slice %75 {offsets = [1, 1, 0], sizes = [16, 16, 128], strides = [1, 1, 1]} : vector<18x24x128xbf16> to vector<16x16x128xbf16>
    %77 = vector.shape_cast %76 : vector<16x16x128xbf16> to vector<256x128xbf16>
    %c0_43 = arith.constant 0 : index
    %c0_44 = arith.constant 0 : index
    %78 = vector.load %arg9[%c0_43, %c0_44] : memref<128x128xbf16, #tpu.memory_space<vmem>>, vector<128x128xbf16>
    %cst_45 = arith.constant dense<0.000000e+00> : vector<256x128xf32>
    %79 = tpu.matmul %77, %78, %cst_45 {dimension_numbers = #tpu.dot_dimension_numbers<[1], [0], [0], [1], [0, 0, 1, 1], [], []>} : vector<256x128xbf16>, vector<128x128xbf16>, vector<256x128xf32> -> vector<256x128xf32>
    %80 = arith.addf %74, %79 : vector<256x128xf32>
    %c0_46 = arith.constant 0 : index
    %c0_47 = arith.constant 0 : index
    %81 = vector.load %arg8[%c0_46, %c0_47] : memref<1x128xf32, #tpu.memory_space<vmem>>, vector<1x128xf32>
    %82 = vector.broadcast %81 : vector<1x128xf32> to vector<256x128xf32>
    %83 = arith.addf %80, %82 : vector<256x128xf32>
    %cst_48 = arith.constant 0.000000e+00 : f32
    %84 = vector.broadcast %cst_48 : f32 to vector<256x128xf32>
    %85 = arith.maximumf %83, %84 : vector<256x128xf32>
    %86 = arith.truncf %85 : vector<256x128xf32> to vector<256x128xbf16>
    %c0_49 = arith.constant 0 : index
    %c0_50 = arith.constant 0 : index
    %c0_51 = arith.constant 0 : index
    %87 = vector.load %arg10[%c0_49, %c0_50, %c0_51] : memref<1x256x128xbf16, #tpu.memory_space<vmem>>, vector<1x256x128xbf16>
    %88 = vector.shape_cast %87 : vector<1x256x128xbf16> to vector<256x128xbf16>
    %89 = vector.shape_cast %86 : vector<256x128xbf16> to vector<1x256x128xbf16>
    tpu.vector_store %arg10[%c0_49, %c0_50, %c0_51], %89 {strides = array<i32>} : memref<1x256x128xbf16, #tpu.memory_space<vmem>>, vector<1x256x128xbf16>,
    return
  }
  func.func @transform_0(%arg0: i32) -> (i32, i32, i32) {
    %c0_i32 = arith.constant 0 : i32
    %c0_i32_0 = arith.constant 0 : i32
    %c0_i32_1 = arith.constant 0 : i32
    return %arg0, %c0_i32, %c0_i32_0 : i32, i32, i32
  }
  func.func @transform_1(%arg0: i32) -> (i32, i32) {
    %c0_i32 = arith.constant 0 : i32
    %c0_i32_0 = arith.constant 0 : i32
    %c0_i32_1 = arith.constant 0 : i32
    return %c0_i32, %c0_i32_0 : i32, i32
  }
  func.func @transform_2(%arg0: i32) -> (i32, i32) {
    %c0_i32 = arith.constant 0 : i32
    %c0_i32_0 = arith.constant 0 : i32
    %c0_i32_1 = arith.constant 0 : i32
    return %c0_i32, %c0_i32_0 : i32, i32
  }
  func.func @transform_3(%arg0: i32) -> (i32, i32) {
    %c0_i32 = arith.constant 0 : i32
    %c0_i32_0 = arith.constant 0 : i32
    %c0_i32_1 = arith.constant 0 : i32
    return %c0_i32, %c0_i32_0 : i32, i32
  }
  func.func @transform_4(%arg0: i32) -> (i32, i32, i32) {
    %c0_i32 = arith.constant 0 : i32
    %c0_i32_0 = arith.constant 0 : i32
    %c0_i32_1 = arith.constant 0 : i32
    %c0_i32_2 = arith.constant 0 : i32
    return %c0_i32, %c0_i32_0, %c0_i32_1 : i32, i32, i32
  }
  func.func @transform_5(%arg0: i32) -> (i32, i32) {
    %c0_i32 = arith.constant 0 : i32
    %c0_i32_0 = arith.constant 0 : i32
    %c0_i32_1 = arith.constant 0 : i32
    return %c0_i32, %c0_i32_0 : i32, i32
  }
  func.func @transform_6(%arg0: i32) -> (i32, i32) {
    %c0_i32 = arith.constant 0 : i32
    %c0_i32_0 = arith.constant 0 : i32
    %c0_i32_1 = arith.constant 0 : i32
    return %c0_i32, %c0_i32_0 : i32, i32
  }
  func.func @transform_7(%arg0: i32) -> (i32, i32) {
    %c0_i32 = arith.constant 0 : i32
    %c0_i32_0 = arith.constant 0 : i32
    %c0_i32_1 = arith.constant 0 : i32
    return %c0_i32, %c0_i32_0 : i32, i32
  }
  func.func @transform_8(%arg0: i32) -> (i32, i32) {
    %c0_i32 = arith.constant 0 : i32
    %c0_i32_0 = arith.constant 0 : i32
    %c0_i32_1 = arith.constant 0 : i32
    return %c0_i32, %c0_i32_0 : i32, i32
  }
  func.func @transform_9(%arg0: i32) -> (i32, i32, i32) {
    %c0_i32 = arith.constant 0 : i32
    %c0_i32_0 = arith.constant 0 : i32
    %c0_i32_1 = arith.constant 0 : i32
    return %arg0, %c0_i32, %c0_i32_0 : i32, i32, i32
  }
}

</mosaic_0001>

<llo_original>
// kernel: tpu_custom_call.1
$region0: #{tpu_custom_call.1}
  #allocation0 [shape = 'u32[]', space=smem, size = 0x4, offset = 0x4, fixed_abs, tag = 'smem constant byte address 0x4 - core index']
  #allocation1 [shape = 'u32[144,128]{1,0:T(1,128)}', space=vmem, size = 0x12000, scoped, tag = 'internal scratch']
  %s0 = inlined_call_operand.vmem [shape: bf16[2,432,128], index: 0, kind: input, shape index: {}]
  %s1 = inlined_call_operand.vmem [shape: f32[432,1], index: 1, kind: input, shape index: {}]
  %s2 = inlined_call_operand.hbm [shape: bf16[128,128], index: 2, kind: input, shape index: {}]
  %s3 = inlined_call_operand.vmem [shape: f32[1,128], index: 3, kind: input, shape index: {}]
  %s4 = inlined_call_operand.hbm [shape: bf16[9,128,128], index: 4, kind: input, shape index: {}]
  %s5 = inlined_call_operand.vmem [shape: f32[1,128], index: 5, kind: input, shape index: {}]
  %s6 = inlined_call_operand.hbm [shape: bf16[128,128], index: 6, kind: input, shape index: {}]
  %s7 = inlined_call_operand.vmem [shape: f32[1,128], index: 7, kind: input, shape index: {}]
  %s8 = inlined_call_operand.hbm [shape: bf16[128,128], index: 8, kind: input, shape index: {}]
  %s9 = inlined_call_operand.hbm [shape: bf16[2,256,128], index: 9, kind: output, shape index: {}]
  %s10 = sld [smem:[#allocation0]]
  $region85: #{tpu_custom_call.1} parent=0
    _
  %s12 = ssub.s32 1, %s10
  %s13 = scalar_select 0, %s12, %s10
  $region1: #{tpu_custom_call.1} parent=0
    #allocation2 [shape = 'u8[32768]{0}', space=vmem, size = 0x8000, scoped, tag = 'input window, operand 2, single buffered']
    #allocation3 [shape = 's32[2]{0}', space=sflag, size = 0x8, scoped, tag = 'scoped memory for tpu_custom_call.1']
    #allocation4 [shape = 's32[2]{0}', space=sflag, size = 0x8, scoped, tag = 'scoped memory for tpu_custom_call.1']
    #allocation5 [shape = 'u8[294912]{0}', space=vmem, size = 0x48000, scoped, tag = 'input window, operand 4, single buffered']
    #allocation6 [shape = 's32[1]{0}', space=sflag, size = 0x4, scoped, tag = 'scoped memory for tpu_custom_call.1']
    #allocation7 [shape = 'u8[32768]{0}', space=vmem, size = 0x8000, scoped, tag = 'input window, operand 6, single buffered']
    #allocation8 [shape = 'u8[32768]{0}', space=vmem, size = 0x8000, scoped, tag = 'input window, operand 8, single buffered']
    #allocation9 [shape = 's32[1]{0}', space=sflag, size = 0x4, scoped, tag = 'scoped memory for tpu_custom_call.1']
    #allocation10 [shape = 'u8[131072]{0}', space=vmem, size = 0x20000, scoped, tag = 'output window, operand 0']
    %14 = vsyncpa [#allocation3], 0
    %15 = vsyncpa [#allocation6], 0
    %16 = vsyncpa [#allocation9], 0
    %17 = vsyncpa [#allocation4], 0
    %s18 = scalar_lea.sflag [#allocation4], 1
    %19 = vsyncpa %s18, 0
    loop: start=0, step=1, limit=4
    $region2: #{tpu_custom_call.1} parent=1 // loop_pre_header
      _
    $region3: #{tpu_custom_call.1} parent=1 // loop_header
      %s21 = sphi 0, %s25
      %p22 = scmp.ge.s32.totalorder %s21, 4
      %s31 = sphi 0, %s33
      %s34 = sphi 0, %s31
      %s35 = sphi 0, %s34
      %s51 = sphi 0, %s35
      %s55 = sphi 0, %s55
      %s57 = sphi 0, %s55
      %s58 = sphi 0, %s57
      %s72 = sphi 0, %s58
      %s76 = sphi 0, %s76
      %s78 = sphi 0, %s76
      %s79 = sphi 0, %s78
      %s93 = sphi 0, %s79
      %s97 = sphi 0, %s97
      %s99 = sphi 0, %s97
      %s100 = sphi 0, %s99
      %s114 = sphi 0, %s100
      %s118 = sphi 0, %s118
      %s120 = sphi 0, %s118
      %s121 = sphi 0, %s120
      %s135 = sphi 0, %s121
      %s139 = sphi 0, %s139
      %s141 = sphi 0, %s139
      %s142 = sphi 0, %s141
      %s156 = sphi 0, %s142
      %s160 = sphi 0, %s160
      %s162 = sphi 0, %s160
      %s163 = sphi 0, %s162
      %s177 = sphi 0, %s163
      %s181 = sphi 0, %s181
      %s183 = sphi 0, %s181
      %s184 = sphi 0, %s183
      %s198 = sphi 0, %s184
      %s202 = sphi 0, %s202
      %s204 = sphi 0, %s202
      %s205 = sphi 0, %s204
      %s219 = sphi 0, %s205
      %s225 = sphi 0, %s227
      %s228 = sphi 0, %s225
      %s229 = sphi 0, %s228
      %s245 = sphi 0, %s229
    $region4: #{tpu_custom_call.1} parent=1 // loop_header_branch
      %24 = sbr.rel (%p22) target = $region8
    $region5: #{tpu_custom_call.1} parent=1 // loop_body
      %s26 = ssub.s32 %s21, 1
      %s27 = ssub.s32 %s21, 2
      %s28 = sadd.s32 %s21, 1
      %s29 = ssub.s32 %s21, %s28
      %p30 = scmp.eq.s32.totalorder %s29, 0
      %s32 = sadd.s32 %s31, 1
      %s33 = scalar_select %p30, %s31, %s32
      %p36 = pneg %p30
      %p37 = scmp.eq.s32.totalorder %s21, 1
      %p38 = por %p36, %p37
      %p39 = scmp.ne.s32.totalorder %s31, %s34
      %p40 = scmp.eq.s32.totalorder %s21, 0
      %p41 = por %p39, %p40
      %p42 = scmp.ne.s32.totalorder %s31, %s34
      %p43 = scmp.eq.s32.totalorder %s26, 1
      %p44 = por %p42, %p43
      %p45 = scmp.ne.s32.totalorder %s34, %s35
      %p46 = scmp.eq.s32.totalorder %s26, 0
      %p47 = por %p45, %p46
      %p48 = scmp.ne.s32.totalorder %s34, %s35
      %p49 = scmp.eq.s32.totalorder %s27, 1
      %p50 = por %p48, %p49
      %p52 = scmp.ne.s32.totalorder %s35, %s51
      %p53 = scmp.eq.s32.totalorder %s27, 0
      %p54 = por %p52, %p53
      %s56 = sadd.s32 %s55, 1
      %p59 = scmp.eq.s32.totalorder %s21, 1
      %p60 = scmp.ne.s32.totalorder %s55, %s57
      %p61 = scmp.eq.s32.totalorder %s21, 0
      %p62 = por %p60, %p61
      %p63 = scmp.ne.s32.totalorder %s55, %s57
      %p64 = scmp.eq.s32.totalorder %s26, 1
      %p65 = por %p63, %p64
      %p66 = scmp.ne.s32.totalorder %s57, %s58
      %p67 = scmp.eq.s32.totalorder %s26, 0
      %p68 = por %p66, %p67
      %p69 = scmp.ne.s32.totalorder %s57, %s58
      %p70 = scmp.eq.s32.totalorder %s27, 1
      %p71 = por %p69, %p70
      %p73 = scmp.ne.s32.totalorder %s58, %s72
      %p74 = scmp.eq.s32.totalorder %s27, 0
      %p75 = por %p73, %p74
      %s77 = sadd.s32 %s76, 1
      %p80 = scmp.eq.s32.totalorder %s21, 1
      %p81 = scmp.ne.s32.totalorder %s76, %s78
      %p82 = scmp.eq.s32.totalorder %s21, 0
      %p83 = por %p81, %p82
      %p84 = scmp.ne.s32.totalorder %s76, %s78
      %p85 = scmp.eq.s32.totalorder %s26, 1
      %p86 = por %p84, %p85
      %p87 = scmp.ne.s32.totalorder %s78, %s79
      %p88 = scmp.eq.s32.totalorder %s26, 0
      %p89 = por %p87, %p88
      %p90 = scmp.ne.s32.totalorder %s78, %s79
      %p91 = scmp.eq.s32.totalorder %s27, 1
      %p92 = por %p90, %p91
      %p94 = scmp.ne.s32.totalorder %s79, %s93
      %p95 = scmp.eq.s32.totalorder %s27, 0
      %p96 = por %p94, %p95
      %s98 = sadd.s32 %s97, 1
      %p101 = scmp.eq.s32.totalorder %s21, 1
      %p102 = scmp.ne.s32.totalorder %s97, %s99
      %p103 = scmp.eq.s32.totalorder %s21, 0
      %p104 = por %p102, %p103
      %p105 = scmp.ne.s32.totalorder %s97, %s99
      %p106 = scmp.eq.s32.totalorder %s26, 1
      %p107 = por %p105, %p106
      %p108 = scmp.ne.s32.totalorder %s99, %s100
      %p109 = scmp.eq.s32.totalorder %s26, 0
      %p110 = por %p108, %p109
      %p111 = scmp.ne.s32.totalorder %s99, %s100
      %p112 = scmp.eq.s32.totalorder %s27, 1
      %p113 = por %p111, %p112
      %p115 = scmp.ne.s32.totalorder %s100, %s114
      %p116 = scmp.eq.s32.totalorder %s27, 0
      %p117 = por %p115, %p116
      %s119 = sadd.s32 %s118, 1
      %p122 = scmp.eq.s32.totalorder %s21, 1
      %p123 = scmp.ne.s32.totalorder %s118, %s120
      %p124 = scmp.eq.s32.totalorder %s21, 0
      %p125 = por %p123, %p124
      %p126 = scmp.ne.s32.totalorder %s118, %s120
      %p127 = scmp.eq.s32.totalorder %s26, 1
      %p128 = por %p126, %p127
      %p129 = scmp.ne.s32.totalorder %s120, %s121
      %p130 = scmp.eq.s32.totalorder %s26, 0
      %p131 = por %p129, %p130
      %p132 = scmp.ne.s32.totalorder %s120, %s121
      %p133 = scmp.eq.s32.totalorder %s27, 1
      %p134 = por %p132, %p133
      %p136 = scmp.ne.s32.totalorder %s121, %s135
      %p137 = scmp.eq.s32.totalorder %s27, 0
      %p138 = por %p136, %p137
      %s140 = sadd.s32 %s139, 1
      %p143 = scmp.eq.s32.totalorder %s21, 1
      %p144 = scmp.ne.s32.totalorder %s139, %s141
      %p145 = scmp.eq.s32.totalorder %s21, 0
      %p146 = por %p144, %p145
      %p147 = scmp.ne.s32.totalorder %s139, %s141
      %p148 = scmp.eq.s32.totalorder %s26, 1
      %p149 = por %p147, %p148
      %p150 = scmp.ne.s32.totalorder %s141, %s142
      %p151 = scmp.eq.s32.totalorder %s26, 0
      %p152 = por %p150, %p151
      %p153 = scmp.ne.s32.totalorder %s141, %s142
      %p154 = scmp.eq.s32.totalorder %s27, 1
      %p155 = por %p153, %p154
      %p157 = scmp.ne.s32.totalorder %s142, %s156
      %p158 = scmp.eq.s32.totalorder %s27, 0
      %p159 = por %p157, %p158
      %s161 = sadd.s32 %s160, 1
      %p164 = scmp.eq.s32.totalorder %s21, 1
      %p165 = scmp.ne.s32.totalorder %s160, %s162
      %p166 = scmp.eq.s32.totalorder %s21, 0
      %p167 = por %p165, %p166
      %p168 = scmp.ne.s32.totalorder %s160, %s162
      %p169 = scmp.eq.s32.totalorder %s26, 1
      %p170 = por %p168, %p169
      %p171 = scmp.ne.s32.totalorder %s162, %s163
      %p172 = scmp.eq.s32.totalorder %s26, 0
      %p173 = por %p171, %p172
      %p174 = scmp.ne.s32.totalorder %s162, %s163
      %p175 = scmp.eq.s32.totalorder %s27, 1
      %p176 = por %p174, %p175
      %p178 = scmp.ne.s32.totalorder %s163, %s177
      %p179 = scmp.eq.s32.totalorder %s27, 0
      %p180 = por %p178, %p179
      %s182 = sadd.s32 %s181, 1
      %p185 = scmp.eq.s32.totalorder %s21, 1
      %p186 = scmp.ne.s32.totalorder %s181, %s183
      %p187 = scmp.eq.s32.totalorder %s21, 0
      %p188 = por %p186, %p187
      %p189 = scmp.ne.s32.totalorder %s181, %s183
      %p190 = scmp.eq.s32.totalorder %s26, 1
      %p191 = por %p189, %p190
      %p192 = scmp.ne.s32.totalorder %s183, %s184
      %p193 = scmp.eq.s32.totalorder %s26, 0
      %p194 = por %p192, %p193
      %p195 = scmp.ne.s32.totalorder %s183, %s184
      %p196 = scmp.eq.s32.totalorder %s27, 1
      %p197 = por %p195, %p196
      %p199 = scmp.ne.s32.totalorder %s184, %s198
      %p200 = scmp.eq.s32.totalorder %s27, 0
      %p201 = por %p199, %p200
      %s203 = sadd.s32 %s202, 1
      %p206 = scmp.eq.s32.totalorder %s21, 1
      %p207 = scmp.ne.s32.totalorder %s202, %s204
      %p208 = scmp.eq.s32.totalorder %s21, 0
      %p209 = por %p207, %p208
      %p210 = scmp.ne.s32.totalorder %s202, %s204
      %p211 = scmp.eq.s32.totalorder %s26, 1
      %p212 = por %p210, %p211
      %p213 = scmp.ne.s32.totalorder %s204, %s205
      %p214 = scmp.eq.s32.totalorder %s26, 0
      %p215 = por %p213, %p214
      %p216 = scmp.ne.s32.totalorder %s204, %s205
      %p217 = scmp.eq.s32.totalorder %s27, 1
      %p218 = por %p216, %p217
      %p220 = scmp.ne.s32.totalorder %s205, %s219
      %p221 = scmp.eq.s32.totalorder %s27, 0
      %p222 = por %p220, %p221
      %s223 = ssub.s32 %s21, %s28
      %p224 = scmp.eq.s32.totalorder %s223, 0
      %s226 = sadd.s32 %s225, 1
      %s227 = scalar_select %p224, %s225, %s226
      %p230 = pneg %p224
      %p231 = scmp.eq.s32.totalorder %s21, 1
      %p232 = por %p230, %p231
      %p233 = scmp.ne.s32.totalorder %s225, %s228
      %p234 = scmp.eq.s32.totalorder %s21, 0
      %p235 = por %p233, %p234
      %p236 = scmp.ne.s32.totalorder %s225, %s228
      %p237 = scmp.eq.s32.totalorder %s26, 1
      %p238 = por %p236, %p237
      %p239 = scmp.ne.s32.totalorder %s228, %s229
      %p240 = scmp.eq.s32.totalorder %s26, 0
      %p241 = por %p239, %p240
      %p242 = scmp.ne.s32.totalorder %s228, %s229
      %p243 = scmp.eq.s32.totalorder %s27, 1
      %p244 = por %p242, %p243
      %p246 = scmp.ne.s32.totalorder %s229, %s245
      %p247 = scmp.eq.s32.totalorder %s27, 0
      %p248 = por %p246, %p247
      %p249 = scmp.le.s32.totalorder 1, %s21
      %p250 = scmp.lt.s32.totalorder %s21, 3
      %p251 = pnand %p249, %p250
      %p252 = pneg %p251
      // Predicated region
      $region9: #{tpu_custom_call.1} parent=5 // pred_check
        _
      $region10: #{tpu_custom_call.1} parent=5 // pred_check_branch
        %254 = sbr.rel (%p251) target = $region12
      $region11: #{tpu_custom_call.1} parent=5 // pred_region
        %s255 = ssub.s32 %s21, 1
        // Predicated region
        $region13: #{tpu_custom_call.1} parent=11 // pred_check
          %p256 = pneg %p68
        $region14: #{tpu_custom_call.1} parent=11 // pred_check_branch
          %258 = sbr.rel (%p256) target = $region16
        $region15: #{tpu_custom_call.1} parent=11 // pred_region
          _
        $region16: #{tpu_custom_call.1} parent=11 // pred_fallthru
          _
        // Predicated region
        $region17: #{tpu_custom_call.1} parent=11 // pred_check
          %p259 = pneg %p89
        $region18: #{tpu_custom_call.1} parent=11 // pred_check_branch
          %261 = sbr.rel (%p259) target = $region20
        $region19: #{tpu_custom_call.1} parent=11 // pred_region
          %s263 = ssub.s32 1024, 1024
          %264 = vsyncadd [#allocation3], %s263
          %s265 = sshll.u32 [#allocation2], 4
          %s266 = int_to_ptr.vmem [resolvable:$true] %s265
          %271 = dma.hbm_to_vmem [thread:$0]  %s2, 1024, %s266, [#allocation3], 64, 64, 4
        $region20: #{tpu_custom_call.1} parent=11 // pred_fallthru
          _
        // Predicated region
        $region21: #{tpu_custom_call.1} parent=11 // pred_check
          %p272 = pneg %p110
        $region22: #{tpu_custom_call.1} parent=11 // pred_check_branch
          %274 = sbr.rel (%p272) target = $region24
        $region23: #{tpu_custom_call.1} parent=11 // pred_region
          _
        $region24: #{tpu_custom_call.1} parent=11 // pred_fallthru
          _
        // Predicated region
        $region25: #{tpu_custom_call.1} parent=11 // pred_check
          %p275 = pneg %p131
        $region26: #{tpu_custom_call.1} parent=11 // pred_check_branch
          %277 = sbr.rel (%p275) target = $region28
        $region27: #{tpu_custom_call.1} parent=11 // pred_region
          %s279 = ssub.s32 9216, 9216
          %280 = vsyncadd [#allocation6], %s279
          %s281 = sshll.u32 [#allocation5], 4
          %s282 = int_to_ptr.vmem [resolvable:$true] %s281
          %287 = dma.hbm_to_vmem [thread:$0]  %s4, 9216, %s282, [#allocation6], 64, 64, 4
        $region28: #{tpu_custom_call.1} parent=11 // pred_fallthru
          _
        // Predicated region
        $region29: #{tpu_custom_call.1} parent=11 // pred_check
          %p288 = pneg %p152
        $region30: #{tpu_custom_call.1} parent=11 // pred_check_branch
          %290 = sbr.rel (%p288) target = $region32
        $region31: #{tpu_custom_call.1} parent=11 // pred_region
          _
        $region32: #{tpu_custom_call.1} parent=11 // pred_fallthru
          _
        // Predicated region
        $region33: #{tpu_custom_call.1} parent=11 // pred_check
          %p291 = pneg %p173
        $region34: #{tpu_custom_call.1} parent=11 // pred_check_branch
          %293 = sbr.rel (%p291) target = $region36
        $region35: #{tpu_custom_call.1} parent=11 // pred_region
          %s295 = ssub.s32 1024, 1024
          %296 = vsyncadd [#allocation6], %s295
          %s297 = sshll.u32 [#allocation7], 4
          %s298 = int_to_ptr.vmem [resolvable:$true] %s297
          %303 = dma.hbm_to_vmem [thread:$0]  %s6, 1024, %s298, [#allocation6], 64, 64, 4
        $region36: #{tpu_custom_call.1} parent=11 // pred_fallthru
          _
        // Predicated region
        $region37: #{tpu_custom_call.1} parent=11 // pred_check
          %p304 = pneg %p194
        $region38: #{tpu_custom_call.1} parent=11 // pred_check_branch
          %306 = sbr.rel (%p304) target = $region40
        $region39: #{tpu_custom_call.1} parent=11 // pred_region
          _
        $region40: #{tpu_custom_call.1} parent=11 // pred_fallthru
          _
        // Predicated region
        $region41: #{tpu_custom_call.1} parent=11 // pred_check
          %p307 = pneg %p215
        $region42: #{tpu_custom_call.1} parent=11 // pred_check_branch
          %309 = sbr.rel (%p307) target = $region44
        $region43: #{tpu_custom_call.1} parent=11 // pred_region
          %s311 = ssub.s32 1024, 1024
          %312 = vsyncadd [#allocation9], %s311
          %s313 = sshll.u32 [#allocation8], 4
          %s314 = int_to_ptr.vmem [resolvable:$true] %s313
          %319 = dma.hbm_to_vmem [thread:$0]  %s8, 1024, %s314, [#allocation9], 64, 64, 4
        $region44: #{tpu_custom_call.1} parent=11 // pred_fallthru
          _
      $region12: #{tpu_custom_call.1} parent=5 // pred_fallthru
        _
      %p320 = scmp.lt.s32.totalorder %s21, 2
      // Predicated region
      $region45: #{tpu_custom_call.1} parent=5 // pred_check
        %p321 = pneg %p320
      $region46: #{tpu_custom_call.1} parent=5 // pred_check_branch
        %323 = sbr.rel (%p321) target = $region48
      $region47: #{tpu_custom_call.1} parent=5 // pred_region
        // Predicated region
        $region49: #{tpu_custom_call.1} parent=47 // pred_check
          %p324 = pneg %p41
        $region50: #{tpu_custom_call.1} parent=47 // pred_check_branch
          %326 = sbr.rel (%p324) target = $region52
        $region51: #{tpu_custom_call.1} parent=47 // pred_region
          %p327 = scmp.lt.s32.totalorder %s21, 1
          %s328 = scalar_select %p327, %s21, 1
          %s329 = smul.addr %s328, 54
          %s330 = smul.addr %s329, 4
          %s331 = scalar_lea.vmem %s0, %s330
        $region52: #{tpu_custom_call.1} parent=47 // pred_fallthru
          _
      $region48: #{tpu_custom_call.1} parent=5 // pred_fallthru
        _
      %p332 = scmp.le.s32.totalorder 1, %s21
      %p333 = scmp.lt.s32.totalorder %s21, 3
      %p334 = pnand %p332, %p333
      %p335 = pneg %p334
      // Predicated region
      $region53: #{tpu_custom_call.1} parent=5 // pred_check
        _
      $region54: #{tpu_custom_call.1} parent=5 // pred_check_branch
        %337 = sbr.rel (%p334) target = $region56
      $region55: #{tpu_custom_call.1} parent=5 // pred_region
        %s338 = ssub.s32 %s21, 1
        // Predicated region
        $region57: #{tpu_custom_call.1} parent=55 // pred_check
          %p339 = pneg %p89
        $region58: #{tpu_custom_call.1} parent=55 // pred_check_branch
          %341 = sbr.rel (%p339) target = $region60
        $region59: #{tpu_custom_call.1} parent=55 // pred_region
          %342 = dma.done [#allocation3], 1024
        $region60: #{tpu_custom_call.1} parent=55 // pred_fallthru
          _
        // Predicated region
        $region61: #{tpu_custom_call.1} parent=55 // pred_check
          %p343 = pneg %p131
        $region62: #{tpu_custom_call.1} parent=55 // pred_check_branch
          %345 = sbr.rel (%p343) target = $region64
        $region63: #{tpu_custom_call.1} parent=55 // pred_region
          %346 = dma.done [#allocation6], 9216
        $region64: #{tpu_custom_call.1} parent=55 // pred_fallthru
          _
        // Predicated region
        $region65: #{tpu_custom_call.1} parent=55 // pred_check
          %p347 = pneg %p173
        $region66: #{tpu_custom_call.1} parent=55 // pred_check_branch
          %349 = sbr.rel (%p347) target = $region68
        $region67: #{tpu_custom_call.1} parent=55 // pred_region
          %350 = dma.done [#allocation6], 1024
        $region68: #{tpu_custom_call.1} parent=55 // pred_fallthru
          _
        // Predicated region
        $region69: #{tpu_custom_call.1} parent=55 // pred_check
          %p351 = pneg %p215
        $region70: #{tpu_custom_call.1} parent=55 // pred_check_branch
          %353 = sbr.rel (%p351) target = $region72
        $region71: #{tpu_custom_call.1} parent=55 // pred_region
          %354 = dma.done [#allocation9], 1024
        $region72: #{tpu_custom_call.1} parent=55 // pred_fallthru
          _
        %p355 = scmp.lt.s32.totalorder %s26, 1
        %s356 = scalar_select %p355, %s26, 1
        %s357 = smul.addr %s356, 54
        %s358 = smul.addr %s357, 4
        %s359 = scalar_lea.vmem %s0, %s358
        %p360 = pneg %p47
        %p361 = pneg %p44
        %p362 = pneg %p68
        %p363 = pneg %p65
        %p364 = pneg %p89
        %p365 = pneg %p86
        %p366 = pneg %p110
        %p367 = pneg %p107
        %p368 = pneg %p131
        %p369 = pneg %p128
        %p370 = pneg %p152
        %p371 = pneg %p149
        %p372 = pneg %p173
        %p373 = pneg %p170
        %p374 = pneg %p194
        %p375 = pneg %p191
        %p376 = pneg %p215
        %p377 = pneg %p212
        %p378 = pneg %p241
        %p379 = pneg %p238
        %s380 = sand.u32 %s228, 1
        %s381 = scalar_lea.sflag [#allocation4], %s380
        %s382 = sand.u32 %s228, 1
        %s383 = smul.addr %s382, 128
        %s384 = scalar_lea.vmem [#allocation10], %s383
        %p385 = scmp.lt.s32.totalorder %s26, 1
        %s386 = scalar_select %p385, %s26, 1
        %s387 = smul.addr %s386, 54
        %s388 = smul.addr %s387, 4
        %s389 = scalar_lea.vmem %s0, %s388
        %v391 = vld [vmem:[%s389] sm:$0xf]
        %v392 = vld [vmem:[%s389 + $0x4] sm:$0xf]
        %v393 = vld [vmem:[%s389 + $0x8] sm:$0xf]
        %v394 = vld [vmem:[%s389 + $0xc] sm:$0xf]
        %v395 = vld [vmem:[%s389 + $0x10] sm:$0xf]
        %v396 = vld [vmem:[%s389 + $0x14] sm:$0xf]
        %v397 = vld [vmem:[%s389 + $0x18] sm:$0xf]
        %v398 = vld [vmem:[%s389 + $0x1c] sm:$0xf]
        %v399 = vld [vmem:[%s389 + $0x20] sm:$0xf]
        %v400 = vld [vmem:[%s389 + $0x24] sm:$0xf]
        %v401 = vld [vmem:[%s389 + $0x28] sm:$0xf]
        %v402 = vld [vmem:[%s389 + $0x2c] sm:$0xf]
        %v403 = vld [vmem:[%s389 + $0x30] sm:$0xf]
        %v404 = vld [vmem:[%s389 + $0x34] sm:$0xf]
        %v405 = vld [vmem:[%s389 + $0x38] sm:$0xf]
        %v406 = vld [vmem:[%s389 + $0x3c] sm:$0xf]
        %v407 = vld [vmem:[%s389 + $0x40] sm:$0xf]
        %v408 = vld [vmem:[%s389 + $0x44] sm:$0xf]
        %v409 = vld [vmem:[%s389 + $0x48] sm:$0xf]
        %v410 = vld [vmem:[%s389 + $0x4c] sm:$0xf]
        %v411 = vld [vmem:[%s389 + $0x50] sm:$0xf]
        %v412 = vld [vmem:[%s389 + $0x54] sm:$0xf]
        %v413 = vld [vmem:[%s389 + $0x58] sm:$0xf]
        %v414 = vld [vmem:[%s389 + $0x5c] sm:$0xf]
        %v415 = vld [vmem:[%s389 + $0x60] sm:$0xf]
        %v416 = vld [vmem:[%s389 + $0x64] sm:$0xf]
        %v417 = vld [vmem:[%s389 + $0x68] sm:$0xf]
        %v418 = vld [vmem:[%s389 + $0x6c] sm:$0xf]
        %v419 = vld [vmem:[%s389 + $0x70] sm:$0xf]
        %v420 = vld [vmem:[%s389 + $0x74] sm:$0xf]
        %v421 = vld [vmem:[%s389 + $0x78] sm:$0xf]
        %v422 = vld [vmem:[%s389 + $0x7c] sm:$0xf]
        %v423 = vld [vmem:[%s389 + $0x80] sm:$0xf]
        %v424 = vld [vmem:[%s389 + $0x84] sm:$0xf]
        %v425 = vld [vmem:[%s389 + $0x88] sm:$0xf]
        %v426 = vld [vmem:[%s389 + $0x8c] sm:$0xf]
        %v427 = vld [vmem:[%s389 + $0x90] sm:$0xf]
        %v428 = vld [vmem:[%s389 + $0x94] sm:$0xf]
        %v429 = vld [vmem:[%s389 + $0x98] sm:$0xf]
        %v430 = vld [vmem:[%s389 + $0x9c] sm:$0xf]
        %v431 = vld [vmem:[%s389 + $0xa0] sm:$0xf]
        %v432 = vld [vmem:[%s389 + $0xa4] sm:$0xf]
        %v433 = vld [vmem:[%s389 + $0xa8] sm:$0xf]
        %v434 = vld [vmem:[%s389 + $0xac] sm:$0xf]
        %v435 = vld [vmem:[%s389 + $0xb0] sm:$0xf]
        %v436 = vld [vmem:[%s389 + $0xb4] sm:$0xf]
        %v437 = vld [vmem:[%s389 + $0xb8] sm:$0xf]
        %v438 = vld [vmem:[%s389 + $0xbc] sm:$0xf]
        %v439 = vld [vmem:[%s389 + $0xc0] sm:$0xf]
        %v440 = vld [vmem:[%s389 + $0xc4] sm:$0xf]
        %v441 = vld [vmem:[%s389 + $0xc8] sm:$0xf]
        %v442 = vld [vmem:[%s389 + $0xcc] sm:$0xf]
        %v443 = vld [vmem:[%s389 + $0xd0] sm:$0xf]
        %v444 = vld [vmem:[%s389 + $0xd4] sm:$0xf]
        %v445 = vld [vmem:[#allocation2] sm:$0xf]
        %v446 = vld [vmem:[#allocation2 + $0x4] sm:$0xf]
        %v447 = vld [vmem:[#allocation2 + $0x8] sm:$0xf]
        %v448 = vld [vmem:[#allocation2 + $0xc] sm:$0xf]
        %v449 = vld [vmem:[#allocation2 + $0x10] sm:$0xf]
        %v450 = vld [vmem:[#allocation2 + $0x14] sm:$0xf]
        %v451 = vld [vmem:[#allocation2 + $0x18] sm:$0xf]
        %v452 = vld [vmem:[#allocation2 + $0x1c] sm:$0xf]
        %v453 = vld [vmem:[#allocation2 + $0x20] sm:$0xf]
        %v454 = vld [vmem:[#allocation2 + $0x24] sm:$0xf]
        %v455 = vld [vmem:[#allocation2 + $0x28] sm:$0xf]
        %v456 = vld [vmem:[#allocation2 + $0x2c] sm:$0xf]
        %v457 = vld [vmem:[#allocation2 + $0x30] sm:$0xf]
        %v458 = vld [vmem:[#allocation2 + $0x34] sm:$0xf]
        %v459 = vld [vmem:[#allocation2 + $0x38] sm:$0xf]
        %v460 = vld [vmem:[#allocation2 + $0x3c] sm:$0xf]
        %v461 = vld [vmem:[%s3] sm:$0x1]
        %v463 = vlaneseq
        %v464 = vshrl.u32 %v463, 7
        %v465 = vsub.s32 0, %v464
        %v466 = vrot.slane %v461, %v465
        %v522 = vunpack.c.l.b16 %v391
        %v523 = vunpack.c.l.b16 %v392
        %v524 = vunpack.c.l.b16 %v393
        %v525 = vunpack.c.l.b16 %v394
        %v526 = vunpack.c.l.b16 %v395
        %v527 = vunpack.c.l.b16 %v396
        %v528 = vunpack.c.l.b16 %v397
        %v529 = vunpack.c.l.b16 %v398
        %v530 = vunpack.c.l.b16 %v399
        %v531 = vunpack.c.l.b16 %v400
        %v532 = vunpack.c.l.b16 %v401
        %v533 = vunpack.c.l.b16 %v402
        %v534 = vunpack.c.l.b16 %v403
        %v535 = vunpack.c.l.b16 %v404
        %v536 = vunpack.c.l.b16 %v405
        %v537 = vunpack.c.l.b16 %v406
        %v538 = vunpack.c.l.b16 %v407
        %v539 = vunpack.c.l.b16 %v408
        %v540 = vunpack.c.l.b16 %v409
        %v541 = vunpack.c.l.b16 %v410
        %v542 = vunpack.c.l.b16 %v411
        %v543 = vunpack.c.l.b16 %v412
        %v544 = vunpack.c.l.b16 %v413
        %v545 = vunpack.c.l.b16 %v414
        %v546 = vunpack.c.l.b16 %v415
        %v547 = vunpack.c.l.b16 %v416
        %v548 = vunpack.c.l.b16 %v417
        %v549 = vunpack.c.l.b16 %v418
        %v550 = vunpack.c.l.b16 %v419
        %v551 = vunpack.c.l.b16 %v420
        %v552 = vunpack.c.l.b16 %v421
        %v553 = vunpack.c.l.b16 %v422
        %v554 = vunpack.c.l.b16 %v423
        %v555 = vunpack.c.l.b16 %v424
        %v556 = vunpack.c.l.b16 %v425
        %v557 = vunpack.c.l.b16 %v426
        %v558 = vunpack.c.l.b16 %v427
        %v559 = vunpack.c.l.b16 %v428
        %v560 = vunpack.c.l.b16 %v429
        %v561 = vunpack.c.l.b16 %v430
        %v562 = vunpack.c.l.b16 %v431
        %v563 = vunpack.c.l.b16 %v432
        %v564 = vunpack.c.l.b16 %v433
        %v565 = vunpack.c.l.b16 %v434
        %v566 = vunpack.c.l.b16 %v435
        %v567 = vunpack.c.l.b16 %v436
        %v568 = vunpack.c.l.b16 %v437
        %v569 = vunpack.c.l.b16 %v438
        %v570 = vunpack.c.l.b16 %v439
        %v571 = vunpack.c.l.b16 %v440
        %v572 = vunpack.c.l.b16 %v441
        %v573 = vunpack.c.l.b16 %v442
        %v574 = vunpack.c.l.b16 %v443
        %v575 = vunpack.c.l.b16 %v444
        %v576 = vpack.c.b16 %v523, %v522
        %v577 = vpack.c.b16 %v525, %v524
        %v578 = vpack.c.b16 %v527, %v526
        %v579 = vpack.c.b16 %v529, %v528
        %v580 = vpack.c.b16 %v531, %v530
        %v581 = vpack.c.b16 %v533, %v532
        %v582 = vpack.c.b16 %v535, %v534
        %v583 = vpack.c.b16 %v537, %v536
        %v584 = vpack.c.b16 %v539, %v538
        %v585 = vpack.c.b16 %v541, %v540
        %v586 = vpack.c.b16 %v543, %v542
        %v587 = vpack.c.b16 %v545, %v544
        %v588 = vpack.c.b16 %v547, %v546
        %v589 = vpack.c.b16 %v549, %v548
        %v590 = vpack.c.b16 %v551, %v550
        %v591 = vpack.c.b16 %v553, %v552
        %v592 = vpack.c.b16 %v555, %v554
        %v593 = vpack.c.b16 %v557, %v556
        %v594 = vpack.c.b16 %v559, %v558
        %v595 = vpack.c.b16 %v561, %v560
        %v596 = vpack.c.b16 %v563, %v562
        %v597 = vpack.c.b16 %v565, %v564
        %v598 = vpack.c.b16 %v567, %v566
        %v599 = vpack.c.b16 %v569, %v568
        %v600 = vpack.c.b16 %v571, %v570
        %v601 = vpack.c.b16 %v573, %v572
        %v602 = vpack.c.b16 %v575, %v574
        %v646 = vunpack.c.l.b16 %v445
        %v647 = vunpack.c.l.b16 %v446
        %v648 = vunpack.c.l.b16 %v447
        %v649 = vunpack.c.l.b16 %v448
        %v650 = vunpack.c.l.b16 %v449
        %v651 = vunpack.c.l.b16 %v450
        %v652 = vunpack.c.l.b16 %v451
        %v653 = vunpack.c.l.b16 %v452
        %v654 = vunpack.c.l.b16 %v453
        %v655 = vunpack.c.l.b16 %v454
        %v656 = vunpack.c.l.b16 %v455
        %v657 = vunpack.c.l.b16 %v456
        %v658 = vunpack.c.l.b16 %v457
        %v659 = vunpack.c.l.b16 %v458
        %v660 = vunpack.c.l.b16 %v459
        %v661 = vunpack.c.l.b16 %v460
        %v662 = vpack.c.b16 %v647, %v646
        %v663 = vpack.c.b16 %v649, %v648
        %v664 = vpack.c.b16 %v651, %v650
        %v665 = vpack.c.b16 %v653, %v652
        %v666 = vpack.c.b16 %v655, %v654
        %v667 = vpack.c.b16 %v657, %v656
        %v668 = vpack.c.b16 %v659, %v658
        %v669 = vpack.c.b16 %v661, %v660
        %678 = vmatprep.subr.bf16.mxu0 0
        %679 = vmatpush1.bf16.msra.mxu0 %v662
        %680 = vmatprep.subr.bf16.mxu0 0
        %681 = vmatpush1.bf16.msra.mxu0 %v663
        %682 = vmatprep.subr.bf16.mxu0 0
        %683 = vmatpush1.bf16.msra.mxu0 %v664
        %684 = vmatprep.subr.bf16.mxu0 0
        %685 = vmatpush1.bf16.msra.mxu0 %v665
        %686 = vmatprep.subr.bf16.mxu0 0
        %687 = vmatpush1.bf16.msra.mxu0 %v666
        %688 = vmatprep.subr.bf16.mxu0 0
        %689 = vmatpush1.bf16.msra.mxu0 %v667
        %690 = vmatprep.subr.bf16.mxu0 0
        %691 = vmatpush1.bf16.msra.mxu0 %v668
        %692 = vmatprep.subr.bf16.mxu0 0
        %693 = vmatpush1.bf16.msra.mxu0 %v669
        %694 = vmatprep.subr.bf16.mxu0 0
        %695 = vmatpush1.bf16.msra.mxu0 0
        %696 = vmatprep.subr.bf16.mxu0 0
        %697 = vmatpush1.bf16.msra.mxu0 0
        %698 = vmatprep.subr.bf16.mxu0 0
        %699 = vmatpush1.bf16.msra.mxu0 0
        %700 = vmatprep.subr.bf16.mxu0 0
        %701 = vmatpush1.bf16.msra.mxu0 0
        %702 = vmatprep.subr.bf16.mxu0 0
        %703 = vmatpush1.bf16.msra.mxu0 0
        %704 = vmatprep.subr.bf16.mxu0 0
        %705 = vmatpush1.bf16.msra.mxu0 0
        %706 = vmatprep.subr.bf16.mxu0 0
        %707 = vmatpush1.bf16.msra.mxu0 0
        %708 = vmatprep.subr.bf16.mxu0 0
        %709 = vmatpush1.bf16.msra.mxu0 0
        %710 = vmatprep.mubr.bf16.mxu0 0
        %711 = vmatmul.mubr.bf16.gmra.mrb[0].mxu0 %v576
        %v712 = vpop.f32.mrb[0].mxu0
        %v713 = vadd.f32 %v466, %v712
        %v714 = vpop.f32.mrb[0].mxu0
        %v715 = vpop.f32.mrb[0].mxu0
        %v716 = vadd.f32 %v466, %v715
        %v717 = vpop.f32.mrb[0].mxu0
        %718 = vmatprep.mubr.bf16.mxu0 0
        %719 = vmatmul.mubr.bf16.gmra.mrb[0].mxu0 %v577
        %v720 = vpop.f32.mrb[0].mxu0
        %v721 = vadd.f32 %v466, %v720
        %v722 = vpop.f32.mrb[0].mxu0
        %v723 = vpop.f32.mrb[0].mxu0
        %v724 = vadd.f32 %v466, %v723
        %v725 = vpop.f32.mrb[0].mxu0
        %726 = vmatprep.mubr.bf16.mxu0 0
        %727 = vmatmul.mubr.bf16.gmra.mrb[0].mxu0 %v578
        %v728 = vpop.f32.mrb[0].mxu0
        %v729 = vadd.f32 %v466, %v728
        %v730 = vpop.f32.mrb[0].mxu0
        %v731 = vpop.f32.mrb[0].mxu0
        %v732 = vadd.f32 %v466, %v731
        %v733 = vpop.f32.mrb[0].mxu0
        %734 = vmatprep.mubr.bf16.mxu0 0
        %735 = vmatmul.mubr.bf16.gmra.mrb[0].mxu0 %v579
        %v736 = vpop.f32.mrb[0].mxu0
        %v737 = vadd.f32 %v466, %v736
        %v738 = vpop.f32.mrb[0].mxu0
        %v739 = vpop.f32.mrb[0].mxu0
        %v740 = vadd.f32 %v466, %v739
        %v741 = vpop.f32.mrb[0].mxu0
        %742 = vmatprep.mubr.bf16.mxu0 0
        %743 = vmatmul.mubr.bf16.gmra.mrb[0].mxu0 %v580
        %v744 = vpop.f32.mrb[0].mxu0
        %v745 = vadd.f32 %v466, %v744
        %v746 = vpop.f32.mrb[0].mxu0
        %v747 = vpop.f32.mrb[0].mxu0
        %v748 = vadd.f32 %v466, %v747
        %v749 = vpop.f32.mrb[0].mxu0
        %750 = vmatprep.mubr.bf16.mxu0 0
        %751 = vmatmul.mubr.bf16.gmra.mrb[0].mxu0 %v581
        %v752 = vpop.f32.mrb[0].mxu0
        %v753 = vadd.f32 %v466, %v752
        %v754 = vpop.f32.mrb[0].mxu0
        %v755 = vpop.f32.mrb[0].mxu0
        %v756 = vadd.f32 %v466, %v755
        %v757 = vpop.f32.mrb[0].mxu0
        %758 = vmatprep.mubr.bf16.mxu0 0
        %759 = vmatmul.mubr.bf16.gmra.mrb[0].mxu0 %v582
        %v760 = vpop.f32.mrb[0].mxu0
        %v761 = vadd.f32 %v466, %v760
        %v762 = vpop.f32.mrb[0].mxu0
        %v763 = vpop.f32.mrb[0].mxu0
        %v764 = vadd.f32 %v466, %v763
        %v765 = vpop.f32.mrb[0].mxu0
        %766 = vmatprep.mubr.bf16.mxu0 0
        %767 = vmatmul.mubr.bf16.gmra.mrb[0].mxu0 %v583
        %v768 = vpop.f32.mrb[0].mxu0
        %v769 = vadd.f32 %v466, %v768
        %v770 = vpop.f32.mrb[0].mxu0
        %v771 = vpop.f32.mrb[0].mxu0
        %v772 = vadd.f32 %v466, %v771
        %v773 = vpop.f32.mrb[0].mxu0
        %774 = vmatprep.mubr.bf16.mxu0 0
        %775 = vmatmul.mubr.bf16.gmra.mrb[0].mxu0 %v584
        %v776 = vpop.f32.mrb[0].mxu0
        %v777 = vadd.f32 %v466, %v776
        %v778 = vpop.f32.mrb[0].mxu0
        %v779 = vpop.f32.mrb[0].mxu0
        %v780 = vadd.f32 %v466, %v779
        %v781 = vpop.f32.mrb[0].mxu0
        %782 = vmatprep.mubr.bf16.mxu0 0
        %783 = vmatmul.mubr.bf16.gmra.mrb[0].mxu0 %v585
        %v784 = vpop.f32.mrb[0].mxu0
        %v785 = vadd.f32 %v466, %v784
        %v786 = vpop.f32.mrb[0].mxu0
        %v787 = vpop.f32.mrb[0].mxu0
        %v788 = vadd.f32 %v466, %v787
        %v789 = vpop.f32.mrb[0].mxu0
        %790 = vmatprep.mubr.bf16.mxu0 0
        %791 = vmatmul.mubr.bf16.gmra.mrb[0].mxu0 %v586
        %v792 = vpop.f32.mrb[0].mxu0
        %v793 = vadd.f32 %v466, %v792
        %v794 = vpop.f32.mrb[0].mxu0
        %v795 = vpop.f32.mrb[0].mxu0
        %v796 = vadd.f32 %v466, %v795
        %v797 = vpop.f32.mrb[0].mxu0
        %798 = vmatprep.mubr.bf16.mxu0 0
        %799 = vmatmul.mubr.bf16.gmra.mrb[0].mxu0 %v587
        %v800 = vpop.f32.mrb[0].mxu0
        %v801 = vadd.f32 %v466, %v800
        %v802 = vpop.f32.mrb[0].mxu0
        %v803 = vpop.f32.mrb[0].mxu0
        %v804 = vadd.f32 %v466, %v803
        %v805 = vpop.f32.mrb[0].mxu0
        %806 = vmatprep.mubr.bf16.mxu0 0
        %807 = vmatmul.mubr.bf16.gmra.mrb[0].mxu0 %v588
        %v808 = vpop.f32.mrb[0].mxu0
        %v809 = vadd.f32 %v466, %v808
        %v810 = vpop.f32.mrb[0].mxu0
        %v811 = vpop.f32.mrb[0].mxu0
        %v812 = vadd.f32 %v466, %v811
        %v813 = vpop.f32.mrb[0].mxu0
        %814 = vmatprep.mubr.bf16.mxu0 0
        %815 = vmatmul.mubr.bf16.gmra.mrb[0].mxu0 %v589
        %v816 = vpop.f32.mrb[0].mxu0
        %v817 = vadd.f32 %v466, %v816
        %v818 = vpop.f32.mrb[0].mxu0
        %v819 = vpop.f32.mrb[0].mxu0
        %v820 = vadd.f32 %v466, %v819
        %v821 = vpop.f32.mrb[0].mxu0
        %822 = vmatprep.mubr.bf16.mxu0 0
        %823 = vmatmul.mubr.bf16.gmra.mrb[0].mxu0 %v590
        %v824 = vpop.f32.mrb[0].mxu0
        %v825 = vadd.f32 %v466, %v824
        %v826 = vpop.f32.mrb[0].mxu0
        %v827 = vpop.f32.mrb[0].mxu0
        %v828 = vadd.f32 %v466, %v827
        %v829 = vpop.f32.mrb[0].mxu0
        %830 = vmatprep.mubr.bf16.mxu0 0
        %831 = vmatmul.mubr.bf16.gmra.mrb[0].mxu0 %v591
        %v832 = vpop.f32.mrb[0].mxu0
        %v833 = vadd.f32 %v466, %v832
        %v834 = vpop.f32.mrb[0].mxu0
        %v835 = vpop.f32.mrb[0].mxu0
        %v836 = vadd.f32 %v466, %v835
        %v837 = vpop.f32.mrb[0].mxu0
        %838 = vmatprep.mubr.bf16.mxu0 0
        %839 = vmatmul.mubr.bf16.gmra.mrb[0].mxu0 %v592
        %v840 = vpop.f32.mrb[0].mxu0
        %v841 = vadd.f32 %v466, %v840
        %v842 = vpop.f32.mrb[0].mxu0
        %v843 = vpop.f32.mrb[0].mxu0
        %v844 = vadd.f32 %v466, %v843
        %v845 = vpop.f32.mrb[0].mxu0
        %846 = vmatprep.mubr.bf16.mxu0 0
        %847 = vmatmul.mubr.bf16.gmra.mrb[0].mxu0 %v593
        %v848 = vpop.f32.mrb[0].mxu0
        %v849 = vadd.f32 %v466, %v848
        %v850 = vpop.f32.mrb[0].mxu0
        %v851 = vpop.f32.mrb[0].mxu0
        %v852 = vadd.f32 %v466, %v851
        %v853 = vpop.f32.mrb[0].mxu0
        %854 = vmatprep.mubr.bf16.mxu0 0
        %855 = vmatmul.mubr.bf16.gmra.mrb[0].mxu0 %v594
        %v856 = vpop.f32.mrb[0].mxu0
        %v857 = vadd.f32 %v466, %v856
        %v858 = vpop.f32.mrb[0].mxu0
        %v859 = vpop.f32.mrb[0].mxu0
        %v860 = vadd.f32 %v466, %v859
        %v861 = vpop.f32.mrb[0].mxu0
        %862 = vmatprep.mubr.bf16.mxu0 0
        %863 = vmatmul.mubr.bf16.gmra.mrb[0].mxu0 %v595
        %v864 = vpop.f32.mrb[0].mxu0
        %v865 = vadd.f32 %v466, %v864
        %v866 = vpop.f32.mrb[0].mxu0
        %v867 = vpop.f32.mrb[0].mxu0
        %v868 = vadd.f32 %v466, %v867
        %v869 = vpop.f32.mrb[0].mxu0
        %870 = vmatprep.mubr.bf16.mxu0 0
        %871 = vmatmul.mubr.bf16.gmra.mrb[0].mxu0 %v596
        %v872 = vpop.f32.mrb[0].mxu0
        %v873 = vadd.f32 %v466, %v872
        %v874 = vpop.f32.mrb[0].mxu0
        %v875 = vpop.f32.mrb[0].mxu0
        %v876 = vadd.f32 %v466, %v875
        %v877 = vpop.f32.mrb[0].mxu0
        %878 = vmatprep.mubr.bf16.mxu0 0
        %879 = vmatmul.mubr.bf16.gmra.mrb[0].mxu0 %v597
        %v880 = vpop.f32.mrb[0].mxu0
        %v881 = vadd.f32 %v466, %v880
        %v882 = vpop.f32.mrb[0].mxu0
        %v883 = vpop.f32.mrb[0].mxu0
        %v884 = vadd.f32 %v466, %v883
        %v885 = vpop.f32.mrb[0].mxu0
        %886 = vmatprep.mubr.bf16.mxu0 0
        %887 = vmatmul.mubr.bf16.gmra.mrb[0].mxu0 %v598
        %v888 = vpop.f32.mrb[0].mxu0
        %v889 = vadd.f32 %v466, %v888
        %v890 = vpop.f32.mrb[0].mxu0
        %v891 = vpop.f32.mrb[0].mxu0
        %v892 = vadd.f32 %v466, %v891
        %v893 = vpop.f32.mrb[0].mxu0
        %894 = vmatprep.mubr.bf16.mxu0 0
        %895 = vmatmul.mubr.bf16.gmra.mrb[0].mxu0 %v599
        %v896 = vpop.f32.mrb[0].mxu0
        %v897 = vadd.f32 %v466, %v896
        %v898 = vpop.f32.mrb[0].mxu0
        %v899 = vpop.f32.mrb[0].mxu0
        %v900 = vadd.f32 %v466, %v899
        %v901 = vpop.f32.mrb[0].mxu0
        %902 = vmatprep.mubr.bf16.mxu0 0
        %903 = vmatmul.mubr.bf16.gmra.mrb[0].mxu0 %v600
        %v904 = vpop.f32.mrb[0].mxu0
        %v905 = vadd.f32 %v466, %v904
        %v906 = vpop.f32.mrb[0].mxu0
        %v907 = vpop.f32.mrb[0].mxu0
        %v908 = vadd.f32 %v466, %v907
        %v909 = vpop.f32.mrb[0].mxu0
        %910 = vmatprep.mubr.bf16.mxu0 0
        %911 = vmatmul.mubr.bf16.gmra.mrb[0].mxu0 %v601
        %v912 = vpop.f32.mrb[0].mxu0
        %v913 = vadd.f32 %v466, %v912
        %v914 = vpop.f32.mrb[0].mxu0
        %v915 = vpop.f32.mrb[0].mxu0
        %v916 = vadd.f32 %v466, %v915
        %v917 = vpop.f32.mrb[0].mxu0
        %918 = vmatprep.mubr.bf16.mxu0 0
        %919 = vmatmul.mubr.bf16.gmra.mrb[0].mxu0 %v602
        %v920 = vpop.f32.mrb[0].mxu0
        %v921 = vadd.f32 %v466, %v920
        %v922 = vpop.f32.mrb[0].mxu0
        %v923 = vpop.f32.mrb[0].mxu0
        %v924 = vadd.f32 %v466, %v923
        %v925 = vpop.f32.mrb[0].mxu0
        %926 = vdwg.mxu0
        %v927 = vmax.f32 %v713, 0.0
        %v928 = vmax.f32 %v716, 0.0
        %v929 = vmax.f32 %v721, 0.0
        %v930 = vmax.f32 %v724, 0.0
        %v931 = vmax.f32 %v729, 0.0
        %v932 = vmax.f32 %v732, 0.0
        %v933 = vmax.f32 %v737, 0.0
        %v934 = vmax.f32 %v740, 0.0
        %v935 = vmax.f32 %v745, 0.0
        %v936 = vmax.f32 %v748, 0.0
        %v937 = vmax.f32 %v753, 0.0
        %v938 = vmax.f32 %v756, 0.0
        %v939 = vmax.f32 %v761, 0.0
        %v940 = vmax.f32 %v764, 0.0
        %v941 = vmax.f32 %v769, 0.0
        %v942 = vmax.f32 %v772, 0.0
        %v943 = vmax.f32 %v777, 0.0
        %v944 = vmax.f32 %v780, 0.0
        %v945 = vmax.f32 %v785, 0.0
        %v946 = vmax.f32 %v788, 0.0
        %v947 = vmax.f32 %v793, 0.0
        %v948 = vmax.f32 %v796, 0.0
        %v949 = vmax.f32 %v801, 0.0
        %v950 = vmax.f32 %v804, 0.0
        %v951 = vmax.f32 %v809, 0.0
        %v952 = vmax.f32 %v812, 0.0
        %v953 = vmax.f32 %v817, 0.0
        %v954 = vmax.f32 %v820, 0.0
        %v955 = vmax.f32 %v825, 0.0
        %v956 = vmax.f32 %v828, 0.0
        %v957 = vmax.f32 %v833, 0.0
        %v958 = vmax.f32 %v836, 0.0
        %v959 = vmax.f32 %v841, 0.0
        %v960 = vmax.f32 %v844, 0.0
        %v961 = vmax.f32 %v849, 0.0
        %v962 = vmax.f32 %v852, 0.0
        %v963 = vmax.f32 %v857, 0.0
        %v964 = vmax.f32 %v860, 0.0
        %v965 = vmax.f32 %v865, 0.0
        %v966 = vmax.f32 %v868, 0.0
        %v967 = vmax.f32 %v873, 0.0
        %v968 = vmax.f32 %v876, 0.0
        %v969 = vmax.f32 %v881, 0.0
        %v970 = vmax.f32 %v884, 0.0
        %v971 = vmax.f32 %v889, 0.0
        %v972 = vmax.f32 %v892, 0.0
        %v973 = vmax.f32 %v897, 0.0
        %v974 = vmax.f32 %v900, 0.0
        %v975 = vmax.f32 %v905, 0.0
        %v976 = vmax.f32 %v908, 0.0
        %v977 = vmax.f32 %v913, 0.0
        %v978 = vmax.f32 %v916, 0.0
        %v979 = vmax.f32 %v921, 0.0
        %v980 = vmax.f32 %v924, 0.0
        %v981 = vld [vmem:[%s1] sm:$0xff]
        %v982 = vld [vmem:[%s1 + $0x8] sm:$0xff]
        %v983 = vld [vmem:[%s1 + $0x10] sm:$0xff]
        %v984 = vld [vmem:[%s1 + $0x18] sm:$0xff]
        %v985 = vld [vmem:[%s1 + $0x20] sm:$0xff]
        %v986 = vld [vmem:[%s1 + $0x28] sm:$0xff]
        %v987 = vld [vmem:[%s1 + $0x30] sm:$0xff]
        %v988 = vld [vmem:[%s1 + $0x38] sm:$0xff]
        %v989 = vld [vmem:[%s1 + $0x40] sm:$0xff]
        %v990 = vld [vmem:[%s1 + $0x48] sm:$0xff]
        %v991 = vld [vmem:[%s1 + $0x50] sm:$0xff]
        %v992 = vld [vmem:[%s1 + $0x58] sm:$0xff]
        %v993 = vld [vmem:[%s1 + $0x60] sm:$0xff]
        %v994 = vld [vmem:[%s1 + $0x68] sm:$0xff]
        %v995 = vld [vmem:[%s1 + $0x70] sm:$0xff]
        %v996 = vld [vmem:[%s1 + $0x78] sm:$0xff]
        %v997 = vld [vmem:[%s1 + $0x80] sm:$0xff]
        %v998 = vld [vmem:[%s1 + $0x88] sm:$0xff]
        %v999 = vld [vmem:[%s1 + $0x90] sm:$0xff]
        %v1000 = vld [vmem:[%s1 + $0x98] sm:$0xff]
        %v1001 = vld [vmem:[%s1 + $0xa0] sm:$0xff]
        %v1002 = vld [vmem:[%s1 + $0xa8] sm:$0xff]
        %v1003 = vld [vmem:[%s1 + $0xb0] sm:$0xff]
        %v1004 = vld [vmem:[%s1 + $0xb8] sm:$0xff]
        %v1005 = vld [vmem:[%s1 + $0xc0] sm:$0xff]
        %v1006 = vld [vmem:[%s1 + $0xc8] sm:$0xff]
        %v1007 = vld [vmem:[%s1 + $0xd0] sm:$0xff]
        %v1008 = vld [vmem:[%s1 + $0xd8] sm:$0xff]
        %v1009 = vld [vmem:[%s1 + $0xe0] sm:$0xff]
        %v1010 = vld [vmem:[%s1 + $0xe8] sm:$0xff]
        %v1011 = vld [vmem:[%s1 + $0xf0] sm:$0xff]
        %v1012 = vld [vmem:[%s1 + $0xf8] sm:$0xff]
        %v1013 = vld [vmem:[%s1 + $0x100] sm:$0xff]
        %v1014 = vld [vmem:[%s1 + $0x108] sm:$0xff]
        %v1015 = vld [vmem:[%s1 + $0x110] sm:$0xff]
        %v1016 = vld [vmem:[%s1 + $0x118] sm:$0xff]
        %v1017 = vld [vmem:[%s1 + $0x120] sm:$0xff]
        %v1018 = vld [vmem:[%s1 + $0x128] sm:$0xff]
        %v1019 = vld [vmem:[%s1 + $0x130] sm:$0xff]
        %v1020 = vld [vmem:[%s1 + $0x138] sm:$0xff]
        %v1021 = vld [vmem:[%s1 + $0x140] sm:$0xff]
        %v1022 = vld [vmem:[%s1 + $0x148] sm:$0xff]
        %v1023 = vld [vmem:[%s1 + $0x150] sm:$0xff]
        %v1024 = vld [vmem:[%s1 + $0x158] sm:$0xff]
        %v1025 = vld [vmem:[%s1 + $0x160] sm:$0xff]
        %v1026 = vld [vmem:[%s1 + $0x168] sm:$0xff]
        %v1027 = vld [vmem:[%s1 + $0x170] sm:$0xff]
        %v1028 = vld [vmem:[%s1 + $0x178] sm:$0xff]
        %v1029 = vld [vmem:[%s1 + $0x180] sm:$0xff]
        %v1030 = vld [vmem:[%s1 + $0x188] sm:$0xff]
        %v1031 = vld [vmem:[%s1 + $0x190] sm:$0xff]
        %v1032 = vld [vmem:[%s1 + $0x198] sm:$0xff]
        %v1033 = vld [vmem:[%s1 + $0x1a0] sm:$0xff]
        %v1034 = vld [vmem:[%s1 + $0x1a8] sm:$0xff]
        %1036 = vset.pattern.permute.xlu0 0
        %1037 = vperm.xlu0 %1036, %v981
        %v1038 = vpop.permute.xlu0 %1037
        %1041 = vset.pattern.permute.xlu0 0
        %1042 = vperm.xlu0 %1041, %v982
        %v1043 = vpop.permute.xlu0 %1042
        %1046 = vset.pattern.permute.xlu0 0
        %1047 = vperm.xlu0 %1046, %v983
        %v1048 = vpop.permute.xlu0 %1047
        %1051 = vset.pattern.permute.xlu0 0
        %1052 = vperm.xlu0 %1051, %v984
        %v1053 = vpop.permute.xlu0 %1052
        %1056 = vset.pattern.permute.xlu0 0
        %1057 = vperm.xlu0 %1056, %v985
        %v1058 = vpop.permute.xlu0 %1057
        %1061 = vset.pattern.permute.xlu0 0
        %1062 = vperm.xlu0 %1061, %v986
        %v1063 = vpop.permute.xlu0 %1062
        %1066 = vset.pattern.permute.xlu0 0
        %1067 = vperm.xlu0 %1066, %v987
        %v1068 = vpop.permute.xlu0 %1067
        %1071 = vset.pattern.permute.xlu0 0
        %1072 = vperm.xlu0 %1071, %v988
        %v1073 = vpop.permute.xlu0 %1072
        %1076 = vset.pattern.permute.xlu0 0
        %1077 = vperm.xlu0 %1076, %v989
        %v1078 = vpop.permute.xlu0 %1077
        %1081 = vset.pattern.permute.xlu0 0
        %1082 = vperm.xlu0 %1081, %v990
        %v1083 = vpop.permute.xlu0 %1082
        %1086 = vset.pattern.permute.xlu0 0
        %1087 = vperm.xlu0 %1086, %v991
        %v1088 = vpop.permute.xlu0 %1087
        %1091 = vset.pattern.permute.xlu0 0
        %1092 = vperm.xlu0 %1091, %v992
        %v1093 = vpop.permute.xlu0 %1092
        %1096 = vset.pattern.permute.xlu0 0
        %1097 = vperm.xlu0 %1096, %v993
        %v1098 = vpop.permute.xlu0 %1097
        %1101 = vset.pattern.permute.xlu0 0
        %1102 = vperm.xlu0 %1101, %v994
        %v1103 = vpop.permute.xlu0 %1102
        %1106 = vset.pattern.permute.xlu0 0
        %1107 = vperm.xlu0 %1106, %v995
        %v1108 = vpop.permute.xlu0 %1107
        %1111 = vset.pattern.permute.xlu0 0
        %1112 = vperm.xlu0 %1111, %v996
        %v1113 = vpop.permute.xlu0 %1112
        %1116 = vset.pattern.permute.xlu0 0
        %1117 = vperm.xlu0 %1116, %v997
        %v1118 = vpop.permute.xlu0 %1117
        %1121 = vset.pattern.permute.xlu0 0
        %1122 = vperm.xlu0 %1121, %v998
        %v1123 = vpop.permute.xlu0 %1122
        %1126 = vset.pattern.permute.xlu0 0
        %1127 = vperm.xlu0 %1126, %v999
        %v1128 = vpop.permute.xlu0 %1127
        %1131 = vset.pattern.permute.xlu0 0
        %1132 = vperm.xlu0 %1131, %v1000
        %v1133 = vpop.permute.xlu0 %1132
        %1136 = vset.pattern.permute.xlu0 0
        %1137 = vperm.xlu0 %1136, %v1001
        %v1138 = vpop.permute.xlu0 %1137
        %1141 = vset.pattern.permute.xlu0 0
        %1142 = vperm.xlu0 %1141, %v1002
        %v1143 = vpop.permute.xlu0 %1142
        %1146 = vset.pattern.permute.xlu0 0
        %1147 = vperm.xlu0 %1146, %v1003
        %v1148 = vpop.permute.xlu0 %1147
        %1151 = vset.pattern.permute.xlu0 0
        %1152 = vperm.xlu0 %1151, %v1004
        %v1153 = vpop.permute.xlu0 %1152
        %1156 = vset.pattern.permute.xlu0 0
        %1157 = vperm.xlu0 %1156, %v1005
        %v1158 = vpop.permute.xlu0 %1157
        %1161 = vset.pattern.permute.xlu0 0
        %1162 = vperm.xlu0 %1161, %v1006
        %v1163 = vpop.permute.xlu0 %1162
        %1166 = vset.pattern.permute.xlu0 0
        %1167 = vperm.xlu0 %1166, %v1007
        %v1168 = vpop.permute.xlu0 %1167
        %1171 = vset.pattern.permute.xlu0 0
        %1172 = vperm.xlu0 %1171, %v1008
        %v1173 = vpop.permute.xlu0 %1172
        %1176 = vset.pattern.permute.xlu0 0
        %1177 = vperm.xlu0 %1176, %v1009
        %v1178 = vpop.permute.xlu0 %1177
        %1181 = vset.pattern.permute.xlu0 0
        %1182 = vperm.xlu0 %1181, %v1010
        %v1183 = vpop.permute.xlu0 %1182
        %1186 = vset.pattern.permute.xlu0 0
        %1187 = vperm.xlu0 %1186, %v1011
        %v1188 = vpop.permute.xlu0 %1187
        %1191 = vset.pattern.permute.xlu0 0
        %1192 = vperm.xlu0 %1191, %v1012
        %v1193 = vpop.permute.xlu0 %1192
        %1196 = vset.pattern.permute.xlu0 0
        %1197 = vperm.xlu0 %1196, %v1013
        %v1198 = vpop.permute.xlu0 %1197
        %1201 = vset.pattern.permute.xlu0 0
        %1202 = vperm.xlu0 %1201, %v1014
        %v1203 = vpop.permute.xlu0 %1202
        %1206 = vset.pattern.permute.xlu0 0
        %1207 = vperm.xlu0 %1206, %v1015
        %v1208 = vpop.permute.xlu0 %1207
        %1211 = vset.pattern.permute.xlu0 0
        %1212 = vperm.xlu0 %1211, %v1016
        %v1213 = vpop.permute.xlu0 %1212
        %1216 = vset.pattern.permute.xlu0 0
        %1217 = vperm.xlu0 %1216, %v1017
        %v1218 = vpop.permute.xlu0 %1217
        %1221 = vset.pattern.permute.xlu0 0
        %1222 = vperm.xlu0 %1221, %v1018
        %v1223 = vpop.permute.xlu0 %1222
        %1226 = vset.pattern.permute.xlu0 0
        %1227 = vperm.xlu0 %1226, %v1019
        %v1228 = vpop.permute.xlu0 %1227
        %1231 = vset.pattern.permute.xlu0 0
        %1232 = vperm.xlu0 %1231, %v1020
        %v1233 = vpop.permute.xlu0 %1232
        %1236 = vset.pattern.permute.xlu0 0
        %1237 = vperm.xlu0 %1236, %v1021
        %v1238 = vpop.permute.xlu0 %1237
        %1241 = vset.pattern.permute.xlu0 0
        %1242 = vperm.xlu0 %1241, %v1022
        %v1243 = vpop.permute.xlu0 %1242
        %1246 = vset.pattern.permute.xlu0 0
        %1247 = vperm.xlu0 %1246, %v1023
        %v1248 = vpop.permute.xlu0 %1247
        %1251 = vset.pattern.permute.xlu0 0
        %1252 = vperm.xlu0 %1251, %v1024
        %v1253 = vpop.permute.xlu0 %1252
        %1256 = vset.pattern.permute.xlu0 0
        %1257 = vperm.xlu0 %1256, %v1025
        %v1258 = vpop.permute.xlu0 %1257
        %1261 = vset.pattern.permute.xlu0 0
        %1262 = vperm.xlu0 %1261, %v1026
        %v1263 = vpop.permute.xlu0 %1262
        %1266 = vset.pattern.permute.xlu0 0
        %1267 = vperm.xlu0 %1266, %v1027
        %v1268 = vpop.permute.xlu0 %1267
        %1271 = vset.pattern.permute.xlu0 0
        %1272 = vperm.xlu0 %1271, %v1028
        %v1273 = vpop.permute.xlu0 %1272
        %1276 = vset.pattern.permute.xlu0 0
        %1277 = vperm.xlu0 %1276, %v1029
        %v1278 = vpop.permute.xlu0 %1277
        %1281 = vset.pattern.permute.xlu0 0
        %1282 = vperm.xlu0 %1281, %v1030
        %v1283 = vpop.permute.xlu0 %1282
        %1286 = vset.pattern.permute.xlu0 0
        %1287 = vperm.xlu0 %1286, %v1031
        %v1288 = vpop.permute.xlu0 %1287
        %1291 = vset.pattern.permute.xlu0 0
        %1292 = vperm.xlu0 %1291, %v1032
        %v1293 = vpop.permute.xlu0 %1292
        %1296 = vset.pattern.permute.xlu0 0
        %1297 = vperm.xlu0 %1296, %v1033
        %v1298 = vpop.permute.xlu0 %1297
        %1301 = vset.pattern.permute.xlu0 0
        %1302 = vperm.xlu0 %1301, %v1034
        %v1303 = vpop.permute.xlu0 %1302
        %v1305 = vmul.f32 %v927, %v1038
        %v1306 = vmul.f32 %v928, %v1043
        %v1307 = vmul.f32 %v929, %v1048
        %v1308 = vmul.f32 %v930, %v1053
        %v1309 = vmul.f32 %v931, %v1058
        %v1310 = vmul.f32 %v932, %v1063
        %v1311 = vmul.f32 %v933, %v1068
        %v1312 = vmul.f32 %v934, %v1073
        %v1313 = vmul.f32 %v935, %v1078
        %v1314 = vmul.f32 %v936, %v1083
        %v1315 = vmul.f32 %v937, %v1088
        %v1316 = vmul.f32 %v938, %v1093
        %v1317 = vmul.f32 %v939, %v1098
        %v1318 = vmul.f32 %v940, %v1103
        %v1319 = vmul.f32 %v941, %v1108
        %v1320 = vmul.f32 %v942, %v1113
        %v1321 = vmul.f32 %v943, %v1118
        %v1322 = vmul.f32 %v944, %v1123
        %v1323 = vmul.f32 %v945, %v1128
        %v1324 = vmul.f32 %v946, %v1133
        %v1325 = vmul.f32 %v947, %v1138
        %v1326 = vmul.f32 %v948, %v1143
        %v1327 = vmul.f32 %v949, %v1148
        %v1328 = vmul.f32 %v950, %v1153
        %v1329 = vmul.f32 %v951, %v1158
        %v1330 = vmul.f32 %v952, %v1163
        %v1331 = vmul.f32 %v953, %v1168
        %v1332 = vmul.f32 %v954, %v1173
        %v1333 = vmul.f32 %v955, %v1178
        %v1334 = vmul.f32 %v956, %v1183
        %v1335 = vmul.f32 %v957, %v1188
        %v1336 = vmul.f32 %v958, %v1193
        %v1337 = vmul.f32 %v959, %v1198
        %v1338 = vmul.f32 %v960, %v1203
        %v1339 = vmul.f32 %v961, %v1208
        %v1340 = vmul.f32 %v962, %v1213
        %v1341 = vmul.f32 %v963, %v1218
        %v1342 = vmul.f32 %v964, %v1223
        %v1343 = vmul.f32 %v965, %v1228
        %v1344 = vmul.f32 %v966, %v1233
        %v1345 = vmul.f32 %v967, %v1238
        %v1346 = vmul.f32 %v968, %v1243
        %v1347 = vmul.f32 %v969, %v1248
        %v1348 = vmul.f32 %v970, %v1253
        %v1349 = vmul.f32 %v971, %v1258
        %v1350 = vmul.f32 %v972, %v1263
        %v1351 = vmul.f32 %v973, %v1268
        %v1352 = vmul.f32 %v974, %v1273
        %v1353 = vmul.f32 %v975, %v1278
        %v1354 = vmul.f32 %v976, %v1283
        %v1355 = vmul.f32 %v977, %v1288
        %v1356 = vmul.f32 %v978, %v1293
        %v1357 = vmul.f32 %v979, %v1298
        %v1358 = vmul.f32 %v980, %v1303
        %v1359 = vpack.c.bf16 %v1306, %v1305
        %v1360 = vpack.c.bf16 %v1308, %v1307
        %v1361 = vpack.c.bf16 %v1310, %v1309
        %v1362 = vpack.c.bf16 %v1312, %v1311
        %v1363 = vpack.c.bf16 %v1314, %v1313
        %v1364 = vpack.c.bf16 %v1316, %v1315
        %v1365 = vpack.c.bf16 %v1318, %v1317
        %v1366 = vpack.c.bf16 %v1320, %v1319
        %v1367 = vpack.c.bf16 %v1322, %v1321
        %v1368 = vpack.c.bf16 %v1324, %v1323
        %v1369 = vpack.c.bf16 %v1326, %v1325
        %v1370 = vpack.c.bf16 %v1328, %v1327
        %v1371 = vpack.c.bf16 %v1330, %v1329
        %v1372 = vpack.c.bf16 %v1332, %v1331
        %v1373 = vpack.c.bf16 %v1334, %v1333
        %v1374 = vpack.c.bf16 %v1336, %v1335
        %v1375 = vpack.c.bf16 %v1338, %v1337
        %v1376 = vpack.c.bf16 %v1340, %v1339
        %v1377 = vpack.c.bf16 %v1342, %v1341
        %v1378 = vpack.c.bf16 %v1344, %v1343
        %v1379 = vpack.c.bf16 %v1346, %v1345
        %v1380 = vpack.c.bf16 %v1348, %v1347
        %v1381 = vpack.c.bf16 %v1350, %v1349
        %v1382 = vpack.c.bf16 %v1352, %v1351
        %v1383 = vpack.c.bf16 %v1354, %v1353
        %v1384 = vpack.c.bf16 %v1356, %v1355
        %v1385 = vpack.c.bf16 %v1358, %v1357
        %v1413 = vunpack.c.l.b16 %v1359
        %v1414 = vunpack.c.h.b16 %v1359
        %v1415 = vunpack.c.l.b16 %v1360
        %v1416 = vunpack.c.h.b16 %v1360
        %v1417 = vunpack.c.l.b16 %v1361
        %v1418 = vunpack.c.h.b16 %v1361
        %v1419 = vunpack.c.l.b16 %v1362
        %v1420 = vunpack.c.h.b16 %v1362
        %v1421 = vunpack.c.l.b16 %v1363
        %v1422 = vunpack.c.h.b16 %v1363
        %v1423 = vunpack.c.l.b16 %v1364
        %v1424 = vunpack.c.h.b16 %v1364
        %v1425 = vunpack.c.l.b16 %v1365
        %v1426 = vunpack.c.h.b16 %v1365
        %v1427 = vunpack.c.l.b16 %v1366
        %v1428 = vunpack.c.h.b16 %v1366
        %v1429 = vunpack.c.l.b16 %v1367
        %v1430 = vunpack.c.h.b16 %v1367
        %v1431 = vunpack.c.l.b16 %v1368
        %v1432 = vunpack.c.h.b16 %v1368
        %v1433 = vunpack.c.l.b16 %v1369
        %v1434 = vunpack.c.h.b16 %v1369
        %v1435 = vunpack.c.l.b16 %v1370
        %v1436 = vunpack.c.h.b16 %v1370
        %v1437 = vunpack.c.l.b16 %v1371
        %v1438 = vunpack.c.h.b16 %v1371
        %v1439 = vunpack.c.l.b16 %v1372
        %v1440 = vunpack.c.h.b16 %v1372
        %v1441 = vunpack.c.l.b16 %v1373
        %v1442 = vunpack.c.h.b16 %v1373
        %v1443 = vunpack.c.l.b16 %v1374
        %v1444 = vunpack.c.h.b16 %v1374
        %v1445 = vunpack.c.l.b16 %v1375
        %v1446 = vunpack.c.h.b16 %v1375
        %v1447 = vunpack.c.l.b16 %v1376
        %v1448 = vunpack.c.h.b16 %v1376
        %v1449 = vunpack.c.l.b16 %v1377
        %v1450 = vunpack.c.h.b16 %v1377
        %v1451 = vunpack.c.l.b16 %v1378
        %v1452 = vunpack.c.h.b16 %v1378
        %v1453 = vunpack.c.l.b16 %v1379
        %v1454 = vunpack.c.h.b16 %v1379
        %v1455 = vunpack.c.l.b16 %v1380
        %v1456 = vunpack.c.h.b16 %v1380
        %v1457 = vunpack.c.l.b16 %v1381
        %v1458 = vunpack.c.h.b16 %v1381
        %v1459 = vunpack.c.l.b16 %v1382
        %v1460 = vunpack.c.h.b16 %v1382
        %v1461 = vunpack.c.l.b16 %v1383
        %v1462 = vunpack.c.h.b16 %v1383
        %v1463 = vunpack.c.l.b16 %v1384
        %v1464 = vunpack.c.h.b16 %v1384
        %v1465 = vunpack.c.l.b16 %v1385
        %v1466 = vunpack.c.h.b16 %v1385
        %v1467 = vpack.c.b16 %v1413, %v1413
        %v1468 = vpack.c.b16 %v1414, %v1414
        %v1469 = vpack.c.b16 %v1415, %v1415
        %v1470 = vpack.c.b16 %v1416, %v1416
        %v1471 = vpack.c.b16 %v1417, %v1417
        %v1472 = vpack.c.b16 %v1418, %v1418
        %v1473 = vpack.c.b16 %v1419, %v1419
        %v1474 = vpack.c.b16 %v1420, %v1420
        %v1475 = vpack.c.b16 %v1421, %v1421
        %v1476 = vpack.c.b16 %v1422, %v1422
        %v1477 = vpack.c.b16 %v1423, %v1423
        %v1478 = vpack.c.b16 %v1424, %v1424
        %v1479 = vpack.c.b16 %v1425, %v1425
        %v1480 = vpack.c.b16 %v1426, %v1426
        %v1481 = vpack.c.b16 %v1427, %v1427
        %v1482 = vpack.c.b16 %v1428, %v1428
        %v1483 = vpack.c.b16 %v1429, %v1429
        %v1484 = vpack.c.b16 %v1430, %v1430
        %v1485 = vpack.c.b16 %v1431, %v1431
        %v1486 = vpack.c.b16 %v1432, %v1432
        %v1487 = vpack.c.b16 %v1433, %v1433
        %v1488 = vpack.c.b16 %v1434, %v1434
        %v1489 = vpack.c.b16 %v1435, %v1435
        %v1490 = vpack.c.b16 %v1436, %v1436
        %v1491 = vpack.c.b16 %v1437, %v1437
        %v1492 = vpack.c.b16 %v1438, %v1438
        %v1493 = vpack.c.b16 %v1439, %v1439
        %v1494 = vpack.c.b16 %v1440, %v1440
        %v1495 = vpack.c.b16 %v1441, %v1441
        %v1496 = vpack.c.b16 %v1442, %v1442
        %v1497 = vpack.c.b16 %v1443, %v1443
        %v1498 = vpack.c.b16 %v1444, %v1444
        %v1499 = vpack.c.b16 %v1445, %v1445
        %v1500 = vpack.c.b16 %v1446, %v1446
        %v1501 = vpack.c.b16 %v1447, %v1447
        %v1502 = vpack.c.b16 %v1448, %v1448
        %v1503 = vpack.c.b16 %v1449, %v1449
        %v1504 = vpack.c.b16 %v1450, %v1450
        %v1505 = vpack.c.b16 %v1451, %v1451
        %v1506 = vpack.c.b16 %v1452, %v1452
        %v1507 = vpack.c.b16 %v1453, %v1453
        %v1508 = vpack.c.b16 %v1454, %v1454
        %v1509 = vpack.c.b16 %v1455, %v1455
        %v1510 = vpack.c.b16 %v1456, %v1456
        %v1511 = vpack.c.b16 %v1457, %v1457
        %v1512 = vpack.c.b16 %v1458, %v1458
        %v1513 = vpack.c.b16 %v1459, %v1459
        %v1514 = vpack.c.b16 %v1460, %v1460
        %v1515 = vpack.c.b16 %v1461, %v1461
        %v1516 = vpack.c.b16 %v1462, %v1462
        %v1517 = vpack.c.b16 %v1463, %v1463
        %v1518 = vpack.c.b16 %v1464, %v1464
        %v1519 = vpack.c.b16 %v1465, %v1465
        %v1520 = vpack.c.b16 %v1466, %v1466
        %v1521 = vld [vmem:[#allocation5] sm:$0xf]
        %v1522 = vld [vmem:[#allocation5 + $0x4] sm:$0xf]
        %v1523 = vld [vmem:[#allocation5 + $0x8] sm:$0xf]
        %v1524 = vld [vmem:[#allocation5 + $0xc] sm:$0xf]
        %v1525 = vld [vmem:[#allocation5 + $0x10] sm:$0xf]
        %v1526 = vld [vmem:[#allocation5 + $0x14] sm:$0xf]
        %v1527 = vld [vmem:[#allocation5 + $0x18] sm:$0xf]
        %v1528 = vld [vmem:[#allocation5 + $0x1c] sm:$0xf]
        %v1529 = vld [vmem:[#allocation5 + $0x20] sm:$0xf]
        %v1530 = vld [vmem:[#allocation5 + $0x24] sm:$0xf]
        %v1531 = vld [vmem:[#allocation5 + $0x28] sm:$0xf]
        %v1532 = vld [vmem:[#allocation5 + $0x2c] sm:$0xf]
        %v1533 = vld [vmem:[#allocation5 + $0x30] sm:$0xf]
        %v1534 = vld [vmem:[#allocation5 + $0x34] sm:$0xf]
        %v1535 = vld [vmem:[#allocation5 + $0x38] sm:$0xf]
        %v1536 = vld [vmem:[#allocation5 + $0x3c] sm:$0xf]
        %vm1537 = vsmask.f32 3328
        %vm1538 = vsmask.f32 7440
        %vm1539 = vmor %vm1537, %vm1538
        %v1541 = vshrl.u32 %v1467, 16
        %v1543 = vrot.slane %v1541, 4
        %v1544 = vshll.u32 %v1467, 16
        %v1546 = vrot.slane %v1544, 5
        %v1547 = vor.u32 %v1543, %v1546
        %v1548 = vrot.slane %v1547, 4
        %v1550 = vshll.u32 %v1468, 16
        %v1552 = vrot.slane %v1550, 5
        %v1553 = vsel %vm1539, %v1548, %v1552
        %v1554 = vshrl.u32 %v1468, 16
        %v1556 = vrot.slane %v1554, 4
        %v1557 = vor.u32 %v1556, %v1552
        %v1558 = vrot.slane %v1557, 4
        %v1560 = vshll.u32 %v1469, 16
        %v1562 = vrot.slane %v1560, 5
        %v1563 = vsel %vm1539, %v1558, %v1562
        %v1565 = vshrl.u32 %v1470, 16
        %v1567 = vrot.slane %v1565, 4
        %v1568 = vshll.u32 %v1470, 16
        %v1570 = vrot.slane %v1568, 5
        %v1571 = vor.u32 %v1567, %v1570
        %v1572 = vrot.slane %v1571, 4
        %v1574 = vshll.u32 %v1471, 16
        %v1576 = vrot.slane %v1574, 5
        %v1577 = vsel %vm1539, %v1572, %v1576
        %v1578 = vshrl.u32 %v1471, 16
        %v1580 = vrot.slane %v1578, 4
        %v1581 = vor.u32 %v1580, %v1576
        %v1582 = vrot.slane %v1581, 4
        %v1584 = vshll.u32 %v1472, 16
        %v1586 = vrot.slane %v1584, 5
        %v1587 = vsel %vm1539, %v1582, %v1586
        %v1589 = vshrl.u32 %v1473, 16
        %v1591 = vrot.slane %v1589, 4
        %v1592 = vshll.u32 %v1473, 16
        %v1594 = vrot.slane %v1592, 5
        %v1595 = vor.u32 %v1591, %v1594
        %v1596 = vrot.slane %v1595, 4
        %v1598 = vshll.u32 %v1474, 16
        %v1600 = vrot.slane %v1598, 5
        %v1601 = vsel %vm1539, %v1596, %v1600
        %v1602 = vshrl.u32 %v1474, 16
        %v1604 = vrot.slane %v1602, 4
        %v1605 = vor.u32 %v1604, %v1600
        %v1606 = vrot.slane %v1605, 4
        %v1608 = vshll.u32 %v1475, 16
        %v1610 = vrot.slane %v1608, 5
        %v1611 = vsel %vm1539, %v1606, %v1610
        %v1613 = vshrl.u32 %v1476, 16
        %v1615 = vrot.slane %v1613, 4
        %v1616 = vshll.u32 %v1476, 16
        %v1618 = vrot.slane %v1616, 5
        %v1619 = vor.u32 %v1615, %v1618
        %v1620 = vrot.slane %v1619, 4
        %v1622 = vshll.u32 %v1477, 16
        %v1624 = vrot.slane %v1622, 5
        %v1625 = vsel %vm1539, %v1620, %v1624
        %v1626 = vshrl.u32 %v1477, 16
        %v1628 = vrot.slane %v1626, 4
        %v1629 = vor.u32 %v1628, %v1624
        %v1630 = vrot.slane %v1629, 4
        %v1632 = vshll.u32 %v1478, 16
        %v1634 = vrot.slane %v1632, 5
        %v1635 = vsel %vm1539, %v1630, %v1634
        %v1637 = vshrl.u32 %v1479, 16
        %v1639 = vrot.slane %v1637, 4
        %v1640 = vshll.u32 %v1479, 16
        %v1642 = vrot.slane %v1640, 5
        %v1643 = vor.u32 %v1639, %v1642
        %v1644 = vrot.slane %v1643, 4
        %v1646 = vshll.u32 %v1480, 16
        %v1648 = vrot.slane %v1646, 5
        %v1649 = vsel %vm1539, %v1644, %v1648
        %v1650 = vshrl.u32 %v1480, 16
        %v1652 = vrot.slane %v1650, 4
        %v1653 = vor.u32 %v1652, %v1648
        %v1654 = vrot.slane %v1653, 4
        %v1656 = vshll.u32 %v1481, 16
        %v1658 = vrot.slane %v1656, 5
        %v1659 = vsel %vm1539, %v1654, %v1658
        %v1661 = vshrl.u32 %v1482, 16
        %v1663 = vrot.slane %v1661, 4
        %v1664 = vshll.u32 %v1482, 16
        %v1666 = vrot.slane %v1664, 5
        %v1667 = vor.u32 %v1663, %v1666
        %v1668 = vrot.slane %v1667, 4
        %v1670 = vshll.u32 %v1483, 16
        %v1672 = vrot.slane %v1670, 5
        %v1673 = vsel %vm1539, %v1668, %v1672
        %v1674 = vshrl.u32 %v1483, 16
        %v1676 = vrot.slane %v1674, 4
        %v1677 = vor.u32 %v1676, %v1672
        %v1678 = vrot.slane %v1677, 4
        %v1680 = vshll.u32 %v1484, 16
        %v1682 = vrot.slane %v1680, 5
        %v1683 = vsel %vm1539, %v1678, %v1682
        %v1685 = vshrl.u32 %v1485, 16
        %v1687 = vrot.slane %v1685, 4
        %v1688 = vshll.u32 %v1485, 16
        %v1690 = vrot.slane %v1688, 5
        %v1691 = vor.u32 %v1687, %v1690
        %v1692 = vrot.slane %v1691, 4
        %v1694 = vshll.u32 %v1486, 16
        %v1696 = vrot.slane %v1694, 5
        %v1697 = vsel %vm1539, %v1692, %v1696
        %v1698 = vshrl.u32 %v1486, 16
        %v1700 = vrot.slane %v1698, 4
        %v1701 = vor.u32 %v1700, %v1696
        %v1702 = vrot.slane %v1701, 4
        %v1704 = vshll.u32 %v1487, 16
        %v1706 = vrot.slane %v1704, 5
        %v1707 = vsel %vm1539, %v1702, %v1706
        %v1709 = vshrl.u32 %v1488, 16
        %v1711 = vrot.slane %v1709, 4
        %v1712 = vshll.u32 %v1488, 16
        %v1714 = vrot.slane %v1712, 5
        %v1715 = vor.u32 %v1711, %v1714
        %v1716 = vrot.slane %v1715, 4
        %v1718 = vshll.u32 %v1489, 16
        %v1720 = vrot.slane %v1718, 5
        %v1721 = vsel %vm1539, %v1716, %v1720
        %v1722 = vshrl.u32 %v1489, 16
        %v1724 = vrot.slane %v1722, 4
        %v1725 = vor.u32 %v1724, %v1720
        %v1726 = vrot.slane %v1725, 4
        %v1728 = vshll.u32 %v1490, 16
        %v1730 = vrot.slane %v1728, 5
        %v1731 = vsel %vm1539, %v1726, %v1730
        %v1733 = vshrl.u32 %v1491, 16
        %v1735 = vrot.slane %v1733, 4
        %v1736 = vshll.u32 %v1491, 16
        %v1738 = vrot.slane %v1736, 5
        %v1739 = vor.u32 %v1735, %v1738
        %v1740 = vrot.slane %v1739, 4
        %v1742 = vshll.u32 %v1492, 16
        %v1744 = vrot.slane %v1742, 5
        %v1745 = vsel %vm1539, %v1740, %v1744
        %v1746 = vshrl.u32 %v1492, 16
        %v1748 = vrot.slane %v1746, 4
        %v1749 = vor.u32 %v1748, %v1744
        %v1750 = vrot.slane %v1749, 4
        %v1752 = vshll.u32 %v1493, 16
        %v1754 = vrot.slane %v1752, 5
        %v1755 = vsel %vm1539, %v1750, %v1754
        %v1757 = vshrl.u32 %v1494, 16
        %v1759 = vrot.slane %v1757, 4
        %v1760 = vshll.u32 %v1494, 16
        %v1762 = vrot.slane %v1760, 5
        %v1763 = vor.u32 %v1759, %v1762
        %v1764 = vrot.slane %v1763, 4
        %v1766 = vshll.u32 %v1495, 16
        %v1768 = vrot.slane %v1766, 5
        %v1769 = vsel %vm1539, %v1764, %v1768
        %v1770 = vshrl.u32 %v1495, 16
        %v1772 = vrot.slane %v1770, 4
        %v1773 = vor.u32 %v1772, %v1768
        %v1774 = vrot.slane %v1773, 4
        %v1776 = vshll.u32 %v1496, 16
        %v1778 = vrot.slane %v1776, 5
        %v1779 = vsel %vm1539, %v1774, %v1778
        %v1781 = vshrl.u32 %v1497, 16
        %v1783 = vrot.slane %v1781, 4
        %v1784 = vshll.u32 %v1497, 16
        %v1786 = vrot.slane %v1784, 5
        %v1787 = vor.u32 %v1783, %v1786
        %v1788 = vrot.slane %v1787, 4
        %v1790 = vshll.u32 %v1498, 16
        %v1792 = vrot.slane %v1790, 5
        %v1793 = vsel %vm1539, %v1788, %v1792
        %v1794 = vshrl.u32 %v1498, 16
        %v1796 = vrot.slane %v1794, 4
        %v1797 = vor.u32 %v1796, %v1792
        %v1798 = vrot.slane %v1797, 4
        %v1800 = vshll.u32 %v1499, 16
        %v1802 = vrot.slane %v1800, 5
        %v1803 = vsel %vm1539, %v1798, %v1802
        %v1805 = vshrl.u32 %v1500, 16
        %v1807 = vrot.slane %v1805, 4
        %v1808 = vshll.u32 %v1500, 16
        %v1810 = vrot.slane %v1808, 5
        %v1811 = vor.u32 %v1807, %v1810
        %v1812 = vrot.slane %v1811, 4
        %v1814 = vshll.u32 %v1501, 16
        %v1816 = vrot.slane %v1814, 5
        %v1817 = vsel %vm1539, %v1812, %v1816
        %v1818 = vshrl.u32 %v1501, 16
        %v1820 = vrot.slane %v1818, 4
        %v1821 = vor.u32 %v1820, %v1816
        %v1822 = vrot.slane %v1821, 4
        %v1824 = vshll.u32 %v1502, 16
        %v1826 = vrot.slane %v1824, 5
        %v1827 = vsel %vm1539, %v1822, %v1826
        %v1829 = vshrl.u32 %v1503, 16
        %v1831 = vrot.slane %v1829, 4
        %v1832 = vshll.u32 %v1503, 16
        %v1834 = vrot.slane %v1832, 5
        %v1835 = vor.u32 %v1831, %v1834
        %v1836 = vrot.slane %v1835, 4
        %v1838 = vshll.u32 %v1504, 16
        %v1840 = vrot.slane %v1838, 5
        %v1841 = vsel %vm1539, %v1836, %v1840
        %v1842 = vshrl.u32 %v1504, 16
        %v1844 = vrot.slane %v1842, 4
        %v1845 = vor.u32 %v1844, %v1840
        %v1846 = vrot.slane %v1845, 4
        %v1848 = vshll.u32 %v1505, 16
        %v1850 = vrot.slane %v1848, 5
        %v1851 = vsel %vm1539, %v1846, %v1850
        %v1853 = vshrl.u32 %v1506, 16
        %v1855 = vrot.slane %v1853, 4
        %v1856 = vshll.u32 %v1506, 16
        %v1858 = vrot.slane %v1856, 5
        %v1859 = vor.u32 %v1855, %v1858
        %v1860 = vrot.slane %v1859, 4
        %v1862 = vshll.u32 %v1507, 16
        %v1864 = vrot.slane %v1862, 5
        %v1865 = vsel %vm1539, %v1860, %v1864
        %v1866 = vshrl.u32 %v1507, 16
        %v1868 = vrot.slane %v1866, 4
        %v1869 = vor.u32 %v1868, %v1864
        %v1870 = vrot.slane %v1869, 4
        %v1872 = vshll.u32 %v1508, 16
        %v1874 = vrot.slane %v1872, 5
        %v1875 = vsel %vm1539, %v1870, %v1874
        %v1877 = vshrl.u32 %v1509, 16
        %v1879 = vrot.slane %v1877, 4
        %v1880 = vshll.u32 %v1509, 16
        %v1882 = vrot.slane %v1880, 5
        %v1883 = vor.u32 %v1879, %v1882
        %v1884 = vrot.slane %v1883, 4
        %v1886 = vshll.u32 %v1510, 16
        %v1888 = vrot.slane %v1886, 5
        %v1889 = vsel %vm1539, %v1884, %v1888
        %v1890 = vshrl.u32 %v1510, 16
        %v1892 = vrot.slane %v1890, 4
        %v1893 = vor.u32 %v1892, %v1888
        %v1894 = vrot.slane %v1893, 4
        %v1896 = vshll.u32 %v1511, 16
        %v1898 = vrot.slane %v1896, 5
        %v1899 = vsel %vm1539, %v1894, %v1898
        %v1901 = vshrl.u32 %v1512, 16
        %v1903 = vrot.slane %v1901, 4
        %v1904 = vshll.u32 %v1512, 16
        %v1906 = vrot.slane %v1904, 5
        %v1907 = vor.u32 %v1903, %v1906
        %v1908 = vrot.slane %v1907, 4
        %v1910 = vshll.u32 %v1513, 16
        %v1912 = vrot.slane %v1910, 5
        %v1913 = vsel %vm1539, %v1908, %v1912
        %v1914 = vshrl.u32 %v1513, 16
        %v1916 = vrot.slane %v1914, 4
        %v1917 = vor.u32 %v1916, %v1912
        %v1918 = vrot.slane %v1917, 4
        %v1920 = vshll.u32 %v1514, 16
        %v1922 = vrot.slane %v1920, 5
        %v1923 = vsel %vm1539, %v1918, %v1922
        %s1924 = scalar_lea.vmem [#allocation5], 64
        %v1925 = vld [vmem:[%s1924] sm:$0xf]
        %v1926 = vld [vmem:[%s1924 + $0x4] sm:$0xf]
        %v1927 = vld [vmem:[%s1924 + $0x8] sm:$0xf]
        %v1928 = vld [vmem:[%s1924 + $0xc] sm:$0xf]
        %v1929 = vld [vmem:[%s1924 + $0x10] sm:$0xf]
        %v1930 = vld [vmem:[%s1924 + $0x14] sm:$0xf]
        %v1931 = vld [vmem:[%s1924 + $0x18] sm:$0xf]
        %v1932 = vld [vmem:[%s1924 + $0x1c] sm:$0xf]
        %v1933 = vld [vmem:[%s1924 + $0x20] sm:$0xf]
        %v1934 = vld [vmem:[%s1924 + $0x24] sm:$0xf]
        %v1935 = vld [vmem:[%s1924 + $0x28] sm:$0xf]
        %v1936 = vld [vmem:[%s1924 + $0x2c] sm:$0xf]
        %v1937 = vld [vmem:[%s1924 + $0x30] sm:$0xf]
        %v1938 = vld [vmem:[%s1924 + $0x34] sm:$0xf]
        %v1939 = vld [vmem:[%s1924 + $0x38] sm:$0xf]
        %v1940 = vld [vmem:[%s1924 + $0x3c] sm:$0xf]
        %v1941 = vunpack.c.l.b16 %v1553
        %v1942 = vunpack.c.l.b16 %v1563
        %v1943 = vunpack.c.l.b16 %v1577
        %v1944 = vunpack.c.l.b16 %v1587
        %v1945 = vunpack.c.l.b16 %v1601
        %v1946 = vunpack.c.l.b16 %v1611
        %v1947 = vunpack.c.l.b16 %v1625
        %v1948 = vunpack.c.l.b16 %v1635
        %v1949 = vunpack.c.l.b16 %v1649
        %v1950 = vunpack.c.l.b16 %v1659
        %v1951 = vunpack.c.l.b16 %v1673
        %v1952 = vunpack.c.l.b16 %v1683
        %v1953 = vunpack.c.l.b16 %v1697
        %v1954 = vunpack.c.l.b16 %v1707
        %v1955 = vunpack.c.l.b16 %v1721
        %v1956 = vunpack.c.l.b16 %v1731
        %v1957 = vunpack.c.l.b16 %v1745
        %v1958 = vunpack.c.l.b16 %v1755
        %v1959 = vunpack.c.l.b16 %v1769
        %v1960 = vunpack.c.l.b16 %v1779
        %v1961 = vunpack.c.l.b16 %v1793
        %v1962 = vunpack.c.l.b16 %v1803
        %v1963 = vunpack.c.l.b16 %v1817
        %v1964 = vunpack.c.l.b16 %v1827
        %v1965 = vunpack.c.l.b16 %v1841
        %v1966 = vunpack.c.l.b16 %v1851
        %v1967 = vunpack.c.l.b16 %v1865
        %v1968 = vunpack.c.l.b16 %v1875
        %v1969 = vunpack.c.l.b16 %v1889
        %v1970 = vunpack.c.l.b16 %v1899
        %v1971 = vunpack.c.l.b16 %v1913
        %v1972 = vunpack.c.l.b16 %v1923
        %v1973 = vpack.c.b16 %v1942, %v1941
        %v1974 = vpack.c.b16 %v1944, %v1943
        %v1975 = vpack.c.b16 %v1946, %v1945
        %v1976 = vpack.c.b16 %v1948, %v1947
        %v1977 = vpack.c.b16 %v1950, %v1949
        %v1978 = vpack.c.b16 %v1952, %v1951
        %v1979 = vpack.c.b16 %v1954, %v1953
        %v1980 = vpack.c.b16 %v1956, %v1955
        %v1981 = vpack.c.b16 %v1958, %v1957
        %v1982 = vpack.c.b16 %v1960, %v1959
        %v1983 = vpack.c.b16 %v1962, %v1961
        %v1984 = vpack.c.b16 %v1964, %v1963
        %v1985 = vpack.c.b16 %v1966, %v1965
        %v1986 = vpack.c.b16 %v1968, %v1967
        %v1987 = vpack.c.b16 %v1970, %v1969
        %v1988 = vpack.c.b16 %v1972, %v1971
        %v2021 = vunpack.c.l.b16 %v1925
        %v2022 = vunpack.c.l.b16 %v1926
        %v2023 = vunpack.c.l.b16 %v1927
        %v2024 = vunpack.c.l.b16 %v1928
        %v2025 = vunpack.c.l.b16 %v1929
        %v2026 = vunpack.c.l.b16 %v1930
        %v2027 = vunpack.c.l.b16 %v1931
        %v2028 = vunpack.c.l.b16 %v1932
        %v2029 = vunpack.c.l.b16 %v1933
        %v2030 = vunpack.c.l.b16 %v1934
        %v2031 = vunpack.c.l.b16 %v1935
        %v2032 = vunpack.c.l.b16 %v1936
        %v2033 = vunpack.c.l.b16 %v1937
        %v2034 = vunpack.c.l.b16 %v1938
        %v2035 = vunpack.c.l.b16 %v1939
        %v2036 = vunpack.c.l.b16 %v1940
        %v2037 = vpack.c.b16 %v2022, %v2021
        %v2038 = vpack.c.b16 %v2024, %v2023
        %v2039 = vpack.c.b16 %v2026, %v2025
        %v2040 = vpack.c.b16 %v2028, %v2027
        %v2041 = vpack.c.b16 %v2030, %v2029
        %v2042 = vpack.c.b16 %v2032, %v2031
        %v2043 = vpack.c.b16 %v2034, %v2033
        %v2044 = vpack.c.b16 %v2036, %v2035
        %2053 = vmatprep.subr.bf16.mxu0 0
        %2054 = vmatpush1.bf16.msra.mxu0 %v2037
        %2055 = vmatprep.subr.bf16.mxu0 0
        %2056 = vmatpush1.bf16.msra.mxu0 %v2038
        %2057 = vmatprep.subr.bf16.mxu0 0
        %2058 = vmatpush1.bf16.msra.mxu0 %v2039
        %2059 = vmatprep.subr.bf16.mxu0 0
        %2060 = vmatpush1.bf16.msra.mxu0 %v2040
        %2061 = vmatprep.subr.bf16.mxu0 0
        %2062 = vmatpush1.bf16.msra.mxu0 %v2041
        %2063 = vmatprep.subr.bf16.mxu0 0
        %2064 = vmatpush1.bf16.msra.mxu0 %v2042
        %2065 = vmatprep.subr.bf16.mxu0 0
        %2066 = vmatpush1.bf16.msra.mxu0 %v2043
        %2067 = vmatprep.subr.bf16.mxu0 0
        %2068 = vmatpush1.bf16.msra.mxu0 %v2044
        %2069 = vmatprep.subr.bf16.mxu0 0
        %2070 = vmatpush1.bf16.msra.mxu0 0
        %2071 = vmatprep.subr.bf16.mxu0 0
        %2072 = vmatpush1.bf16.msra.mxu0 0
        %2073 = vmatprep.subr.bf16.mxu0 0
        %2074 = vmatpush1.bf16.msra.mxu0 0
        %2075 = vmatprep.subr.bf16.mxu0 0
        %2076 = vmatpush1.bf16.msra.mxu0 0
        %2077 = vmatprep.subr.bf16.mxu0 0
        %2078 = vmatpush1.bf16.msra.mxu0 0
        %2079 = vmatprep.subr.bf16.mxu0 0
        %2080 = vmatpush1.bf16.msra.mxu0 0
        %2081 = vmatprep.subr.bf16.mxu0 0
        %2082 = vmatpush1.bf16.msra.mxu0 0
        %2083 = vmatprep.subr.bf16.mxu0 0
        %2084 = vmatpush1.bf16.msra.mxu0 0
        %2085 = vmatprep.mubr.bf16.mxu0 0
        %2086 = vmatmul.mubr.bf16.gmra.mrb[0].mxu0 %v1973
        %v2087 = vpop.f32.mrb[0].mxu0
        %v2088 = vadd.f32 0.0, %v2087
        %v2089 = vpop.f32.mrb[0].mxu0
        %v2090 = vpop.f32.mrb[0].mxu0
        %v2091 = vadd.f32 0.0, %v2090
        %v2092 = vpop.f32.mrb[0].mxu0
        %2093 = vmatprep.mubr.bf16.mxu0 0
        %2094 = vmatmul.mubr.bf16.gmra.mrb[0].mxu0 %v1974
        %v2095 = vpop.f32.mrb[0].mxu0
        %v2096 = vadd.f32 0.0, %v2095
        %v2097 = vpop.f32.mrb[0].mxu0
        %v2098 = vpop.f32.mrb[0].mxu0
        %v2099 = vadd.f32 0.0, %v2098
        %v2100 = vpop.f32.mrb[0].mxu0
        %2101 = vmatprep.mubr.bf16.mxu0 0
        %2102 = vmatmul.mubr.bf16.gmra.mrb[0].mxu0 %v1975
        %v2103 = vpop.f32.mrb[0].mxu0
        %v2104 = vadd.f32 0.0, %v2103
        %v2105 = vpop.f32.mrb[0].mxu0
        %v2106 = vpop.f32.mrb[0].mxu0
        %v2107 = vadd.f32 0.0, %v2106
        %v2108 = vpop.f32.mrb[0].mxu0
        %2109 = vmatprep.mubr.bf16.mxu0 0
        %2110 = vmatmul.mubr.bf16.gmra.mrb[0].mxu0 %v1976
        %v2111 = vpop.f32.mrb[0].mxu0
        %v2112 = vadd.f32 0.0, %v2111
        %v2113 = vpop.f32.mrb[0].mxu0
        %v2114 = vpop.f32.mrb[0].mxu0
        %v2115 = vadd.f32 0.0, %v2114
        %v2116 = vpop.f32.mrb[0].mxu0
        %2117 = vmatprep.mubr.bf16.mxu0 0
        %2118 = vmatmul.mubr.bf16.gmra.mrb[0].mxu0 %v1977
        %v2119 = vpop.f32.mrb[0].mxu0
        %v2120 = vadd.f32 0.0, %v2119
        %v2121 = vpop.f32.mrb[0].mxu0
        %v2122 = vpop.f32.mrb[0].mxu0
        %v2123 = vadd.f32 0.0, %v2122
        %v2124 = vpop.f32.mrb[0].mxu0
        %2125 = vmatprep.mubr.bf16.mxu0 0
        %2126 = vmatmul.mubr.bf16.gmra.mrb[0].mxu0 %v1978
        %v2127 = vpop.f32.mrb[0].mxu0
        %v2128 = vadd.f32 0.0, %v2127
        %v2129 = vpop.f32.mrb[0].mxu0
        %v2130 = vpop.f32.mrb[0].mxu0
        %v2131 = vadd.f32 0.0, %v2130
        %v2132 = vpop.f32.mrb[0].mxu0
        %2133 = vmatprep.mubr.bf16.mxu0 0
        %2134 = vmatmul.mubr.bf16.gmra.mrb[0].mxu0 %v1979
        %v2135 = vpop.f32.mrb[0].mxu0
        %v2136 = vadd.f32 0.0, %v2135
        %v2137 = vpop.f32.mrb[0].mxu0
        %v2138 = vpop.f32.mrb[0].mxu0
        %v2139 = vadd.f32 0.0, %v2138
        %v2140 = vpop.f32.mrb[0].mxu0
        %2141 = vmatprep.mubr.bf16.mxu0 0
        %2142 = vmatmul.mubr.bf16.gmra.mrb[0].mxu0 %v1980
        %v2143 = vpop.f32.mrb[0].mxu0
        %v2144 = vadd.f32 0.0, %v2143
        %v2145 = vpop.f32.mrb[0].mxu0
        %v2146 = vpop.f32.mrb[0].mxu0
        %v2147 = vadd.f32 0.0, %v2146
        %v2148 = vpop.f32.mrb[0].mxu0
        %2149 = vmatprep.mubr.bf16.mxu0 0
        %2150 = vmatmul.mubr.bf16.gmra.mrb[0].mxu0 %v1981
        %v2151 = vpop.f32.mrb[0].mxu0
        %v2152 = vadd.f32 0.0, %v2151
        %v2153 = vpop.f32.mrb[0].mxu0
        %v2154 = vpop.f32.mrb[0].mxu0
        %v2155 = vadd.f32 0.0, %v2154
        %v2156 = vpop.f32.mrb[0].mxu0
        %2157 = vmatprep.mubr.bf16.mxu0 0
        %2158 = vmatmul.mubr.bf16.gmra.mrb[0].mxu0 %v1982
        %v2159 = vpop.f32.mrb[0].mxu0
        %v2160 = vadd.f32 0.0, %v2159
        %v2161 = vpop.f32.mrb[0].mxu0
        %v2162 = vpop.f32.mrb[0].mxu0
        %v2163 = vadd.f32 0.0, %v2162
        %v2164 = vpop.f32.mrb[0].mxu0
        %2165 = vmatprep.mubr.bf16.mxu0 0
        %2166 = vmatmul.mubr.bf16.gmra.mrb[0].mxu0 %v1983
        %v2167 = vpop.f32.mrb[0].mxu0
        %v2168 = vadd.f32 0.0, %v2167
        %v2169 = vpop.f32.mrb[0].mxu0
        %v2170 = vpop.f32.mrb[0].mxu0
        %v2171 = vadd.f32 0.0, %v2170
        %v2172 = vpop.f32.mrb[0].mxu0
        %2173 = vmatprep.mubr.bf16.mxu0 0
        %2174 = vmatmul.mubr.bf16.gmra.mrb[0].mxu0 %v1984
        %v2175 = vpop.f32.mrb[0].mxu0
        %v2176 = vadd.f32 0.0, %v2175
        %v2177 = vpop.f32.mrb[0].mxu0
        %v2178 = vpop.f32.mrb[0].mxu0
        %v2179 = vadd.f32 0.0, %v2178
        %v2180 = vpop.f32.mrb[0].mxu0
        %2181 = vmatprep.mubr.bf16.mxu0 0
        %2182 = vmatmul.mubr.bf16.gmra.mrb[0].mxu0 %v1985
        %v2183 = vpop.f32.mrb[0].mxu0
        %v2184 = vadd.f32 0.0, %v2183
        %v2185 = vpop.f32.mrb[0].mxu0
        %v2186 = vpop.f32.mrb[0].mxu0
        %v2187 = vadd.f32 0.0, %v2186
        %v2188 = vpop.f32.mrb[0].mxu0
        %2189 = vmatprep.mubr.bf16.mxu0 0
        %2190 = vmatmul.mubr.bf16.gmra.mrb[0].mxu0 %v1986
        %v2191 = vpop.f32.mrb[0].mxu0
        %v2192 = vadd.f32 0.0, %v2191
        %v2193 = vpop.f32.mrb[0].mxu0
        %v2194 = vpop.f32.mrb[0].mxu0
        %v2195 = vadd.f32 0.0, %v2194
        %v2196 = vpop.f32.mrb[0].mxu0
        %2197 = vmatprep.mubr.bf16.mxu0 0
        %2198 = vmatmul.mubr.bf16.gmra.mrb[0].mxu0 %v1987
        %v2199 = vpop.f32.mrb[0].mxu0
        %v2200 = vadd.f32 0.0, %v2199
        %v2201 = vpop.f32.mrb[0].mxu0
        %v2202 = vpop.f32.mrb[0].mxu0
        %v2203 = vadd.f32 0.0, %v2202
        %v2204 = vpop.f32.mrb[0].mxu0
        %2205 = vmatprep.mubr.bf16.mxu0 0
        %2206 = vmatmul.mubr.bf16.gmra.mrb[0].mxu0 %v1988
        %v2207 = vpop.f32.mrb[0].mxu0
        %v2208 = vadd.f32 0.0, %v2207
        %v2209 = vpop.f32.mrb[0].mxu0
        %v2210 = vpop.f32.mrb[0].mxu0
        %v2211 = vadd.f32 0.0, %v2210
        %v2212 = vpop.f32.mrb[0].mxu0
        %2213 = vdwg.mxu0
        %v2214 = vpack.c.b16 %v1414, %v1413
        %v2215 = vpack.c.b16 %v1417, %v1416
        %v2216 = vpack.c.b16 %v1420, %v1419
        %v2217 = vpack.c.b16 %v1423, %v1422
        %v2218 = vpack.c.b16 %v1426, %v1425
        %v2219 = vpack.c.b16 %v1429, %v1428
        %v2220 = vpack.c.b16 %v1432, %v1431
        %v2221 = vpack.c.b16 %v1435, %v1434
        %v2222 = vpack.c.b16 %v1438, %v1437
        %v2223 = vpack.c.b16 %v1441, %v1440
        %v2224 = vpack.c.b16 %v1444, %v1443
        %v2225 = vpack.c.b16 %v1447, %v1446
        %v2226 = vpack.c.b16 %v1450, %v1449
        %v2227 = vpack.c.b16 %v1453, %v1452
        %v2228 = vpack.c.b16 %v1456, %v1455
        %v2229 = vpack.c.b16 %v1459, %v1458
        %v2262 = vunpack.c.l.b16 %v1521
        %v2263 = vunpack.c.l.b16 %v1522
        %v2264 = vunpack.c.l.b16 %v1523
        %v2265 = vunpack.c.l.b16 %v1524
        %v2266 = vunpack.c.l.b16 %v1525
        %v2267 = vunpack.c.l.b16 %v1526
        %v2268 = vunpack.c.l.b16 %v1527
        %v2269 = vunpack.c.l.b16 %v1528
        %v2270 = vunpack.c.l.b16 %v1529
        %v2271 = vunpack.c.l.b16 %v1530
        %v2272 = vunpack.c.l.b16 %v1531
        %v2273 = vunpack.c.l.b16 %v1532
        %v2274 = vunpack.c.l.b16 %v1533
        %v2275 = vunpack.c.l.b16 %v1534
        %v2276 = vunpack.c.l.b16 %v1535
        %v2277 = vunpack.c.l.b16 %v1536
        %v2278 = vpack.c.b16 %v2263, %v2262
        %v2279 = vpack.c.b16 %v2265, %v2264
        %v2280 = vpack.c.b16 %v2267, %v2266
        %v2281 = vpack.c.b16 %v2269, %v2268
        %v2282 = vpack.c.b16 %v2271, %v2270
        %v2283 = vpack.c.b16 %v2273, %v2272
        %v2284 = vpack.c.b16 %v2275, %v2274
        %v2285 = vpack.c.b16 %v2277, %v2276
        %2294 = vmatprep.subr.bf16.mxu0 0
        %2295 = vmatpush1.bf16.msra.mxu0 %v2278
        %2296 = vmatprep.subr.bf16.mxu0 0
        %2297 = vmatpush1.bf16.msra.mxu0 %v2279
        %2298 = vmatprep.subr.bf16.mxu0 0
        %2299 = vmatpush1.bf16.msra.mxu0 %v2280
        %2300 = vmatprep.subr.bf16.mxu0 0
        %2301 = vmatpush1.bf16.msra.mxu0 %v2281
        %2302 = vmatprep.subr.bf16.mxu0 0
        %2303 = vmatpush1.bf16.msra.mxu0 %v2282
        %2304 = vmatprep.subr.bf16.mxu0 0
        %2305 = vmatpush1.bf16.msra.mxu0 %v2283
        %2306 = vmatprep.subr.bf16.mxu0 0
        %2307 = vmatpush1.bf16.msra.mxu0 %v2284
        %2308 = vmatprep.subr.bf16.mxu0 0
        %2309 = vmatpush1.bf16.msra.mxu0 %v2285
        %2310 = vmatprep.subr.bf16.mxu0 0
        %2311 = vmatpush1.bf16.msra.mxu0 0
        %2312 = vmatprep.subr.bf16.mxu0 0
        %2313 = vmatpush1.bf16.msra.mxu0 0
        %2314 = vmatprep.subr.bf16.mxu0 0
        %2315 = vmatpush1.bf16.msra.mxu0 0
        %2316 = vmatprep.subr.bf16.mxu0 0
        %2317 = vmatpush1.bf16.msra.mxu0 0
        %2318 = vmatprep.subr.bf16.mxu0 0
        %2319 = vmatpush1.bf16.msra.mxu0 0
        %2320 = vmatprep.subr.bf16.mxu0 0
        %2321 = vmatpush1.bf16.msra.mxu0 0
        %2322 = vmatprep.subr.bf16.mxu0 0
        %2323 = vmatpush1.bf16.msra.mxu0 0
        %2324 = vmatprep.subr.bf16.mxu0 0
        %2325 = vmatpush1.bf16.msra.mxu0 0
        %2326 = vmatprep.mubr.bf16.mxu0 0
        %2327 = vmatmul.mubr.bf16.gmra.mrb[0].mxu0 %v2214
        %v2328 = vpop.f32.mrb[0].mxu0
        %v2329 = vadd.f32 %v2088, %v2328
        %v2330 = vpop.f32.mrb[0].mxu0
        %v2331 = vpop.f32.mrb[0].mxu0
        %v2332 = vadd.f32 %v2091, %v2331
        %v2333 = vpop.f32.mrb[0].mxu0
        %2334 = vmatprep.mubr.bf16.mxu0 0
        %2335 = vmatmul.mubr.bf16.gmra.mrb[0].mxu0 %v2215
        %v2336 = vpop.f32.mrb[0].mxu0
        %v2337 = vadd.f32 %v2096, %v2336
        %v2338 = vpop.f32.mrb[0].mxu0
        %v2339 = vpop.f32.mrb[0].mxu0
        %v2340 = vadd.f32 %v2099, %v2339
        %v2341 = vpop.f32.mrb[0].mxu0
        %2342 = vmatprep.mubr.bf16.mxu0 0
        %2343 = vmatmul.mubr.bf16.gmra.mrb[0].mxu0 %v2216
        %v2344 = vpop.f32.mrb[0].mxu0
        %v2345 = vadd.f32 %v2104, %v2344
        %v2346 = vpop.f32.mrb[0].mxu0
        %v2347 = vpop.f32.mrb[0].mxu0
        %v2348 = vadd.f32 %v2107, %v2347
        %v2349 = vpop.f32.mrb[0].mxu0
        %2350 = vmatprep.mubr.bf16.mxu0 0
        %2351 = vmatmul.mubr.bf16.gmra.mrb[0].mxu0 %v2217
        %v2352 = vpop.f32.mrb[0].mxu0
        %v2353 = vadd.f32 %v2112, %v2352
        %v2354 = vpop.f32.mrb[0].mxu0
        %v2355 = vpop.f32.mrb[0].mxu0
        %v2356 = vadd.f32 %v2115, %v2355
        %v2357 = vpop.f32.mrb[0].mxu0
        %2358 = vmatprep.mubr.bf16.mxu0 0
        %2359 = vmatmul.mubr.bf16.gmra.mrb[0].mxu0 %v2218
        %v2360 = vpop.f32.mrb[0].mxu0
        %v2361 = vadd.f32 %v2120, %v2360
        %v2362 = vpop.f32.mrb[0].mxu0
        %v2363 = vpop.f32.mrb[0].mxu0
        %v2364 = vadd.f32 %v2123, %v2363
        %v2365 = vpop.f32.mrb[0].mxu0
        %2366 = vmatprep.mubr.bf16.mxu0 0
        %2367 = vmatmul.mubr.bf16.gmra.mrb[0].mxu0 %v2219
        %v2368 = vpop.f32.mrb[0].mxu0
        %v2369 = vadd.f32 %v2128, %v2368
        %v2370 = vpop.f32.mrb[0].mxu0
        %v2371 = vpop.f32.mrb[0].mxu0
        %v2372 = vadd.f32 %v2131, %v2371
        %v2373 = vpop.f32.mrb[0].mxu0
        %2374 = vmatprep.mubr.bf16.mxu0 0
        %2375 = vmatmul.mubr.bf16.gmra.mrb[0].mxu0 %v2220
        %v2376 = vpop.f32.mrb[0].mxu0
        %v2377 = vadd.f32 %v2136, %v2376
        %v2378 = vpop.f32.mrb[0].mxu0
        %v2379 = vpop.f32.mrb[0].mxu0
        %v2380 = vadd.f32 %v2139, %v2379
        %v2381 = vpop.f32.mrb[0].mxu0
        %2382 = vmatprep.mubr.bf16.mxu0 0
        %2383 = vmatmul.mubr.bf16.gmra.mrb[0].mxu0 %v2221
        %v2384 = vpop.f32.mrb[0].mxu0
        %v2385 = vadd.f32 %v2144, %v2384
        %v2386 = vpop.f32.mrb[0].mxu0
        %v2387 = vpop.f32.mrb[0].mxu0
        %v2388 = vadd.f32 %v2147, %v2387
        %v2389 = vpop.f32.mrb[0].mxu0
        %2390 = vmatprep.mubr.bf16.mxu0 0
        %2391 = vmatmul.mubr.bf16.gmra.mrb[0].mxu0 %v2222
        %v2392 = vpop.f32.mrb[0].mxu0
        %v2393 = vadd.f32 %v2152, %v2392
        %v2394 = vpop.f32.mrb[0].mxu0
        %v2395 = vpop.f32.mrb[0].mxu0
        %v2396 = vadd.f32 %v2155, %v2395
        %v2397 = vpop.f32.mrb[0].mxu0
        %2398 = vmatprep.mubr.bf16.mxu0 0
        %2399 = vmatmul.mubr.bf16.gmra.mrb[0].mxu0 %v2223
        %v2400 = vpop.f32.mrb[0].mxu0
        %v2401 = vadd.f32 %v2160, %v2400
        %v2402 = vpop.f32.mrb[0].mxu0
        %v2403 = vpop.f32.mrb[0].mxu0
        %v2404 = vadd.f32 %v2163, %v2403
        %v2405 = vpop.f32.mrb[0].mxu0
        %2406 = vmatprep.mubr.bf16.mxu0 0
        %2407 = vmatmul.mubr.bf16.gmra.mrb[0].mxu0 %v2224
        %v2408 = vpop.f32.mrb[0].mxu0
        %v2409 = vadd.f32 %v2168, %v2408
        %v2410 = vpop.f32.mrb[0].mxu0
        %v2411 = vpop.f32.mrb[0].mxu0
        %v2412 = vadd.f32 %v2171, %v2411
        %v2413 = vpop.f32.mrb[0].mxu0
        %2414 = vmatprep.mubr.bf16.mxu0 0
        %2415 = vmatmul.mubr.bf16.gmra.mrb[0].mxu0 %v2225
        %v2416 = vpop.f32.mrb[0].mxu0
        %v2417 = vadd.f32 %v2176, %v2416
        %v2418 = vpop.f32.mrb[0].mxu0
        %v2419 = vpop.f32.mrb[0].mxu0
        %v2420 = vadd.f32 %v2179, %v2419
        %v2421 = vpop.f32.mrb[0].mxu0
        %2422 = vmatprep.mubr.bf16.mxu0 0
        %2423 = vmatmul.mubr.bf16.gmra.mrb[0].mxu0 %v2226
        %v2424 = vpop.f32.mrb[0].mxu0
        %v2425 = vadd.f32 %v2184, %v2424
        %v2426 = vpop.f32.mrb[0].mxu0
        %v2427 = vpop.f32.mrb[0].mxu0
        %v2428 = vadd.f32 %v2187, %v2427
        %v2429 = vpop.f32.mrb[0].mxu0
        %2430 = vmatprep.mubr.bf16.mxu0 0
        %2431 = vmatmul.mubr.bf16.gmra.mrb[0].mxu0 %v2227
        %v2432 = vpop.f32.mrb[0].mxu0
        %v2433 = vadd.f32 %v2192, %v2432
        %v2434 = vpop.f32.mrb[0].mxu0
        %v2435 = vpop.f32.mrb[0].mxu0
        %v2436 = vadd.f32 %v2195, %v2435
        %v2437 = vpop.f32.mrb[0].mxu0
        %2438 = vmatprep.mubr.bf16.mxu0 0
        %2439 = vmatmul.mubr.bf16.gmra.mrb[0].mxu0 %v2228
        %v2440 = vpop.f32.mrb[0].mxu0
        %v2441 = vadd.f32 %v2200, %v2440
        %v2442 = vpop.f32.mrb[0].mxu0
        %v2443 = vpop.f32.mrb[0].mxu0
        %v2444 = vadd.f32 %v2203, %v2443
        %v2445 = vpop.f32.mrb[0].mxu0
        %2446 = vmatprep.mubr.bf16.mxu0 0
        %2447 = vmatmul.mubr.bf16.gmra.mrb[0].mxu0 %v2229
        %v2448 = vpop.f32.mrb[0].mxu0
        %v2449 = vadd.f32 %v2208, %v2448
        %v2450 = vpop.f32.mrb[0].mxu0
        %v2451 = vpop.f32.mrb[0].mxu0
        %v2452 = vadd.f32 %v2211, %v2451
        %v2453 = vpop.f32.mrb[0].mxu0
        %2454 = vdwg.mxu0
        %vm2455 = vcmask 1042432
        %vm2456 = vcmask 1046532
        %vm2457 = vmor %vm2455, %vm2456
        %v2458 = vrot.slane %v1467, 5
        %v2459 = vrot.slane %v2458, 4
        %v2460 = vrot.slane %v1468, 5
        %v2461 = vsel %vm2457, %v2459, %v2460
        %v2462 = vrot.slane %v2460, 4
        %v2463 = vrot.slane %v1469, 5
        %v2464 = vsel %vm2457, %v2462, %v2463
        %v2465 = vrot.slane %v1470, 5
        %v2466 = vrot.slane %v2465, 4
        %v2467 = vrot.slane %v1471, 5
        %v2468 = vsel %vm2457, %v2466, %v2467
        %v2469 = vrot.slane %v2467, 4
        %v2470 = vrot.slane %v1472, 5
        %v2471 = vsel %vm2457, %v2469, %v2470
        %v2472 = vrot.slane %v1473, 5
        %v2473 = vrot.slane %v2472, 4
        %v2474 = vrot.slane %v1474, 5
        %v2475 = vsel %vm2457, %v2473, %v2474
        %v2476 = vrot.slane %v2474, 4
        %v2477 = vrot.slane %v1475, 5
        %v2478 = vsel %vm2457, %v2476, %v2477
        %v2479 = vrot.slane %v1476, 5
        %v2480 = vrot.slane %v2479, 4
        %v2481 = vrot.slane %v1477, 5
        %v2482 = vsel %vm2457, %v2480, %v2481
        %v2483 = vrot.slane %v2481, 4
        %v2484 = vrot.slane %v1478, 5
        %v2485 = vsel %vm2457, %v2483, %v2484
        %v2486 = vrot.slane %v1479, 5
        %v2487 = vrot.slane %v2486, 4
        %v2488 = vrot.slane %v1480, 5
        %v2489 = vsel %vm2457, %v2487, %v2488
        %v2490 = vrot.slane %v2488, 4
        %v2491 = vrot.slane %v1481, 5
        %v2492 = vsel %vm2457, %v2490, %v2491
        %v2493 = vrot.slane %v1482, 5
        %v2494 = vrot.slane %v2493, 4
        %v2495 = vrot.slane %v1483, 5
        %v2496 = vsel %vm2457, %v2494, %v2495
        %v2497 = vrot.slane %v2495, 4
        %v2498 = vrot.slane %v1484, 5
        %v2499 = vsel %vm2457, %v2497, %v2498
        %v2500 = vrot.slane %v1485, 5
        %v2501 = vrot.slane %v2500, 4
        %v2502 = vrot.slane %v1486, 5
        %v2503 = vsel %vm2457, %v2501, %v2502
        %v2504 = vrot.slane %v2502, 4
        %v2505 = vrot.slane %v1487, 5
        %v2506 = vsel %vm2457, %v2504, %v2505
        %v2507 = vrot.slane %v1488, 5
        %v2508 = vrot.slane %v2507, 4
        %v2509 = vrot.slane %v1489, 5
        %v2510 = vsel %vm2457, %v2508, %v2509
        %v2511 = vrot.slane %v2509, 4
        %v2512 = vrot.slane %v1490, 5
        %v2513 = vsel %vm2457, %v2511, %v2512
        %v2514 = vrot.slane %v1491, 5
        %v2515 = vrot.slane %v2514, 4
        %v2516 = vrot.slane %v1492, 5
        %v2517 = vsel %vm2457, %v2515, %v2516
        %v2518 = vrot.slane %v2516, 4
        %v2519 = vrot.slane %v1493, 5
        %v2520 = vsel %vm2457, %v2518, %v2519
        %v2521 = vrot.slane %v1494, 5
        %v2522 = vrot.slane %v2521, 4
        %v2523 = vrot.slane %v1495, 5
        %v2524 = vsel %vm2457, %v2522, %v2523
        %v2525 = vrot.slane %v2523, 4
        %v2526 = vrot.slane %v1496, 5
        %v2527 = vsel %vm2457, %v2525, %v2526
        %v2528 = vrot.slane %v1497, 5
        %v2529 = vrot.slane %v2528, 4
        %v2530 = vrot.slane %v1498, 5
        %v2531 = vsel %vm2457, %v2529, %v2530
        %v2532 = vrot.slane %v2530, 4
        %v2533 = vrot.slane %v1499, 5
        %v2534 = vsel %vm2457, %v2532, %v2533
        %v2535 = vrot.slane %v1500, 5
        %v2536 = vrot.slane %v2535, 4
        %v2537 = vrot.slane %v1501, 5
        %v2538 = vsel %vm2457, %v2536, %v2537
        %v2539 = vrot.slane %v2537, 4
        %v2540 = vrot.slane %v1502, 5
        %v2541 = vsel %vm2457, %v2539, %v2540
        %v2542 = vrot.slane %v1503, 5
        %v2543 = vrot.slane %v2542, 4
        %v2544 = vrot.slane %v1504, 5
        %v2545 = vsel %vm2457, %v2543, %v2544
        %v2546 = vrot.slane %v2544, 4
        %v2547 = vrot.slane %v1505, 5
        %v2548 = vsel %vm2457, %v2546, %v2547
        %v2549 = vrot.slane %v1506, 5
        %v2550 = vrot.slane %v2549, 4
        %v2551 = vrot.slane %v1507, 5
        %v2552 = vsel %vm2457, %v2550, %v2551
        %v2553 = vrot.slane %v2551, 4
        %v2554 = vrot.slane %v1508, 5
        %v2555 = vsel %vm2457, %v2553, %v2554
        %v2556 = vrot.slane %v1509, 5
        %v2557 = vrot.slane %v2556, 4
        %v2558 = vrot.slane %v1510, 5
        %v2559 = vsel %vm2457, %v2557, %v2558
        %v2560 = vrot.slane %v2558, 4
        %v2561 = vrot.slane %v1511, 5
        %v2562 = vsel %vm2457, %v2560, %v2561
        %v2563 = vrot.slane %v1512, 5
        %v2564 = vrot.slane %v2563, 4
        %v2565 = vrot.slane %v1513, 5
        %v2566 = vsel %vm2457, %v2564, %v2565
        %v2567 = vrot.slane %v2565, 4
        %v2568 = vrot.slane %v1514, 5
        %v2569 = vsel %vm2457, %v2567, %v2568
        %s2570 = scalar_lea.vmem [#allocation5], 128
        %v2571 = vld [vmem:[%s2570] sm:$0xf]
        %v2572 = vld [vmem:[%s2570 + $0x4] sm:$0xf]
        %v2573 = vld [vmem:[%s2570 + $0x8] sm:$0xf]
        %v2574 = vld [vmem:[%s2570 + $0xc] sm:$0xf]
        %v2575 = vld [vmem:[%s2570 + $0x10] sm:$0xf]
        %v2576 = vld [vmem:[%s2570 + $0x14] sm:$0xf]
        %v2577 = vld [vmem:[%s2570 + $0x18] sm:$0xf]
        %v2578 = vld [vmem:[%s2570 + $0x1c] sm:$0xf]
        %v2579 = vld [vmem:[%s2570 + $0x20] sm:$0xf]
        %v2580 = vld [vmem:[%s2570 + $0x24] sm:$0xf]
        %v2581 = vld [vmem:[%s2570 + $0x28] sm:$0xf]
        %v2582 = vld [vmem:[%s2570 + $0x2c] sm:$0xf]
        %v2583 = vld [vmem:[%s2570 + $0x30] sm:$0xf]
        %v2584 = vld [vmem:[%s2570 + $0x34] sm:$0xf]
        %v2585 = vld [vmem:[%s2570 + $0x38] sm:$0xf]
        %v2586 = vld [vmem:[%s2570 + $0x3c] sm:$0xf]
        %v2587 = vunpack.c.l.b16 %v2461
        %v2588 = vunpack.c.l.b16 %v2464
        %v2589 = vunpack.c.l.b16 %v2468
        %v2590 = vunpack.c.l.b16 %v2471
        %v2591 = vunpack.c.l.b16 %v2475
        %v2592 = vunpack.c.l.b16 %v2478
        %v2593 = vunpack.c.l.b16 %v2482
        %v2594 = vunpack.c.l.b16 %v2485
        %v2595 = vunpack.c.l.b16 %v2489
        %v2596 = vunpack.c.l.b16 %v2492
        %v2597 = vunpack.c.l.b16 %v2496
        %v2598 = vunpack.c.l.b16 %v2499
        %v2599 = vunpack.c.l.b16 %v2503
        %v2600 = vunpack.c.l.b16 %v2506
        %v2601 = vunpack.c.l.b16 %v2510
        %v2602 = vunpack.c.l.b16 %v2513
        %v2603 = vunpack.c.l.b16 %v2517
        %v2604 = vunpack.c.l.b16 %v2520
        %v2605 = vunpack.c.l.b16 %v2524
        %v2606 = vunpack.c.l.b16 %v2527
        %v2607 = vunpack.c.l.b16 %v2531
        %v2608 = vunpack.c.l.b16 %v2534
        %v2609 = vunpack.c.l.b16 %v2538
        %v2610 = vunpack.c.l.b16 %v2541
        %v2611 = vunpack.c.l.b16 %v2545
        %v2612 = vunpack.c.l.b16 %v2548
        %v2613 = vunpack.c.l.b16 %v2552
        %v2614 = vunpack.c.l.b16 %v2555
        %v2615 = vunpack.c.l.b16 %v2559
        %v2616 = vunpack.c.l.b16 %v2562
        %v2617 = vunpack.c.l.b16 %v2566
        %v2618 = vunpack.c.l.b16 %v2569
        %v2619 = vpack.c.b16 %v2588, %v2587
        %v2620 = vpack.c.b16 %v2590, %v2589
        %v2621 = vpack.c.b16 %v2592, %v2591
        %v2622 = vpack.c.b16 %v2594, %v2593
        %v2623 = vpack.c.b16 %v2596, %v2595
        %v2624 = vpack.c.b16 %v2598, %v2597
        %v2625 = vpack.c.b16 %v2600, %v2599
        %v2626 = vpack.c.b16 %v2602, %v2601
        %v2627 = vpack.c.b16 %v2604, %v2603
        %v2628 = vpack.c.b16 %v2606, %v2605
        %v2629 = vpack.c.b16 %v2608, %v2607
        %v2630 = vpack.c.b16 %v2610, %v2609
        %v2631 = vpack.c.b16 %v2612, %v2611
        %v2632 = vpack.c.b16 %v2614, %v2613
        %v2633 = vpack.c.b16 %v2616, %v2615
        %v2634 = vpack.c.b16 %v2618, %v2617
        %v2667 = vunpack.c.l.b16 %v2571
        %v2668 = vunpack.c.l.b16 %v2572
        %v2669 = vunpack.c.l.b16 %v2573
        %v2670 = vunpack.c.l.b16 %v2574
        %v2671 = vunpack.c.l.b16 %v2575
        %v2672 = vunpack.c.l.b16 %v2576
        %v2673 = vunpack.c.l.b16 %v2577
        %v2674 = vunpack.c.l.b16 %v2578
        %v2675 = vunpack.c.l.b16 %v2579
        %v2676 = vunpack.c.l.b16 %v2580
        %v2677 = vunpack.c.l.b16 %v2581
        %v2678 = vunpack.c.l.b16 %v2582
        %v2679 = vunpack.c.l.b16 %v2583
        %v2680 = vunpack.c.l.b16 %v2584
        %v2681 = vunpack.c.l.b16 %v2585
        %v2682 = vunpack.c.l.b16 %v2586
        %v2683 = vpack.c.b16 %v2668, %v2667
        %v2684 = vpack.c.b16 %v2670, %v2669
        %v2685 = vpack.c.b16 %v2672, %v2671
        %v2686 = vpack.c.b16 %v2674, %v2673
        %v2687 = vpack.c.b16 %v2676, %v2675
        %v2688 = vpack.c.b16 %v2678, %v2677
        %v2689 = vpack.c.b16 %v2680, %v2679
        %v2690 = vpack.c.b16 %v2682, %v2681
        %2699 = vmatprep.subr.bf16.mxu0 0
        %2700 = vmatpush1.bf16.msra.mxu0 %v2683
        %2701 = vmatprep.subr.bf16.mxu0 0
        %2702 = vmatpush1.bf16.msra.mxu0 %v2684
        %2703 = vmatprep.subr.bf16.mxu0 0
        %2704 = vmatpush1.bf16.msra.mxu0 %v2685
        %2705 = vmatprep.subr.bf16.mxu0 0
        %2706 = vmatpush1.bf16.msra.mxu0 %v2686
        %2707 = vmatprep.subr.bf16.mxu0 0
        %2708 = vmatpush1.bf16.msra.mxu0 %v2687
        %2709 = vmatprep.subr.bf16.mxu0 0
        %2710 = vmatpush1.bf16.msra.mxu0 %v2688
        %2711 = vmatprep.subr.bf16.mxu0 0
        %2712 = vmatpush1.bf16.msra.mxu0 %v2689
        %2713 = vmatprep.subr.bf16.mxu0 0
        %2714 = vmatpush1.bf16.msra.mxu0 %v2690
        %2715 = vmatprep.subr.bf16.mxu0 0
        %2716 = vmatpush1.bf16.msra.mxu0 0
        %2717 = vmatprep.subr.bf16.mxu0 0
        %2718 = vmatpush1.bf16.msra.mxu0 0
        %2719 = vmatprep.subr.bf16.mxu0 0
        %2720 = vmatpush1.bf16.msra.mxu0 0
        %2721 = vmatprep.subr.bf16.mxu0 0
        %2722 = vmatpush1.bf16.msra.mxu0 0
        %2723 = vmatprep.subr.bf16.mxu0 0
        %2724 = vmatpush1.bf16.msra.mxu0 0
        %2725 = vmatprep.subr.bf16.mxu0 0
        %2726 = vmatpush1.bf16.msra.mxu0 0
        %2727 = vmatprep.subr.bf16.mxu0 0
        %2728 = vmatpush1.bf16.msra.mxu0 0
        %2729 = vmatprep.subr.bf16.mxu0 0
        %2730 = vmatpush1.bf16.msra.mxu0 0
        %2731 = vmatprep.mubr.bf16.mxu0 0
        %2732 = vmatmul.mubr.bf16.gmra.mrb[0].mxu0 %v2619
        %v2733 = vpop.f32.mrb[0].mxu0
        %v2734 = vadd.f32 0.0, %v2733
        %v2735 = vpop.f32.mrb[0].mxu0
        %v2736 = vpop.f32.mrb[0].mxu0
        %v2737 = vadd.f32 0.0, %v2736
        %v2738 = vpop.f32.mrb[0].mxu0
        %2739 = vmatprep.mubr.bf16.mxu0 0
        %2740 = vmatmul.mubr.bf16.gmra.mrb[0].mxu0 %v2620
        %v2741 = vpop.f32.mrb[0].mxu0
        %v2742 = vadd.f32 0.0, %v2741
        %v2743 = vpop.f32.mrb[0].mxu0
        %v2744 = vpop.f32.mrb[0].mxu0
        %v2745 = vadd.f32 0.0, %v2744
        %v2746 = vpop.f32.mrb[0].mxu0
        %2747 = vmatprep.mubr.bf16.mxu0 0
        %2748 = vmatmul.mubr.bf16.gmra.mrb[0].mxu0 %v2621
        %v2749 = vpop.f32.mrb[0].mxu0
        %v2750 = vadd.f32 0.0, %v2749
        %v2751 = vpop.f32.mrb[0].mxu0
        %v2752 = vpop.f32.mrb[0].mxu0
        %v2753 = vadd.f32 0.0, %v2752
        %v2754 = vpop.f32.mrb[0].mxu0
        %2755 = vmatprep.mubr.bf16.mxu0 0
        %2756 = vmatmul.mubr.bf16.gmra.mrb[0].mxu0 %v2622
        %v2757 = vpop.f32.mrb[0].mxu0
        %v2758 = vadd.f32 0.0, %v2757
        %v2759 = vpop.f32.mrb[0].mxu0
        %v2760 = vpop.f32.mrb[0].mxu0
        %v2761 = vadd.f32 0.0, %v2760
        %v2762 = vpop.f32.mrb[0].mxu0
        %2763 = vmatprep.mubr.bf16.mxu0 0
        %2764 = vmatmul.mubr.bf16.gmra.mrb[0].mxu0 %v2623
        %v2765 = vpop.f32.mrb[0].mxu0
        %v2766 = vadd.f32 0.0, %v2765
        %v2767 = vpop.f32.mrb[0].mxu0
        %v2768 = vpop.f32.mrb[0].mxu0
        %v2769 = vadd.f32 0.0, %v2768
        %v2770 = vpop.f32.mrb[0].mxu0
        %2771 = vmatprep.mubr.bf16.mxu0 0
        %2772 = vmatmul.mubr.bf16.gmra.mrb[0].mxu0 %v2624
        %v2773 = vpop.f32.mrb[0].mxu0
        %v2774 = vadd.f32 0.0, %v2773
        %v2775 = vpop.f32.mrb[0].mxu0
        %v2776 = vpop.f32.mrb[0].mxu0
        %v2777 = vadd.f32 0.0, %v2776
        %v2778 = vpop.f32.mrb[0].mxu0
        %2779 = vmatprep.mubr.bf16.mxu0 0
        %2780 = vmatmul.mubr.bf16.gmra.mrb[0].mxu0 %v2625
        %v2781 = vpop.f32.mrb[0].mxu0
        %v2782 = vadd.f32 0.0, %v2781
        %v2783 = vpop.f32.mrb[0].mxu0
        %v2784 = vpop.f32.mrb[0].mxu0
        %v2785 = vadd.f32 0.0, %v2784
        %v2786 = vpop.f32.mrb[0].mxu0
        %2787 = vmatprep.mubr.bf16.mxu0 0
        %2788 = vmatmul.mubr.bf16.gmra.mrb[0].mxu0 %v2626
        %v2789 = vpop.f32.mrb[0].mxu0
        %v2790 = vadd.f32 0.0, %v2789
        %v2791 = vpop.f32.mrb[0].mxu0
        %v2792 = vpop.f32.mrb[0].mxu0
        %v2793 = vadd.f32 0.0, %v2792
        %v2794 = vpop.f32.mrb[0].mxu0
        %2795 = vmatprep.mubr.bf16.mxu0 0
        %2796 = vmatmul.mubr.bf16.gmra.mrb[0].mxu0 %v2627
        %v2797 = vpop.f32.mrb[0].mxu0
        %v2798 = vadd.f32 0.0, %v2797
        %v2799 = vpop.f32.mrb[0].mxu0
        %v2800 = vpop.f32.mrb[0].mxu0
        %v2801 = vadd.f32 0.0, %v2800
        %v2802 = vpop.f32.mrb[0].mxu0
        %2803 = vmatprep.mubr.bf16.mxu0 0
        %2804 = vmatmul.mubr.bf16.gmra.mrb[0].mxu0 %v2628
        %v2805 = vpop.f32.mrb[0].mxu0
        %v2806 = vadd.f32 0.0, %v2805
        %v2807 = vpop.f32.mrb[0].mxu0
        %v2808 = vpop.f32.mrb[0].mxu0
        %v2809 = vadd.f32 0.0, %v2808
        %v2810 = vpop.f32.mrb[0].mxu0
        %2811 = vmatprep.mubr.bf16.mxu0 0
        %2812 = vmatmul.mubr.bf16.gmra.mrb[0].mxu0 %v2629
        %v2813 = vpop.f32.mrb[0].mxu0
        %v2814 = vadd.f32 0.0, %v2813
        %v2815 = vpop.f32.mrb[0].mxu0
        %v2816 = vpop.f32.mrb[0].mxu0
        %v2817 = vadd.f32 0.0, %v2816
        %v2818 = vpop.f32.mrb[0].mxu0
        %2819 = vmatprep.mubr.bf16.mxu0 0
        %2820 = vmatmul.mubr.bf16.gmra.mrb[0].mxu0 %v2630
        %v2821 = vpop.f32.mrb[0].mxu0
        %v2822 = vadd.f32 0.0, %v2821
        %v2823 = vpop.f32.mrb[0].mxu0
        %v2824 = vpop.f32.mrb[0].mxu0
        %v2825 = vadd.f32 0.0, %v2824
        %v2826 = vpop.f32.mrb[0].mxu0
        %2827 = vmatprep.mubr.bf16.mxu0 0
        %2828 = vmatmul.mubr.bf16.gmra.mrb[0].mxu0 %v2631
        %v2829 = vpop.f32.mrb[0].mxu0
        %v2830 = vadd.f32 0.0, %v2829
        %v2831 = vpop.f32.mrb[0].mxu0
        %v2832 = vpop.f32.mrb[0].mxu0
        %v2833 = vadd.f32 0.0, %v2832
        %v2834 = vpop.f32.mrb[0].mxu0
        %2835 = vmatprep.mubr.bf16.mxu0 0
        %2836 = vmatmul.mubr.bf16.gmra.mrb[0].mxu0 %v2632
        %v2837 = vpop.f32.mrb[0].mxu0
        %v2838 = vadd.f32 0.0, %v2837
        %v2839 = vpop.f32.mrb[0].mxu0
        %v2840 = vpop.f32.mrb[0].mxu0
        %v2841 = vadd.f32 0.0, %v2840
        %v2842 = vpop.f32.mrb[0].mxu0
        %2843 = vmatprep.mubr.bf16.mxu0 0
        %2844 = vmatmul.mubr.bf16.gmra.mrb[0].mxu0 %v2633
        %v2845 = vpop.f32.mrb[0].mxu0
        %v2846 = vadd.f32 0.0, %v2845
        %v2847 = vpop.f32.mrb[0].mxu0
        %v2848 = vpop.f32.mrb[0].mxu0
        %v2849 = vadd.f32 0.0, %v2848
        %v2850 = vpop.f32.mrb[0].mxu0
        %2851 = vmatprep.mubr.bf16.mxu0 0
        %2852 = vmatmul.mubr.bf16.gmra.mrb[0].mxu0 %v2634
        %v2853 = vpop.f32.mrb[0].mxu0
        %v2854 = vadd.f32 0.0, %v2853
        %v2855 = vpop.f32.mrb[0].mxu0
        %v2856 = vpop.f32.mrb[0].mxu0
        %v2857 = vadd.f32 0.0, %v2856
        %v2858 = vpop.f32.mrb[0].mxu0
        %2859 = vdwg.mxu0
        %v2860 = vadd.f32 %v2329, %v2734
        %v2861 = vadd.f32 %v2332, %v2737
        %v2862 = vadd.f32 %v2337, %v2742
        %v2863 = vadd.f32 %v2340, %v2745
        %v2864 = vadd.f32 %v2345, %v2750
        %v2865 = vadd.f32 %v2348, %v2753
        %v2866 = vadd.f32 %v2353, %v2758
        %v2867 = vadd.f32 %v2356, %v2761
        %v2868 = vadd.f32 %v2361, %v2766
        %v2869 = vadd.f32 %v2364, %v2769
        %v2870 = vadd.f32 %v2369, %v2774
        %v2871 = vadd.f32 %v2372, %v2777
        %v2872 = vadd.f32 %v2377, %v2782
        %v2873 = vadd.f32 %v2380, %v2785
        %v2874 = vadd.f32 %v2385, %v2790
        %v2875 = vadd.f32 %v2388, %v2793
        %v2876 = vadd.f32 %v2393, %v2798
        %v2877 = vadd.f32 %v2396, %v2801
        %v2878 = vadd.f32 %v2401, %v2806
        %v2879 = vadd.f32 %v2404, %v2809
        %v2880 = vadd.f32 %v2409, %v2814
        %v2881 = vadd.f32 %v2412, %v2817
        %v2882 = vadd.f32 %v2417, %v2822
        %v2883 = vadd.f32 %v2420, %v2825
        %v2884 = vadd.f32 %v2425, %v2830
        %v2885 = vadd.f32 %v2428, %v2833
        %v2886 = vadd.f32 %v2433, %v2838
        %v2887 = vadd.f32 %v2436, %v2841
        %v2888 = vadd.f32 %v2441, %v2846
        %v2889 = vadd.f32 %v2444, %v2849
        %v2890 = vadd.f32 %v2449, %v2854
        %v2891 = vadd.f32 %v2452, %v2857
        %s2892 = scalar_lea.vmem [#allocation5], 192
        %v2893 = vld [vmem:[%s2892] sm:$0xf]
        %v2894 = vld [vmem:[%s2892 + $0x4] sm:$0xf]
        %v2895 = vld [vmem:[%s2892 + $0x8] sm:$0xf]
        %v2896 = vld [vmem:[%s2892 + $0xc] sm:$0xf]
        %v2897 = vld [vmem:[%s2892 + $0x10] sm:$0xf]
        %v2898 = vld [vmem:[%s2892 + $0x14] sm:$0xf]
        %v2899 = vld [vmem:[%s2892 + $0x18] sm:$0xf]
        %v2900 = vld [vmem:[%s2892 + $0x1c] sm:$0xf]
        %v2901 = vld [vmem:[%s2892 + $0x20] sm:$0xf]
        %v2902 = vld [vmem:[%s2892 + $0x24] sm:$0xf]
        %v2903 = vld [vmem:[%s2892 + $0x28] sm:$0xf]
        %v2904 = vld [vmem:[%s2892 + $0x2c] sm:$0xf]
        %v2905 = vld [vmem:[%s2892 + $0x30] sm:$0xf]
        %v2906 = vld [vmem:[%s2892 + $0x34] sm:$0xf]
        %v2907 = vld [vmem:[%s2892 + $0x38] sm:$0xf]
        %v2908 = vld [vmem:[%s2892 + $0x3c] sm:$0xf]
        %v2909 = vpack.c.b16 %v1462, %v1461
        %v2927 = vunpack.c.l.b16 %v2893
        %v2928 = vunpack.c.l.b16 %v2894
        %v2929 = vunpack.c.l.b16 %v2895
        %v2930 = vunpack.c.l.b16 %v2896
        %v2931 = vunpack.c.l.b16 %v2897
        %v2932 = vunpack.c.l.b16 %v2898
        %v2933 = vunpack.c.l.b16 %v2899
        %v2934 = vunpack.c.l.b16 %v2900
        %v2935 = vunpack.c.l.b16 %v2901
        %v2936 = vunpack.c.l.b16 %v2902
        %v2937 = vunpack.c.l.b16 %v2903
        %v2938 = vunpack.c.l.b16 %v2904
        %v2939 = vunpack.c.l.b16 %v2905
        %v2940 = vunpack.c.l.b16 %v2906
        %v2941 = vunpack.c.l.b16 %v2907
        %v2942 = vunpack.c.l.b16 %v2908
        %v2943 = vpack.c.b16 %v2928, %v2927
        %v2944 = vpack.c.b16 %v2930, %v2929
        %v2945 = vpack.c.b16 %v2932, %v2931
        %v2946 = vpack.c.b16 %v2934, %v2933
        %v2947 = vpack.c.b16 %v2936, %v2935
        %v2948 = vpack.c.b16 %v2938, %v2937
        %v2949 = vpack.c.b16 %v2940, %v2939
        %v2950 = vpack.c.b16 %v2942, %v2941
        %2959 = vmatprep.subr.bf16.mxu0 0
        %2960 = vmatpush1.bf16.msra.mxu0 %v2943
        %2961 = vmatprep.subr.bf16.mxu0 0
        %2962 = vmatpush1.bf16.msra.mxu0 %v2944
        %2963 = vmatprep.subr.bf16.mxu0 0
        %2964 = vmatpush1.bf16.msra.mxu0 %v2945
        %2965 = vmatprep.subr.bf16.mxu0 0
        %2966 = vmatpush1.bf16.msra.mxu0 %v2946
        %2967 = vmatprep.subr.bf16.mxu0 0
        %2968 = vmatpush1.bf16.msra.mxu0 %v2947
        %2969 = vmatprep.subr.bf16.mxu0 0
        %2970 = vmatpush1.bf16.msra.mxu0 %v2948
        %2971 = vmatprep.subr.bf16.mxu0 0
        %2972 = vmatpush1.bf16.msra.mxu0 %v2949
        %2973 = vmatprep.subr.bf16.mxu0 0
        %2974 = vmatpush1.bf16.msra.mxu0 %v2950
        %2975 = vmatprep.subr.bf16.mxu0 0
        %2976 = vmatpush1.bf16.msra.mxu0 0
        %2977 = vmatprep.subr.bf16.mxu0 0
        %2978 = vmatpush1.bf16.msra.mxu0 0
        %2979 = vmatprep.subr.bf16.mxu0 0
        %2980 = vmatpush1.bf16.msra.mxu0 0
        %2981 = vmatprep.subr.bf16.mxu0 0
        %2982 = vmatpush1.bf16.msra.mxu0 0
        %2983 = vmatprep.subr.bf16.mxu0 0
        %2984 = vmatpush1.bf16.msra.mxu0 0
        %2985 = vmatprep.subr.bf16.mxu0 0
        %2986 = vmatpush1.bf16.msra.mxu0 0
        %2987 = vmatprep.subr.bf16.mxu0 0
        %2988 = vmatpush1.bf16.msra.mxu0 0
        %2989 = vmatprep.subr.bf16.mxu0 0
        %2990 = vmatpush1.bf16.msra.mxu0 0
        %2991 = vmatprep.mubr.bf16.mxu0 0
        %2992 = vmatmul.mubr.bf16.gmra.mrb[0].mxu0 %v2215
        %v2993 = vpop.f32.mrb[0].mxu0
        %v2994 = vadd.f32 0.0, %v2993
        %v2995 = vpop.f32.mrb[0].mxu0
        %v2996 = vpop.f32.mrb[0].mxu0
        %v2997 = vadd.f32 0.0, %v2996
        %v2998 = vpop.f32.mrb[0].mxu0
        %2999 = vmatprep.mubr.bf16.mxu0 0
        %3000 = vmatmul.mubr.bf16.gmra.mrb[0].mxu0 %v2216
        %v3001 = vpop.f32.mrb[0].mxu0
        %v3002 = vadd.f32 0.0, %v3001
        %v3003 = vpop.f32.mrb[0].mxu0
        %v3004 = vpop.f32.mrb[0].mxu0
        %v3005 = vadd.f32 0.0, %v3004
        %v3006 = vpop.f32.mrb[0].mxu0
        %3007 = vmatprep.mubr.bf16.mxu0 0
        %3008 = vmatmul.mubr.bf16.gmra.mrb[0].mxu0 %v2217
        %v3009 = vpop.f32.mrb[0].mxu0
        %v3010 = vadd.f32 0.0, %v3009
        %v3011 = vpop.f32.mrb[0].mxu0
        %v3012 = vpop.f32.mrb[0].mxu0
        %v3013 = vadd.f32 0.0, %v3012
        %v3014 = vpop.f32.mrb[0].mxu0
        %3015 = vmatprep.mubr.bf16.mxu0 0
        %3016 = vmatmul.mubr.bf16.gmra.mrb[0].mxu0 %v2218
        %v3017 = vpop.f32.mrb[0].mxu0
        %v3018 = vadd.f32 0.0, %v3017
        %v3019 = vpop.f32.mrb[0].mxu0
        %v3020 = vpop.f32.mrb[0].mxu0
        %v3021 = vadd.f32 0.0, %v3020
        %v3022 = vpop.f32.mrb[0].mxu0
        %3023 = vmatprep.mubr.bf16.mxu0 0
        %3024 = vmatmul.mubr.bf16.gmra.mrb[0].mxu0 %v2219
        %v3025 = vpop.f32.mrb[0].mxu0
        %v3026 = vadd.f32 0.0, %v3025
        %v3027 = vpop.f32.mrb[0].mxu0
        %v3028 = vpop.f32.mrb[0].mxu0
        %v3029 = vadd.f32 0.0, %v3028
        %v3030 = vpop.f32.mrb[0].mxu0
        %3031 = vmatprep.mubr.bf16.mxu0 0
        %3032 = vmatmul.mubr.bf16.gmra.mrb[0].mxu0 %v2220
        %v3033 = vpop.f32.mrb[0].mxu0
        %v3034 = vadd.f32 0.0, %v3033
        %v3035 = vpop.f32.mrb[0].mxu0
        %v3036 = vpop.f32.mrb[0].mxu0
        %v3037 = vadd.f32 0.0, %v3036
        %v3038 = vpop.f32.mrb[0].mxu0
        %3039 = vmatprep.mubr.bf16.mxu0 0
        %3040 = vmatmul.mubr.bf16.gmra.mrb[0].mxu0 %v2221
        %v3041 = vpop.f32.mrb[0].mxu0
        %v3042 = vadd.f32 0.0, %v3041
        %v3043 = vpop.f32.mrb[0].mxu0
        %v3044 = vpop.f32.mrb[0].mxu0
        %v3045 = vadd.f32 0.0, %v3044
        %v3046 = vpop.f32.mrb[0].mxu0
        %3047 = vmatprep.mubr.bf16.mxu0 0
        %3048 = vmatmul.mubr.bf16.gmra.mrb[0].mxu0 %v2222
        %v3049 = vpop.f32.mrb[0].mxu0
        %v3050 = vadd.f32 0.0, %v3049
        %v3051 = vpop.f32.mrb[0].mxu0
        %v3052 = vpop.f32.mrb[0].mxu0
        %v3053 = vadd.f32 0.0, %v3052
        %v3054 = vpop.f32.mrb[0].mxu0
        %3055 = vmatprep.mubr.bf16.mxu0 0
        %3056 = vmatmul.mubr.bf16.gmra.mrb[0].mxu0 %v2223
        %v3057 = vpop.f32.mrb[0].mxu0
        %v3058 = vadd.f32 0.0, %v3057
        %v3059 = vpop.f32.mrb[0].mxu0
        %v3060 = vpop.f32.mrb[0].mxu0
        %v3061 = vadd.f32 0.0, %v3060
        %v3062 = vpop.f32.mrb[0].mxu0
        %3063 = vmatprep.mubr.bf16.mxu0 0
        %3064 = vmatmul.mubr.bf16.gmra.mrb[0].mxu0 %v2224
        %v3065 = vpop.f32.mrb[0].mxu0
        %v3066 = vadd.f32 0.0, %v3065
        %v3067 = vpop.f32.mrb[0].mxu0
        %v3068 = vpop.f32.mrb[0].mxu0
        %v3069 = vadd.f32 0.0, %v3068
        %v3070 = vpop.f32.mrb[0].mxu0
        %3071 = vmatprep.mubr.bf16.mxu0 0
        %3072 = vmatmul.mubr.bf16.gmra.mrb[0].mxu0 %v2225
        %v3073 = vpop.f32.mrb[0].mxu0
        %v3074 = vadd.f32 0.0, %v3073
        %v3075 = vpop.f32.mrb[0].mxu0
        %v3076 = vpop.f32.mrb[0].mxu0
        %v3077 = vadd.f32 0.0, %v3076
        %v3078 = vpop.f32.mrb[0].mxu0
        %3079 = vmatprep.mubr.bf16.mxu0 0
        %3080 = vmatmul.mubr.bf16.gmra.mrb[0].mxu0 %v2226
        %v3081 = vpop.f32.mrb[0].mxu0
        %v3082 = vadd.f32 0.0, %v3081
        %v3083 = vpop.f32.mrb[0].mxu0
        %v3084 = vpop.f32.mrb[0].mxu0
        %v3085 = vadd.f32 0.0, %v3084
        %v3086 = vpop.f32.mrb[0].mxu0
        %3087 = vmatprep.mubr.bf16.mxu0 0
        %3088 = vmatmul.mubr.bf16.gmra.mrb[0].mxu0 %v2227
        %v3089 = vpop.f32.mrb[0].mxu0
        %v3090 = vadd.f32 0.0, %v3089
        %v3091 = vpop.f32.mrb[0].mxu0
        %v3092 = vpop.f32.mrb[0].mxu0
        %v3093 = vadd.f32 0.0, %v3092
        %v3094 = vpop.f32.mrb[0].mxu0
        %3095 = vmatprep.mubr.bf16.mxu0 0
        %3096 = vmatmul.mubr.bf16.gmra.mrb[0].mxu0 %v2228
        %v3097 = vpop.f32.mrb[0].mxu0
        %v3098 = vadd.f32 0.0, %v3097
        %v3099 = vpop.f32.mrb[0].mxu0
        %v3100 = vpop.f32.mrb[0].mxu0
        %v3101 = vadd.f32 0.0, %v3100
        %v3102 = vpop.f32.mrb[0].mxu0
        %3103 = vmatprep.mubr.bf16.mxu0 0
        %3104 = vmatmul.mubr.bf16.gmra.mrb[0].mxu0 %v2229
        %v3105 = vpop.f32.mrb[0].mxu0
        %v3106 = vadd.f32 0.0, %v3105
        %v3107 = vpop.f32.mrb[0].mxu0
        %v3108 = vpop.f32.mrb[0].mxu0
        %v3109 = vadd.f32 0.0, %v3108
        %v3110 = vpop.f32.mrb[0].mxu0
        %3111 = vmatprep.mubr.bf16.mxu0 0
        %3112 = vmatmul.mubr.bf16.gmra.mrb[0].mxu0 %v2909
        %v3113 = vpop.f32.mrb[0].mxu0
        %v3114 = vadd.f32 0.0, %v3113
        %v3115 = vpop.f32.mrb[0].mxu0
        %v3116 = vpop.f32.mrb[0].mxu0
        %v3117 = vadd.f32 0.0, %v3116
        %v3118 = vpop.f32.mrb[0].mxu0
        %3119 = vdwg.mxu0
        %v3120 = vadd.f32 %v2860, %v2994
        %v3121 = vadd.f32 %v2861, %v2997
        %v3122 = vadd.f32 %v2862, %v3002
        %v3123 = vadd.f32 %v2863, %v3005
        %v3124 = vadd.f32 %v2864, %v3010
        %v3125 = vadd.f32 %v2865, %v3013
        %v3126 = vadd.f32 %v2866, %v3018
        %v3127 = vadd.f32 %v2867, %v3021
        %v3128 = vadd.f32 %v2868, %v3026
        %v3129 = vadd.f32 %v2869, %v3029
        %v3130 = vadd.f32 %v2870, %v3034
        %v3131 = vadd.f32 %v2871, %v3037
        %v3132 = vadd.f32 %v2872, %v3042
        %v3133 = vadd.f32 %v2873, %v3045
        %v3134 = vadd.f32 %v2874, %v3050
        %v3135 = vadd.f32 %v2875, %v3053
        %v3136 = vadd.f32 %v2876, %v3058
        %v3137 = vadd.f32 %v2877, %v3061
        %v3138 = vadd.f32 %v2878, %v3066
        %v3139 = vadd.f32 %v2879, %v3069
        %v3140 = vadd.f32 %v2880, %v3074
        %v3141 = vadd.f32 %v2881, %v3077
        %v3142 = vadd.f32 %v2882, %v3082
        %v3143 = vadd.f32 %v2883, %v3085
        %v3144 = vadd.f32 %v2884, %v3090
        %v3145 = vadd.f32 %v2885, %v3093
        %v3146 = vadd.f32 %v2886, %v3098
        %v3147 = vadd.f32 %v2887, %v3101
        %v3148 = vadd.f32 %v2888, %v3106
        %v3149 = vadd.f32 %v2889, %v3109
        %v3150 = vadd.f32 %v2890, %v3114
        %v3151 = vadd.f32 %v2891, %v3117
        %v3153 = vshrl.u32 %v1515, 16
        %v3155 = vrot.slane %v3153, 4
        %v3156 = vshll.u32 %v1515, 16
        %v3158 = vrot.slane %v3156, 5
        %v3159 = vor.u32 %v3155, %v3158
        %v3160 = vrot.slane %v3159, 4
        %v3162 = vshll.u32 %v1516, 16
        %v3164 = vrot.slane %v3162, 5
        %v3165 = vsel %vm1539, %v3160, %v3164
        %v3166 = vshrl.u32 %v1516, 16
        %v3168 = vrot.slane %v3166, 4
        %v3169 = vor.u32 %v3168, %v3164
        %v3170 = vrot.slane %v3169, 4
        %v3172 = vshll.u32 %v1517, 16
        %v3174 = vrot.slane %v3172, 5
        %v3175 = vsel %vm1539, %v3170, %v3174
        %s3176 = scalar_lea.vmem [#allocation5], 256
        %v3177 = vld [vmem:[%s3176] sm:$0xf]
        %v3178 = vld [vmem:[%s3176 + $0x4] sm:$0xf]
        %v3179 = vld [vmem:[%s3176 + $0x8] sm:$0xf]
        %v3180 = vld [vmem:[%s3176 + $0xc] sm:$0xf]
        %v3181 = vld [vmem:[%s3176 + $0x10] sm:$0xf]
        %v3182 = vld [vmem:[%s3176 + $0x14] sm:$0xf]
        %v3183 = vld [vmem:[%s3176 + $0x18] sm:$0xf]
        %v3184 = vld [vmem:[%s3176 + $0x1c] sm:$0xf]
        %v3185 = vld [vmem:[%s3176 + $0x20] sm:$0xf]
        %v3186 = vld [vmem:[%s3176 + $0x24] sm:$0xf]
        %v3187 = vld [vmem:[%s3176 + $0x28] sm:$0xf]
        %v3188 = vld [vmem:[%s3176 + $0x2c] sm:$0xf]
        %v3189 = vld [vmem:[%s3176 + $0x30] sm:$0xf]
        %v3190 = vld [vmem:[%s3176 + $0x34] sm:$0xf]
        %v3191 = vld [vmem:[%s3176 + $0x38] sm:$0xf]
        %v3192 = vld [vmem:[%s3176 + $0x3c] sm:$0xf]
        %v3193 = vunpack.c.l.b16 %v3165
        %v3194 = vunpack.c.l.b16 %v3175
        %v3195 = vpack.c.b16 %v3194, %v3193
        %v3213 = vunpack.c.l.b16 %v3177
        %v3214 = vunpack.c.l.b16 %v3178
        %v3215 = vunpack.c.l.b16 %v3179
        %v3216 = vunpack.c.l.b16 %v3180
        %v3217 = vunpack.c.l.b16 %v3181
        %v3218 = vunpack.c.l.b16 %v3182
        %v3219 = vunpack.c.l.b16 %v3183
        %v3220 = vunpack.c.l.b16 %v3184
        %v3221 = vunpack.c.l.b16 %v3185
        %v3222 = vunpack.c.l.b16 %v3186
        %v3223 = vunpack.c.l.b16 %v3187
        %v3224 = vunpack.c.l.b16 %v3188
        %v3225 = vunpack.c.l.b16 %v3189
        %v3226 = vunpack.c.l.b16 %v3190
        %v3227 = vunpack.c.l.b16 %v3191
        %v3228 = vunpack.c.l.b16 %v3192
        %v3229 = vpack.c.b16 %v3214, %v3213
        %v3230 = vpack.c.b16 %v3216, %v3215
        %v3231 = vpack.c.b16 %v3218, %v3217
        %v3232 = vpack.c.b16 %v3220, %v3219
        %v3233 = vpack.c.b16 %v3222, %v3221
        %v3234 = vpack.c.b16 %v3224, %v3223
        %v3235 = vpack.c.b16 %v3226, %v3225
        %v3236 = vpack.c.b16 %v3228, %v3227
        %3245 = vmatprep.subr.bf16.mxu0 0
        %3246 = vmatpush1.bf16.msra.mxu0 %v3229
        %3247 = vmatprep.subr.bf16.mxu0 0
        %3248 = vmatpush1.bf16.msra.mxu0 %v3230
        %3249 = vmatprep.subr.bf16.mxu0 0
        %3250 = vmatpush1.bf16.msra.mxu0 %v3231
        %3251 = vmatprep.subr.bf16.mxu0 0
        %3252 = vmatpush1.bf16.msra.mxu0 %v3232
        %3253 = vmatprep.subr.bf16.mxu0 0
        %3254 = vmatpush1.bf16.msra.mxu0 %v3233
        %3255 = vmatprep.subr.bf16.mxu0 0
        %3256 = vmatpush1.bf16.msra.mxu0 %v3234
        %3257 = vmatprep.subr.bf16.mxu0 0
        %3258 = vmatpush1.bf16.msra.mxu0 %v3235
        %3259 = vmatprep.subr.bf16.mxu0 0
        %3260 = vmatpush1.bf16.msra.mxu0 %v3236
        %3261 = vmatprep.subr.bf16.mxu0 0
        %3262 = vmatpush1.bf16.msra.mxu0 0
        %3263 = vmatprep.subr.bf16.mxu0 0
        %3264 = vmatpush1.bf16.msra.mxu0 0
        %3265 = vmatprep.subr.bf16.mxu0 0
        %3266 = vmatpush1.bf16.msra.mxu0 0
        %3267 = vmatprep.subr.bf16.mxu0 0
        %3268 = vmatpush1.bf16.msra.mxu0 0
        %3269 = vmatprep.subr.bf16.mxu0 0
        %3270 = vmatpush1.bf16.msra.mxu0 0
        %3271 = vmatprep.subr.bf16.mxu0 0
        %3272 = vmatpush1.bf16.msra.mxu0 0
        %3273 = vmatprep.subr.bf16.mxu0 0
        %3274 = vmatpush1.bf16.msra.mxu0 0
        %3275 = vmatprep.subr.bf16.mxu0 0
        %3276 = vmatpush1.bf16.msra.mxu0 0
        %3277 = vmatprep.mubr.bf16.mxu0 0
        %3278 = vmatmul.mubr.bf16.gmra.mrb[0].mxu0 %v1974
        %v3279 = vpop.f32.mrb[0].mxu0
        %v3280 = vadd.f32 0.0, %v3279
        %v3281 = vpop.f32.mrb[0].mxu0
        %v3282 = vpop.f32.mrb[0].mxu0
        %v3283 = vadd.f32 0.0, %v3282
        %v3284 = vpop.f32.mrb[0].mxu0
        %3285 = vmatprep.mubr.bf16.mxu0 0
        %3286 = vmatmul.mubr.bf16.gmra.mrb[0].mxu0 %v1975
        %v3287 = vpop.f32.mrb[0].mxu0
        %v3288 = vadd.f32 0.0, %v3287
        %v3289 = vpop.f32.mrb[0].mxu0
        %v3290 = vpop.f32.mrb[0].mxu0
        %v3291 = vadd.f32 0.0, %v3290
        %v3292 = vpop.f32.mrb[0].mxu0
        %3293 = vmatprep.mubr.bf16.mxu0 0
        %3294 = vmatmul.mubr.bf16.gmra.mrb[0].mxu0 %v1976
        %v3295 = vpop.f32.mrb[0].mxu0
        %v3296 = vadd.f32 0.0, %v3295
        %v3297 = vpop.f32.mrb[0].mxu0
        %v3298 = vpop.f32.mrb[0].mxu0
        %v3299 = vadd.f32 0.0, %v3298
        %v3300 = vpop.f32.mrb[0].mxu0
        %3301 = vmatprep.mubr.bf16.mxu0 0
        %3302 = vmatmul.mubr.bf16.gmra.mrb[0].mxu0 %v1977
        %v3303 = vpop.f32.mrb[0].mxu0
        %v3304 = vadd.f32 0.0, %v3303
        %v3305 = vpop.f32.mrb[0].mxu0
        %v3306 = vpop.f32.mrb[0].mxu0
        %v3307 = vadd.f32 0.0, %v3306
        %v3308 = vpop.f32.mrb[0].mxu0
        %3309 = vmatprep.mubr.bf16.mxu0 0
        %3310 = vmatmul.mubr.bf16.gmra.mrb[0].mxu0 %v1978
        %v3311 = vpop.f32.mrb[0].mxu0
        %v3312 = vadd.f32 0.0, %v3311
        %v3313 = vpop.f32.mrb[0].mxu0
        %v3314 = vpop.f32.mrb[0].mxu0
        %v3315 = vadd.f32 0.0, %v3314
        %v3316 = vpop.f32.mrb[0].mxu0
        %3317 = vmatprep.mubr.bf16.mxu0 0
        %3318 = vmatmul.mubr.bf16.gmra.mrb[0].mxu0 %v1979
        %v3319 = vpop.f32.mrb[0].mxu0
        %v3320 = vadd.f32 0.0, %v3319
        %v3321 = vpop.f32.mrb[0].mxu0
        %v3322 = vpop.f32.mrb[0].mxu0
        %v3323 = vadd.f32 0.0, %v3322
        %v3324 = vpop.f32.mrb[0].mxu0
        %3325 = vmatprep.mubr.bf16.mxu0 0
        %3326 = vmatmul.mubr.bf16.gmra.mrb[0].mxu0 %v1980
        %v3327 = vpop.f32.mrb[0].mxu0
        %v3328 = vadd.f32 0.0, %v3327
        %v3329 = vpop.f32.mrb[0].mxu0
        %v3330 = vpop.f32.mrb[0].mxu0
        %v3331 = vadd.f32 0.0, %v3330
        %v3332 = vpop.f32.mrb[0].mxu0
        %3333 = vmatprep.mubr.bf16.mxu0 0
        %3334 = vmatmul.mubr.bf16.gmra.mrb[0].mxu0 %v1981
        %v3335 = vpop.f32.mrb[0].mxu0
        %v3336 = vadd.f32 0.0, %v3335
        %v3337 = vpop.f32.mrb[0].mxu0
        %v3338 = vpop.f32.mrb[0].mxu0
        %v3339 = vadd.f32 0.0, %v3338
        %v3340 = vpop.f32.mrb[0].mxu0
        %3341 = vmatprep.mubr.bf16.mxu0 0
        %3342 = vmatmul.mubr.bf16.gmra.mrb[0].mxu0 %v1982
        %v3343 = vpop.f32.mrb[0].mxu0
        %v3344 = vadd.f32 0.0, %v3343
        %v3345 = vpop.f32.mrb[0].mxu0
        %v3346 = vpop.f32.mrb[0].mxu0
        %v3347 = vadd.f32 0.0, %v3346
        %v3348 = vpop.f32.mrb[0].mxu0
        %3349 = vmatprep.mubr.bf16.mxu0 0
        %3350 = vmatmul.mubr.bf16.gmra.mrb[0].mxu0 %v1983
        %v3351 = vpop.f32.mrb[0].mxu0
        %v3352 = vadd.f32 0.0, %v3351
        %v3353 = vpop.f32.mrb[0].mxu0
        %v3354 = vpop.f32.mrb[0].mxu0
        %v3355 = vadd.f32 0.0, %v3354
        %v3356 = vpop.f32.mrb[0].mxu0
        %3357 = vmatprep.mubr.bf16.mxu0 0
        %3358 = vmatmul.mubr.bf16.gmra.mrb[0].mxu0 %v1984
        %v3359 = vpop.f32.mrb[0].mxu0
        %v3360 = vadd.f32 0.0, %v3359
        %v3361 = vpop.f32.mrb[0].mxu0
        %v3362 = vpop.f32.mrb[0].mxu0
        %v3363 = vadd.f32 0.0, %v3362
        %v3364 = vpop.f32.mrb[0].mxu0
        %3365 = vmatprep.mubr.bf16.mxu0 0
        %3366 = vmatmul.mubr.bf16.gmra.mrb[0].mxu0 %v1985
        %v3367 = vpop.f32.mrb[0].mxu0
        %v3368 = vadd.f32 0.0, %v3367
        %v3369 = vpop.f32.mrb[0].mxu0
        %v3370 = vpop.f32.mrb[0].mxu0
        %v3371 = vadd.f32 0.0, %v3370
        %v3372 = vpop.f32.mrb[0].mxu0
        %3373 = vmatprep.mubr.bf16.mxu0 0
        %3374 = vmatmul.mubr.bf16.gmra.mrb[0].mxu0 %v1986
        %v3375 = vpop.f32.mrb[0].mxu0
        %v3376 = vadd.f32 0.0, %v3375
        %v3377 = vpop.f32.mrb[0].mxu0
        %v3378 = vpop.f32.mrb[0].mxu0
        %v3379 = vadd.f32 0.0, %v3378
        %v3380 = vpop.f32.mrb[0].mxu0
        %3381 = vmatprep.mubr.bf16.mxu0 0
        %3382 = vmatmul.mubr.bf16.gmra.mrb[0].mxu0 %v1987
        %v3383 = vpop.f32.mrb[0].mxu0
        %v3384 = vadd.f32 0.0, %v3383
        %v3385 = vpop.f32.mrb[0].mxu0
        %v3386 = vpop.f32.mrb[0].mxu0
        %v3387 = vadd.f32 0.0, %v3386
        %v3388 = vpop.f32.mrb[0].mxu0
        %3389 = vmatprep.mubr.bf16.mxu0 0
        %3390 = vmatmul.mubr.bf16.gmra.mrb[0].mxu0 %v1988
        %v3391 = vpop.f32.mrb[0].mxu0
        %v3392 = vadd.f32 0.0, %v3391
        %v3393 = vpop.f32.mrb[0].mxu0
        %v3394 = vpop.f32.mrb[0].mxu0
        %v3395 = vadd.f32 0.0, %v3394
        %v3396 = vpop.f32.mrb[0].mxu0
        %3397 = vmatprep.mubr.bf16.mxu0 0
        %3398 = vmatmul.mubr.bf16.gmra.mrb[0].mxu0 %v3195
        %v3399 = vpop.f32.mrb[0].mxu0
        %v3400 = vadd.f32 0.0, %v3399
        %v3401 = vpop.f32.mrb[0].mxu0
        %v3402 = vpop.f32.mrb[0].mxu0
        %v3403 = vadd.f32 0.0, %v3402
        %v3404 = vpop.f32.mrb[0].mxu0
        %3405 = vdwg.mxu0
        %v3406 = vadd.f32 %v3120, %v3280
        %v3407 = vadd.f32 %v3121, %v3283
        %v3408 = vadd.f32 %v3122, %v3288
        %v3409 = vadd.f32 %v3123, %v3291
        %v3410 = vadd.f32 %v3124, %v3296
        %v3411 = vadd.f32 %v3125, %v3299
        %v3412 = vadd.f32 %v3126, %v3304
        %v3413 = vadd.f32 %v3127, %v3307
        %v3414 = vadd.f32 %v3128, %v3312
        %v3415 = vadd.f32 %v3129, %v3315
        %v3416 = vadd.f32 %v3130, %v3320
        %v3417 = vadd.f32 %v3131, %v3323
        %v3418 = vadd.f32 %v3132, %v3328
        %v3419 = vadd.f32 %v3133, %v3331
        %v3420 = vadd.f32 %v3134, %v3336
        %v3421 = vadd.f32 %v3135, %v3339
        %v3422 = vadd.f32 %v3136, %v3344
        %v3423 = vadd.f32 %v3137, %v3347
        %v3424 = vadd.f32 %v3138, %v3352
        %v3425 = vadd.f32 %v3139, %v3355
        %v3426 = vadd.f32 %v3140, %v3360
        %v3427 = vadd.f32 %v3141, %v3363
        %v3428 = vadd.f32 %v3142, %v3368
        %v3429 = vadd.f32 %v3143, %v3371
        %v3430 = vadd.f32 %v3144, %v3376
        %v3431 = vadd.f32 %v3145, %v3379
        %v3432 = vadd.f32 %v3146, %v3384
        %v3433 = vadd.f32 %v3147, %v3387
        %v3434 = vadd.f32 %v3148, %v3392
        %v3435 = vadd.f32 %v3149, %v3395
        %v3436 = vadd.f32 %v3150, %v3400
        %v3437 = vadd.f32 %v3151, %v3403
        %v3438 = vrot.slane %v1515, 5
        %v3439 = vrot.slane %v3438, 4
        %v3440 = vrot.slane %v1516, 5
        %v3441 = vsel %vm2457, %v3439, %v3440
        %v3442 = vrot.slane %v3440, 4
        %v3443 = vrot.slane %v1517, 5
        %v3444 = vsel %vm2457, %v3442, %v3443
        %s3445 = scalar_lea.vmem [#allocation5], 320
        %v3446 = vld [vmem:[%s3445] sm:$0xf]
        %v3447 = vld [vmem:[%s3445 + $0x4] sm:$0xf]
        %v3448 = vld [vmem:[%s3445 + $0x8] sm:$0xf]
        %v3449 = vld [vmem:[%s3445 + $0xc] sm:$0xf]
        %v3450 = vld [vmem:[%s3445 + $0x10] sm:$0xf]
        %v3451 = vld [vmem:[%s3445 + $0x14] sm:$0xf]
        %v3452 = vld [vmem:[%s3445 + $0x18] sm:$0xf]
        %v3453 = vld [vmem:[%s3445 + $0x1c] sm:$0xf]
        %v3454 = vld [vmem:[%s3445 + $0x20] sm:$0xf]
        %v3455 = vld [vmem:[%s3445 + $0x24] sm:$0xf]
        %v3456 = vld [vmem:[%s3445 + $0x28] sm:$0xf]
        %v3457 = vld [vmem:[%s3445 + $0x2c] sm:$0xf]
        %v3458 = vld [vmem:[%s3445 + $0x30] sm:$0xf]
        %v3459 = vld [vmem:[%s3445 + $0x34] sm:$0xf]
        %v3460 = vld [vmem:[%s3445 + $0x38] sm:$0xf]
        %v3461 = vld [vmem:[%s3445 + $0x3c] sm:$0xf]
        %v3462 = vunpack.c.l.b16 %v3441
        %v3463 = vunpack.c.l.b16 %v3444
        %v3464 = vpack.c.b16 %v3463, %v3462
        %v3482 = vunpack.c.l.b16 %v3446
        %v3483 = vunpack.c.l.b16 %v3447
        %v3484 = vunpack.c.l.b16 %v3448
        %v3485 = vunpack.c.l.b16 %v3449
        %v3486 = vunpack.c.l.b16 %v3450
        %v3487 = vunpack.c.l.b16 %v3451
        %v3488 = vunpack.c.l.b16 %v3452
        %v3489 = vunpack.c.l.b16 %v3453
        %v3490 = vunpack.c.l.b16 %v3454
        %v3491 = vunpack.c.l.b16 %v3455
        %v3492 = vunpack.c.l.b16 %v3456
        %v3493 = vunpack.c.l.b16 %v3457
        %v3494 = vunpack.c.l.b16 %v3458
        %v3495 = vunpack.c.l.b16 %v3459
        %v3496 = vunpack.c.l.b16 %v3460
        %v3497 = vunpack.c.l.b16 %v3461
        %v3498 = vpack.c.b16 %v3483, %v3482
        %v3499 = vpack.c.b16 %v3485, %v3484
        %v3500 = vpack.c.b16 %v3487, %v3486
        %v3501 = vpack.c.b16 %v3489, %v3488
        %v3502 = vpack.c.b16 %v3491, %v3490
        %v3503 = vpack.c.b16 %v3493, %v3492
        %v3504 = vpack.c.b16 %v3495, %v3494
        %v3505 = vpack.c.b16 %v3497, %v3496
        %3514 = vmatprep.subr.bf16.mxu0 0
        %3515 = vmatpush1.bf16.msra.mxu0 %v3498
        %3516 = vmatprep.subr.bf16.mxu0 0
        %3517 = vmatpush1.bf16.msra.mxu0 %v3499
        %3518 = vmatprep.subr.bf16.mxu0 0
        %3519 = vmatpush1.bf16.msra.mxu0 %v3500
        %3520 = vmatprep.subr.bf16.mxu0 0
        %3521 = vmatpush1.bf16.msra.mxu0 %v3501
        %3522 = vmatprep.subr.bf16.mxu0 0
        %3523 = vmatpush1.bf16.msra.mxu0 %v3502
        %3524 = vmatprep.subr.bf16.mxu0 0
        %3525 = vmatpush1.bf16.msra.mxu0 %v3503
        %3526 = vmatprep.subr.bf16.mxu0 0
        %3527 = vmatpush1.bf16.msra.mxu0 %v3504
        %3528 = vmatprep.subr.bf16.mxu0 0
        %3529 = vmatpush1.bf16.msra.mxu0 %v3505
        %3530 = vmatprep.subr.bf16.mxu0 0
        %3531 = vmatpush1.bf16.msra.mxu0 0
        %3532 = vmatprep.subr.bf16.mxu0 0
        %3533 = vmatpush1.bf16.msra.mxu0 0
        %3534 = vmatprep.subr.bf16.mxu0 0
        %3535 = vmatpush1.bf16.msra.mxu0 0
        %3536 = vmatprep.subr.bf16.mxu0 0
        %3537 = vmatpush1.bf16.msra.mxu0 0
        %3538 = vmatprep.subr.bf16.mxu0 0
        %3539 = vmatpush1.bf16.msra.mxu0 0
        %3540 = vmatprep.subr.bf16.mxu0 0
        %3541 = vmatpush1.bf16.msra.mxu0 0
        %3542 = vmatprep.subr.bf16.mxu0 0
        %3543 = vmatpush1.bf16.msra.mxu0 0
        %3544 = vmatprep.subr.bf16.mxu0 0
        %3545 = vmatpush1.bf16.msra.mxu0 0
        %3546 = vmatprep.mubr.bf16.mxu0 0
        %3547 = vmatmul.mubr.bf16.gmra.mrb[0].mxu0 %v2620
        %v3548 = vpop.f32.mrb[0].mxu0
        %v3549 = vadd.f32 0.0, %v3548
        %v3550 = vpop.f32.mrb[0].mxu0
        %v3551 = vpop.f32.mrb[0].mxu0
        %v3552 = vadd.f32 0.0, %v3551
        %v3553 = vpop.f32.mrb[0].mxu0
        %3554 = vmatprep.mubr.bf16.mxu0 0
        %3555 = vmatmul.mubr.bf16.gmra.mrb[0].mxu0 %v2621
        %v3556 = vpop.f32.mrb[0].mxu0
        %v3557 = vadd.f32 0.0, %v3556
        %v3558 = vpop.f32.mrb[0].mxu0
        %v3559 = vpop.f32.mrb[0].mxu0
        %v3560 = vadd.f32 0.0, %v3559
        %v3561 = vpop.f32.mrb[0].mxu0
        %3562 = vmatprep.mubr.bf16.mxu0 0
        %3563 = vmatmul.mubr.bf16.gmra.mrb[0].mxu0 %v2622
        %v3564 = vpop.f32.mrb[0].mxu0
        %v3565 = vadd.f32 0.0, %v3564
        %v3566 = vpop.f32.mrb[0].mxu0
        %v3567 = vpop.f32.mrb[0].mxu0
        %v3568 = vadd.f32 0.0, %v3567
        %v3569 = vpop.f32.mrb[0].mxu0
        %3570 = vmatprep.mubr.bf16.mxu0 0
        %3571 = vmatmul.mubr.bf16.gmra.mrb[0].mxu0 %v2623
        %v3572 = vpop.f32.mrb[0].mxu0
        %v3573 = vadd.f32 0.0, %v3572
        %v3574 = vpop.f32.mrb[0].mxu0
        %v3575 = vpop.f32.mrb[0].mxu0
        %v3576 = vadd.f32 0.0, %v3575
        %v3577 = vpop.f32.mrb[0].mxu0
        %3578 = vmatprep.mubr.bf16.mxu0 0
        %3579 = vmatmul.mubr.bf16.gmra.mrb[0].mxu0 %v2624
        %v3580 = vpop.f32.mrb[0].mxu0
        %v3581 = vadd.f32 0.0, %v3580
        %v3582 = vpop.f32.mrb[0].mxu0
        %v3583 = vpop.f32.mrb[0].mxu0
        %v3584 = vadd.f32 0.0, %v3583
        %v3585 = vpop.f32.mrb[0].mxu0
        %3586 = vmatprep.mubr.bf16.mxu0 0
        %3587 = vmatmul.mubr.bf16.gmra.mrb[0].mxu0 %v2625
        %v3588 = vpop.f32.mrb[0].mxu0
        %v3589 = vadd.f32 0.0, %v3588
        %v3590 = vpop.f32.mrb[0].mxu0
        %v3591 = vpop.f32.mrb[0].mxu0
        %v3592 = vadd.f32 0.0, %v3591
        %v3593 = vpop.f32.mrb[0].mxu0
        %3594 = vmatprep.mubr.bf16.mxu0 0
        %3595 = vmatmul.mubr.bf16.gmra.mrb[0].mxu0 %v2626
        %v3596 = vpop.f32.mrb[0].mxu0
        %v3597 = vadd.f32 0.0, %v3596
        %v3598 = vpop.f32.mrb[0].mxu0
        %v3599 = vpop.f32.mrb[0].mxu0
        %v3600 = vadd.f32 0.0, %v3599
        %v3601 = vpop.f32.mrb[0].mxu0
        %3602 = vmatprep.mubr.bf16.mxu0 0
        %3603 = vmatmul.mubr.bf16.gmra.mrb[0].mxu0 %v2627
        %v3604 = vpop.f32.mrb[0].mxu0
        %v3605 = vadd.f32 0.0, %v3604
        %v3606 = vpop.f32.mrb[0].mxu0
        %v3607 = vpop.f32.mrb[0].mxu0
        %v3608 = vadd.f32 0.0, %v3607
        %v3609 = vpop.f32.mrb[0].mxu0
        %3610 = vmatprep.mubr.bf16.mxu0 0
        %3611 = vmatmul.mubr.bf16.gmra.mrb[0].mxu0 %v2628
        %v3612 = vpop.f32.mrb[0].mxu0
        %v3613 = vadd.f32 0.0, %v3612
        %v3614 = vpop.f32.mrb[0].mxu0
        %v3615 = vpop.f32.mrb[0].mxu0
        %v3616 = vadd.f32 0.0, %v3615
        %v3617 = vpop.f32.mrb[0].mxu0
        %3618 = vmatprep.mubr.bf16.mxu0 0
        %3619 = vmatmul.mubr.bf16.gmra.mrb[0].mxu0 %v2629
        %v3620 = vpop.f32.mrb[0].mxu0
        %v3621 = vadd.f32 0.0, %v3620
        %v3622 = vpop.f32.mrb[0].mxu0
        %v3623 = vpop.f32.mrb[0].mxu0
        %v3624 = vadd.f32 0.0, %v3623
        %v3625 = vpop.f32.mrb[0].mxu0
        %3626 = vmatprep.mubr.bf16.mxu0 0
        %3627 = vmatmul.mubr.bf16.gmra.mrb[0].mxu0 %v2630
        %v3628 = vpop.f32.mrb[0].mxu0
        %v3629 = vadd.f32 0.0, %v3628
        %v3630 = vpop.f32.mrb[0].mxu0
        %v3631 = vpop.f32.mrb[0].mxu0
        %v3632 = vadd.f32 0.0, %v3631
        %v3633 = vpop.f32.mrb[0].mxu0
        %3634 = vmatprep.mubr.bf16.mxu0 0
        %3635 = vmatmul.mubr.bf16.gmra.mrb[0].mxu0 %v2631
        %v3636 = vpop.f32.mrb[0].mxu0
        %v3637 = vadd.f32 0.0, %v3636
        %v3638 = vpop.f32.mrb[0].mxu0
        %v3639 = vpop.f32.mrb[0].mxu0
        %v3640 = vadd.f32 0.0, %v3639
        %v3641 = vpop.f32.mrb[0].mxu0
        %3642 = vmatprep.mubr.bf16.mxu0 0
        %3643 = vmatmul.mubr.bf16.gmra.mrb[0].mxu0 %v2632
        %v3644 = vpop.f32.mrb[0].mxu0
        %v3645 = vadd.f32 0.0, %v3644
        %v3646 = vpop.f32.mrb[0].mxu0
        %v3647 = vpop.f32.mrb[0].mxu0
        %v3648 = vadd.f32 0.0, %v3647
        %v3649 = vpop.f32.mrb[0].mxu0
        %3650 = vmatprep.mubr.bf16.mxu0 0
        %3651 = vmatmul.mubr.bf16.gmra.mrb[0].mxu0 %v2633
        %v3652 = vpop.f32.mrb[0].mxu0
        %v3653 = vadd.f32 0.0, %v3652
        %v3654 = vpop.f32.mrb[0].mxu0
        %v3655 = vpop.f32.mrb[0].mxu0
        %v3656 = vadd.f32 0.0, %v3655
        %v3657 = vpop.f32.mrb[0].mxu0
        %3658 = vmatprep.mubr.bf16.mxu0 0
        %3659 = vmatmul.mubr.bf16.gmra.mrb[0].mxu0 %v2634
        %v3660 = vpop.f32.mrb[0].mxu0
        %v3661 = vadd.f32 0.0, %v3660
        %v3662 = vpop.f32.mrb[0].mxu0
        %v3663 = vpop.f32.mrb[0].mxu0
        %v3664 = vadd.f32 0.0, %v3663
        %v3665 = vpop.f32.mrb[0].mxu0
        %3666 = vmatprep.mubr.bf16.mxu0 0
        %3667 = vmatmul.mubr.bf16.gmra.mrb[0].mxu0 %v3464
        %v3668 = vpop.f32.mrb[0].mxu0
        %v3669 = vadd.f32 0.0, %v3668
        %v3670 = vpop.f32.mrb[0].mxu0
        %v3671 = vpop.f32.mrb[0].mxu0
        %v3672 = vadd.f32 0.0, %v3671
        %v3673 = vpop.f32.mrb[0].mxu0
        %3674 = vdwg.mxu0
        %v3675 = vadd.f32 %v3406, %v3549
        %v3676 = vadd.f32 %v3407, %v3552
        %v3677 = vadd.f32 %v3408, %v3557
        %v3678 = vadd.f32 %v3409, %v3560
        %v3679 = vadd.f32 %v3410, %v3565
        %v3680 = vadd.f32 %v3411, %v3568
        %v3681 = vadd.f32 %v3412, %v3573
        %v3682 = vadd.f32 %v3413, %v3576
        %v3683 = vadd.f32 %v3414, %v3581
        %v3684 = vadd.f32 %v3415, %v3584
        %v3685 = vadd.f32 %v3416, %v3589
        %v3686 = vadd.f32 %v3417, %v3592
        %v3687 = vadd.f32 %v3418, %v3597
        %v3688 = vadd.f32 %v3419, %v3600
        %v3689 = vadd.f32 %v3420, %v3605
        %v3690 = vadd.f32 %v3421, %v3608
        %v3691 = vadd.f32 %v3422, %v3613
        %v3692 = vadd.f32 %v3423, %v3616
        %v3693 = vadd.f32 %v3424, %v3621
        %v3694 = vadd.f32 %v3425, %v3624
        %v3695 = vadd.f32 %v3426, %v3629
        %v3696 = vadd.f32 %v3427, %v3632
        %v3697 = vadd.f32 %v3428, %v3637
        %v3698 = vadd.f32 %v3429, %v3640
        %v3699 = vadd.f32 %v3430, %v3645
        %v3700 = vadd.f32 %v3431, %v3648
        %v3701 = vadd.f32 %v3432, %v3653
        %v3702 = vadd.f32 %v3433, %v3656
        %v3703 = vadd.f32 %v3434, %v3661
        %v3704 = vadd.f32 %v3435, %v3664
        %v3705 = vadd.f32 %v3436, %v3669
        %v3706 = vadd.f32 %v3437, %v3672
        %s3707 = scalar_lea.vmem [#allocation5], 384
        %v3708 = vld [vmem:[%s3707] sm:$0xf]
        %v3709 = vld [vmem:[%s3707 + $0x4] sm:$0xf]
        %v3710 = vld [vmem:[%s3707 + $0x8] sm:$0xf]
        %v3711 = vld [vmem:[%s3707 + $0xc] sm:$0xf]
        %v3712 = vld [vmem:[%s3707 + $0x10] sm:$0xf]
        %v3713 = vld [vmem:[%s3707 + $0x14] sm:$0xf]
        %v3714 = vld [vmem:[%s3707 + $0x18] sm:$0xf]
        %v3715 = vld [vmem:[%s3707 + $0x1c] sm:$0xf]
        %v3716 = vld [vmem:[%s3707 + $0x20] sm:$0xf]
        %v3717 = vld [vmem:[%s3707 + $0x24] sm:$0xf]
        %v3718 = vld [vmem:[%s3707 + $0x28] sm:$0xf]
        %v3719 = vld [vmem:[%s3707 + $0x2c] sm:$0xf]
        %v3720 = vld [vmem:[%s3707 + $0x30] sm:$0xf]
        %v3721 = vld [vmem:[%s3707 + $0x34] sm:$0xf]
        %v3722 = vld [vmem:[%s3707 + $0x38] sm:$0xf]
        %v3723 = vld [vmem:[%s3707 + $0x3c] sm:$0xf]
        %v3724 = vpack.c.b16 %v1465, %v1464
        %v3742 = vunpack.c.l.b16 %v3708
        %v3743 = vunpack.c.l.b16 %v3709
        %v3744 = vunpack.c.l.b16 %v3710
        %v3745 = vunpack.c.l.b16 %v3711
        %v3746 = vunpack.c.l.b16 %v3712
        %v3747 = vunpack.c.l.b16 %v3713
        %v3748 = vunpack.c.l.b16 %v3714
        %v3749 = vunpack.c.l.b16 %v3715
        %v3750 = vunpack.c.l.b16 %v3716
        %v3751 = vunpack.c.l.b16 %v3717
        %v3752 = vunpack.c.l.b16 %v3718
        %v3753 = vunpack.c.l.b16 %v3719
        %v3754 = vunpack.c.l.b16 %v3720
        %v3755 = vunpack.c.l.b16 %v3721
        %v3756 = vunpack.c.l.b16 %v3722
        %v3757 = vunpack.c.l.b16 %v3723
        %v3758 = vpack.c.b16 %v3743, %v3742
        %v3759 = vpack.c.b16 %v3745, %v3744
        %v3760 = vpack.c.b16 %v3747, %v3746
        %v3761 = vpack.c.b16 %v3749, %v3748
        %v3762 = vpack.c.b16 %v3751, %v3750
        %v3763 = vpack.c.b16 %v3753, %v3752
        %v3764 = vpack.c.b16 %v3755, %v3754
        %v3765 = vpack.c.b16 %v3757, %v3756
        %3774 = vmatprep.subr.bf16.mxu0 0
        %3775 = vmatpush1.bf16.msra.mxu0 %v3758
        %3776 = vmatprep.subr.bf16.mxu0 0
        %3777 = vmatpush1.bf16.msra.mxu0 %v3759
        %3778 = vmatprep.subr.bf16.mxu0 0
        %3779 = vmatpush1.bf16.msra.mxu0 %v3760
        %3780 = vmatprep.subr.bf16.mxu0 0
        %3781 = vmatpush1.bf16.msra.mxu0 %v3761
        %3782 = vmatprep.subr.bf16.mxu0 0
        %3783 = vmatpush1.bf16.msra.mxu0 %v3762
        %3784 = vmatprep.subr.bf16.mxu0 0
        %3785 = vmatpush1.bf16.msra.mxu0 %v3763
        %3786 = vmatprep.subr.bf16.mxu0 0
        %3787 = vmatpush1.bf16.msra.mxu0 %v3764
        %3788 = vmatprep.subr.bf16.mxu0 0
        %3789 = vmatpush1.bf16.msra.mxu0 %v3765
        %3790 = vmatprep.subr.bf16.mxu0 0
        %3791 = vmatpush1.bf16.msra.mxu0 0
        %3792 = vmatprep.subr.bf16.mxu0 0
        %3793 = vmatpush1.bf16.msra.mxu0 0
        %3794 = vmatprep.subr.bf16.mxu0 0
        %3795 = vmatpush1.bf16.msra.mxu0 0
        %3796 = vmatprep.subr.bf16.mxu0 0
        %3797 = vmatpush1.bf16.msra.mxu0 0
        %3798 = vmatprep.subr.bf16.mxu0 0
        %3799 = vmatpush1.bf16.msra.mxu0 0
        %3800 = vmatprep.subr.bf16.mxu0 0
        %3801 = vmatpush1.bf16.msra.mxu0 0
        %3802 = vmatprep.subr.bf16.mxu0 0
        %3803 = vmatpush1.bf16.msra.mxu0 0
        %3804 = vmatprep.subr.bf16.mxu0 0
        %3805 = vmatpush1.bf16.msra.mxu0 0
        %3806 = vmatprep.mubr.bf16.mxu0 0
        %3807 = vmatmul.mubr.bf16.gmra.mrb[0].mxu0 %v2216
        %v3808 = vpop.f32.mrb[0].mxu0
        %v3809 = vadd.f32 0.0, %v3808
        %v3810 = vpop.f32.mrb[0].mxu0
        %v3811 = vpop.f32.mrb[0].mxu0
        %v3812 = vadd.f32 0.0, %v3811
        %v3813 = vpop.f32.mrb[0].mxu0
        %3814 = vmatprep.mubr.bf16.mxu0 0
        %3815 = vmatmul.mubr.bf16.gmra.mrb[0].mxu0 %v2217
        %v3816 = vpop.f32.mrb[0].mxu0
        %v3817 = vadd.f32 0.0, %v3816
        %v3818 = vpop.f32.mrb[0].mxu0
        %v3819 = vpop.f32.mrb[0].mxu0
        %v3820 = vadd.f32 0.0, %v3819
        %v3821 = vpop.f32.mrb[0].mxu0
        %3822 = vmatprep.mubr.bf16.mxu0 0
        %3823 = vmatmul.mubr.bf16.gmra.mrb[0].mxu0 %v2218
        %v3824 = vpop.f32.mrb[0].mxu0
        %v3825 = vadd.f32 0.0, %v3824
        %v3826 = vpop.f32.mrb[0].mxu0
        %v3827 = vpop.f32.mrb[0].mxu0
        %v3828 = vadd.f32 0.0, %v3827
        %v3829 = vpop.f32.mrb[0].mxu0
        %3830 = vmatprep.mubr.bf16.mxu0 0
        %3831 = vmatmul.mubr.bf16.gmra.mrb[0].mxu0 %v2219
        %v3832 = vpop.f32.mrb[0].mxu0
        %v3833 = vadd.f32 0.0, %v3832
        %v3834 = vpop.f32.mrb[0].mxu0
        %v3835 = vpop.f32.mrb[0].mxu0
        %v3836 = vadd.f32 0.0, %v3835
        %v3837 = vpop.f32.mrb[0].mxu0
        %3838 = vmatprep.mubr.bf16.mxu0 0
        %3839 = vmatmul.mubr.bf16.gmra.mrb[0].mxu0 %v2220
        %v3840 = vpop.f32.mrb[0].mxu0
        %v3841 = vadd.f32 0.0, %v3840
        %v3842 = vpop.f32.mrb[0].mxu0
        %v3843 = vpop.f32.mrb[0].mxu0
        %v3844 = vadd.f32 0.0, %v3843
        %v3845 = vpop.f32.mrb[0].mxu0
        %3846 = vmatprep.mubr.bf16.mxu0 0
        %3847 = vmatmul.mubr.bf16.gmra.mrb[0].mxu0 %v2221
        %v3848 = vpop.f32.mrb[0].mxu0
        %v3849 = vadd.f32 0.0, %v3848
        %v3850 = vpop.f32.mrb[0].mxu0
        %v3851 = vpop.f32.mrb[0].mxu0
        %v3852 = vadd.f32 0.0, %v3851
        %v3853 = vpop.f32.mrb[0].mxu0
        %3854 = vmatprep.mubr.bf16.mxu0 0
        %3855 = vmatmul.mubr.bf16.gmra.mrb[0].mxu0 %v2222
        %v3856 = vpop.f32.mrb[0].mxu0
        %v3857 = vadd.f32 0.0, %v3856
        %v3858 = vpop.f32.mrb[0].mxu0
        %v3859 = vpop.f32.mrb[0].mxu0
        %v3860 = vadd.f32 0.0, %v3859
        %v3861 = vpop.f32.mrb[0].mxu0
        %3862 = vmatprep.mubr.bf16.mxu0 0
        %3863 = vmatmul.mubr.bf16.gmra.mrb[0].mxu0 %v2223
        %v3864 = vpop.f32.mrb[0].mxu0
        %v3865 = vadd.f32 0.0, %v3864
        %v3866 = vpop.f32.mrb[0].mxu0
        %v3867 = vpop.f32.mrb[0].mxu0
        %v3868 = vadd.f32 0.0, %v3867
        %v3869 = vpop.f32.mrb[0].mxu0
        %3870 = vmatprep.mubr.bf16.mxu0 0
        %3871 = vmatmul.mubr.bf16.gmra.mrb[0].mxu0 %v2224
        %v3872 = vpop.f32.mrb[0].mxu0
        %v3873 = vadd.f32 0.0, %v3872
        %v3874 = vpop.f32.mrb[0].mxu0
        %v3875 = vpop.f32.mrb[0].mxu0
        %v3876 = vadd.f32 0.0, %v3875
        %v3877 = vpop.f32.mrb[0].mxu0
        %3878 = vmatprep.mubr.bf16.mxu0 0
        %3879 = vmatmul.mubr.bf16.gmra.mrb[0].mxu0 %v2225
        %v3880 = vpop.f32.mrb[0].mxu0
        %v3881 = vadd.f32 0.0, %v3880
        %v3882 = vpop.f32.mrb[0].mxu0
        %v3883 = vpop.f32.mrb[0].mxu0
        %v3884 = vadd.f32 0.0, %v3883
        %v3885 = vpop.f32.mrb[0].mxu0
        %3886 = vmatprep.mubr.bf16.mxu0 0
        %3887 = vmatmul.mubr.bf16.gmra.mrb[0].mxu0 %v2226
        %v3888 = vpop.f32.mrb[0].mxu0
        %v3889 = vadd.f32 0.0, %v3888
        %v3890 = vpop.f32.mrb[0].mxu0
        %v3891 = vpop.f32.mrb[0].mxu0
        %v3892 = vadd.f32 0.0, %v3891
        %v3893 = vpop.f32.mrb[0].mxu0
        %3894 = vmatprep.mubr.bf16.mxu0 0
        %3895 = vmatmul.mubr.bf16.gmra.mrb[0].mxu0 %v2227
        %v3896 = vpop.f32.mrb[0].mxu0
        %v3897 = vadd.f32 0.0, %v3896
        %v3898 = vpop.f32.mrb[0].mxu0
        %v3899 = vpop.f32.mrb[0].mxu0
        %v3900 = vadd.f32 0.0, %v3899
        %v3901 = vpop.f32.mrb[0].mxu0
        %3902 = vmatprep.mubr.bf16.mxu0 0
        %3903 = vmatmul.mubr.bf16.gmra.mrb[0].mxu0 %v2228
        %v3904 = vpop.f32.mrb[0].mxu0
        %v3905 = vadd.f32 0.0, %v3904
        %v3906 = vpop.f32.mrb[0].mxu0
        %v3907 = vpop.f32.mrb[0].mxu0
        %v3908 = vadd.f32 0.0, %v3907
        %v3909 = vpop.f32.mrb[0].mxu0
        %3910 = vmatprep.mubr.bf16.mxu0 0
        %3911 = vmatmul.mubr.bf16.gmra.mrb[0].mxu0 %v2229
        %v3912 = vpop.f32.mrb[0].mxu0
        %v3913 = vadd.f32 0.0, %v3912
        %v3914 = vpop.f32.mrb[0].mxu0
        %v3915 = vpop.f32.mrb[0].mxu0
        %v3916 = vadd.f32 0.0, %v3915
        %v3917 = vpop.f32.mrb[0].mxu0
        %3918 = vmatprep.mubr.bf16.mxu0 0
        %3919 = vmatmul.mubr.bf16.gmra.mrb[0].mxu0 %v2909
        %v3920 = vpop.f32.mrb[0].mxu0
        %v3921 = vadd.f32 0.0, %v3920
        %v3922 = vpop.f32.mrb[0].mxu0
        %v3923 = vpop.f32.mrb[0].mxu0
        %v3924 = vadd.f32 0.0, %v3923
        %v3925 = vpop.f32.mrb[0].mxu0
        %3926 = vmatprep.mubr.bf16.mxu0 0
        %3927 = vmatmul.mubr.bf16.gmra.mrb[0].mxu0 %v3724
        %v3928 = vpop.f32.mrb[0].mxu0
        %v3929 = vadd.f32 0.0, %v3928
        %v3930 = vpop.f32.mrb[0].mxu0
        %v3931 = vpop.f32.mrb[0].mxu0
        %v3932 = vadd.f32 0.0, %v3931
        %v3933 = vpop.f32.mrb[0].mxu0
        %3934 = vdwg.mxu0
        %v3935 = vadd.f32 %v3675, %v3809
        %v3936 = vadd.f32 %v3676, %v3812
        %v3937 = vadd.f32 %v3677, %v3817
        %v3938 = vadd.f32 %v3678, %v3820
        %v3939 = vadd.f32 %v3679, %v3825
        %v3940 = vadd.f32 %v3680, %v3828
        %v3941 = vadd.f32 %v3681, %v3833
        %v3942 = vadd.f32 %v3682, %v3836
        %v3943 = vadd.f32 %v3683, %v3841
        %v3944 = vadd.f32 %v3684, %v3844
        %v3945 = vadd.f32 %v3685, %v3849
        %v3946 = vadd.f32 %v3686, %v3852
        %v3947 = vadd.f32 %v3687, %v3857
        %v3948 = vadd.f32 %v3688, %v3860
        %v3949 = vadd.f32 %v3689, %v3865
        %v3950 = vadd.f32 %v3690, %v3868
        %v3951 = vadd.f32 %v3691, %v3873
        %v3952 = vadd.f32 %v3692, %v3876
        %v3953 = vadd.f32 %v3693, %v3881
        %v3954 = vadd.f32 %v3694, %v3884
        %v3955 = vadd.f32 %v3695, %v3889
        %v3956 = vadd.f32 %v3696, %v3892
        %v3957 = vadd.f32 %v3697, %v3897
        %v3958 = vadd.f32 %v3698, %v3900
        %v3959 = vadd.f32 %v3699, %v3905
        %v3960 = vadd.f32 %v3700, %v3908
        %v3961 = vadd.f32 %v3701, %v3913
        %v3962 = vadd.f32 %v3702, %v3916
        %v3963 = vadd.f32 %v3703, %v3921
        %v3964 = vadd.f32 %v3704, %v3924
        %v3965 = vadd.f32 %v3705, %v3929
        %v3966 = vadd.f32 %v3706, %v3932
        %v3968 = vshrl.u32 %v1518, 16
        %v3970 = vrot.slane %v3968, 4
        %v3971 = vshll.u32 %v1518, 16
        %v3973 = vrot.slane %v3971, 5
        %v3974 = vor.u32 %v3970, %v3973
        %v3975 = vrot.slane %v3974, 4
        %v3977 = vshll.u32 %v1519, 16
        %v3979 = vrot.slane %v3977, 5
        %v3980 = vsel %vm1539, %v3975, %v3979
        %v3981 = vshrl.u32 %v1519, 16
        %v3983 = vrot.slane %v3981, 4
        %v3984 = vor.u32 %v3983, %v3979
        %v3985 = vrot.slane %v3984, 4
        %v3987 = vshll.u32 %v1520, 16
        %v3989 = vrot.slane %v3987, 5
        %v3990 = vsel %vm1539, %v3985, %v3989
        %s3991 = scalar_lea.vmem [#allocation5], 448
        %v3992 = vld [vmem:[%s3991] sm:$0xf]
        %v3993 = vld [vmem:[%s3991 + $0x4] sm:$0xf]
        %v3994 = vld [vmem:[%s3991 + $0x8] sm:$0xf]
        %v3995 = vld [vmem:[%s3991 + $0xc] sm:$0xf]
        %v3996 = vld [vmem:[%s3991 + $0x10] sm:$0xf]
        %v3997 = vld [vmem:[%s3991 + $0x14] sm:$0xf]
        %v3998 = vld [vmem:[%s3991 + $0x18] sm:$0xf]
        %v3999 = vld [vmem:[%s3991 + $0x1c] sm:$0xf]
        %v4000 = vld [vmem:[%s3991 + $0x20] sm:$0xf]
        %v4001 = vld [vmem:[%s3991 + $0x24] sm:$0xf]
        %v4002 = vld [vmem:[%s3991 + $0x28] sm:$0xf]
        %v4003 = vld [vmem:[%s3991 + $0x2c] sm:$0xf]
        %v4004 = vld [vmem:[%s3991 + $0x30] sm:$0xf]
        %v4005 = vld [vmem:[%s3991 + $0x34] sm:$0xf]
        %v4006 = vld [vmem:[%s3991 + $0x38] sm:$0xf]
        %v4007 = vld [vmem:[%s3991 + $0x3c] sm:$0xf]
        %v4008 = vunpack.c.l.b16 %v3980
        %v4009 = vunpack.c.l.b16 %v3990
        %v4010 = vpack.c.b16 %v4009, %v4008
        %v4028 = vunpack.c.l.b16 %v3992
        %v4029 = vunpack.c.l.b16 %v3993
        %v4030 = vunpack.c.l.b16 %v3994
        %v4031 = vunpack.c.l.b16 %v3995
        %v4032 = vunpack.c.l.b16 %v3996
        %v4033 = vunpack.c.l.b16 %v3997
        %v4034 = vunpack.c.l.b16 %v3998
        %v4035 = vunpack.c.l.b16 %v3999
        %v4036 = vunpack.c.l.b16 %v4000
        %v4037 = vunpack.c.l.b16 %v4001
        %v4038 = vunpack.c.l.b16 %v4002
        %v4039 = vunpack.c.l.b16 %v4003
        %v4040 = vunpack.c.l.b16 %v4004
        %v4041 = vunpack.c.l.b16 %v4005
        %v4042 = vunpack.c.l.b16 %v4006
        %v4043 = vunpack.c.l.b16 %v4007
        %v4044 = vpack.c.b16 %v4029, %v4028
        %v4045 = vpack.c.b16 %v4031, %v4030
        %v4046 = vpack.c.b16 %v4033, %v4032
        %v4047 = vpack.c.b16 %v4035, %v4034
        %v4048 = vpack.c.b16 %v4037, %v4036
        %v4049 = vpack.c.b16 %v4039, %v4038
        %v4050 = vpack.c.b16 %v4041, %v4040
        %v4051 = vpack.c.b16 %v4043, %v4042
        %4060 = vmatprep.subr.bf16.mxu0 0
        %4061 = vmatpush1.bf16.msra.mxu0 %v4044
        %4062 = vmatprep.subr.bf16.mxu0 0
        %4063 = vmatpush1.bf16.msra.mxu0 %v4045
        %4064 = vmatprep.subr.bf16.mxu0 0
        %4065 = vmatpush1.bf16.msra.mxu0 %v4046
        %4066 = vmatprep.subr.bf16.mxu0 0
        %4067 = vmatpush1.bf16.msra.mxu0 %v4047
        %4068 = vmatprep.subr.bf16.mxu0 0
        %4069 = vmatpush1.bf16.msra.mxu0 %v4048
        %4070 = vmatprep.subr.bf16.mxu0 0
        %4071 = vmatpush1.bf16.msra.mxu0 %v4049
        %4072 = vmatprep.subr.bf16.mxu0 0
        %4073 = vmatpush1.bf16.msra.mxu0 %v4050
        %4074 = vmatprep.subr.bf16.mxu0 0
        %4075 = vmatpush1.bf16.msra.mxu0 %v4051
        %4076 = vmatprep.subr.bf16.mxu0 0
        %4077 = vmatpush1.bf16.msra.mxu0 0
        %4078 = vmatprep.subr.bf16.mxu0 0
        %4079 = vmatpush1.bf16.msra.mxu0 0
        %4080 = vmatprep.subr.bf16.mxu0 0
        %4081 = vmatpush1.bf16.msra.mxu0 0
        %4082 = vmatprep.subr.bf16.mxu0 0
        %4083 = vmatpush1.bf16.msra.mxu0 0
        %4084 = vmatprep.subr.bf16.mxu0 0
        %4085 = vmatpush1.bf16.msra.mxu0 0
        %4086 = vmatprep.subr.bf16.mxu0 0
        %4087 = vmatpush1.bf16.msra.mxu0 0
        %4088 = vmatprep.subr.bf16.mxu0 0
        %4089 = vmatpush1.bf16.msra.mxu0 0
        %4090 = vmatprep.subr.bf16.mxu0 0
        %4091 = vmatpush1.bf16.msra.mxu0 0
        %4092 = vmatprep.mubr.bf16.mxu0 0
        %4093 = vmatmul.mubr.bf16.gmra.mrb[0].mxu0 %v1975
        %v4094 = vpop.f32.mrb[0].mxu0
        %v4095 = vadd.f32 0.0, %v4094
        %v4096 = vpop.f32.mrb[0].mxu0
        %v4097 = vpop.f32.mrb[0].mxu0
        %v4098 = vadd.f32 0.0, %v4097
        %v4099 = vpop.f32.mrb[0].mxu0
        %4100 = vmatprep.mubr.bf16.mxu0 0
        %4101 = vmatmul.mubr.bf16.gmra.mrb[0].mxu0 %v1976
        %v4102 = vpop.f32.mrb[0].mxu0
        %v4103 = vadd.f32 0.0, %v4102
        %v4104 = vpop.f32.mrb[0].mxu0
        %v4105 = vpop.f32.mrb[0].mxu0
        %v4106 = vadd.f32 0.0, %v4105
        %v4107 = vpop.f32.mrb[0].mxu0
        %4108 = vmatprep.mubr.bf16.mxu0 0
        %4109 = vmatmul.mubr.bf16.gmra.mrb[0].mxu0 %v1977
        %v4110 = vpop.f32.mrb[0].mxu0
        %v4111 = vadd.f32 0.0, %v4110
        %v4112 = vpop.f32.mrb[0].mxu0
        %v4113 = vpop.f32.mrb[0].mxu0
        %v4114 = vadd.f32 0.0, %v4113
        %v4115 = vpop.f32.mrb[0].mxu0
        %4116 = vmatprep.mubr.bf16.mxu0 0
        %4117 = vmatmul.mubr.bf16.gmra.mrb[0].mxu0 %v1978
        %v4118 = vpop.f32.mrb[0].mxu0
        %v4119 = vadd.f32 0.0, %v4118
        %v4120 = vpop.f32.mrb[0].mxu0
        %v4121 = vpop.f32.mrb[0].mxu0
        %v4122 = vadd.f32 0.0, %v4121
        %v4123 = vpop.f32.mrb[0].mxu0
        %4124 = vmatprep.mubr.bf16.mxu0 0
        %4125 = vmatmul.mubr.bf16.gmra.mrb[0].mxu0 %v1979
        %v4126 = vpop.f32.mrb[0].mxu0
        %v4127 = vadd.f32 0.0, %v4126
        %v4128 = vpop.f32.mrb[0].mxu0
        %v4129 = vpop.f32.mrb[0].mxu0
        %v4130 = vadd.f32 0.0, %v4129
        %v4131 = vpop.f32.mrb[0].mxu0
        %4132 = vmatprep.mubr.bf16.mxu0 0
        %4133 = vmatmul.mubr.bf16.gmra.mrb[0].mxu0 %v1980
        %v4134 = vpop.f32.mrb[0].mxu0
        %v4135 = vadd.f32 0.0, %v4134
        %v4136 = vpop.f32.mrb[0].mxu0
        %v4137 = vpop.f32.mrb[0].mxu0
        %v4138 = vadd.f32 0.0, %v4137
        %v4139 = vpop.f32.mrb[0].mxu0
        %4140 = vmatprep.mubr.bf16.mxu0 0
        %4141 = vmatmul.mubr.bf16.gmra.mrb[0].mxu0 %v1981
        %v4142 = vpop.f32.mrb[0].mxu0
        %v4143 = vadd.f32 0.0, %v4142
        %v4144 = vpop.f32.mrb[0].mxu0
        %v4145 = vpop.f32.mrb[0].mxu0
        %v4146 = vadd.f32 0.0, %v4145
        %v4147 = vpop.f32.mrb[0].mxu0
        %4148 = vmatprep.mubr.bf16.mxu0 0
        %4149 = vmatmul.mubr.bf16.gmra.mrb[0].mxu0 %v1982
        %v4150 = vpop.f32.mrb[0].mxu0
        %v4151 = vadd.f32 0.0, %v4150
        %v4152 = vpop.f32.mrb[0].mxu0
        %v4153 = vpop.f32.mrb[0].mxu0
        %v4154 = vadd.f32 0.0, %v4153
        %v4155 = vpop.f32.mrb[0].mxu0
        %4156 = vmatprep.mubr.bf16.mxu0 0
        %4157 = vmatmul.mubr.bf16.gmra.mrb[0].mxu0 %v1983
        %v4158 = vpop.f32.mrb[0].mxu0
        %v4159 = vadd.f32 0.0, %v4158
        %v4160 = vpop.f32.mrb[0].mxu0
        %v4161 = vpop.f32.mrb[0].mxu0
        %v4162 = vadd.f32 0.0, %v4161
        %v4163 = vpop.f32.mrb[0].mxu0
        %4164 = vmatprep.mubr.bf16.mxu0 0
        %4165 = vmatmul.mubr.bf16.gmra.mrb[0].mxu0 %v1984
        %v4166 = vpop.f32.mrb[0].mxu0
        %v4167 = vadd.f32 0.0, %v4166
        %v4168 = vpop.f32.mrb[0].mxu0
        %v4169 = vpop.f32.mrb[0].mxu0
        %v4170 = vadd.f32 0.0, %v4169
        %v4171 = vpop.f32.mrb[0].mxu0
        %4172 = vmatprep.mubr.bf16.mxu0 0
        %4173 = vmatmul.mubr.bf16.gmra.mrb[0].mxu0 %v1985
        %v4174 = vpop.f32.mrb[0].mxu0
        %v4175 = vadd.f32 0.0, %v4174
        %v4176 = vpop.f32.mrb[0].mxu0
        %v4177 = vpop.f32.mrb[0].mxu0
        %v4178 = vadd.f32 0.0, %v4177
        %v4179 = vpop.f32.mrb[0].mxu0
        %4180 = vmatprep.mubr.bf16.mxu0 0
        %4181 = vmatmul.mubr.bf16.gmra.mrb[0].mxu0 %v1986
        %v4182 = vpop.f32.mrb[0].mxu0
        %v4183 = vadd.f32 0.0, %v4182
        %v4184 = vpop.f32.mrb[0].mxu0
        %v4185 = vpop.f32.mrb[0].mxu0
        %v4186 = vadd.f32 0.0, %v4185
        %v4187 = vpop.f32.mrb[0].mxu0
        %4188 = vmatprep.mubr.bf16.mxu0 0
        %4189 = vmatmul.mubr.bf16.gmra.mrb[0].mxu0 %v1987
        %v4190 = vpop.f32.mrb[0].mxu0
        %v4191 = vadd.f32 0.0, %v4190
        %v4192 = vpop.f32.mrb[0].mxu0
        %v4193 = vpop.f32.mrb[0].mxu0
        %v4194 = vadd.f32 0.0, %v4193
        %v4195 = vpop.f32.mrb[0].mxu0
        %4196 = vmatprep.mubr.bf16.mxu0 0
        %4197 = vmatmul.mubr.bf16.gmra.mrb[0].mxu0 %v1988
        %v4198 = vpop.f32.mrb[0].mxu0
        %v4199 = vadd.f32 0.0, %v4198
        %v4200 = vpop.f32.mrb[0].mxu0
        %v4201 = vpop.f32.mrb[0].mxu0
        %v4202 = vadd.f32 0.0, %v4201
        %v4203 = vpop.f32.mrb[0].mxu0
        %4204 = vmatprep.mubr.bf16.mxu0 0
        %4205 = vmatmul.mubr.bf16.gmra.mrb[0].mxu0 %v3195
        %v4206 = vpop.f32.mrb[0].mxu0
        %v4207 = vadd.f32 0.0, %v4206
        %v4208 = vpop.f32.mrb[0].mxu0
        %v4209 = vpop.f32.mrb[0].mxu0
        %v4210 = vadd.f32 0.0, %v4209
        %v4211 = vpop.f32.mrb[0].mxu0
        %4212 = vmatprep.mubr.bf16.mxu0 0
        %4213 = vmatmul.mubr.bf16.gmra.mrb[0].mxu0 %v4010
        %v4214 = vpop.f32.mrb[0].mxu0
        %v4215 = vadd.f32 0.0, %v4214
        %v4216 = vpop.f32.mrb[0].mxu0
        %v4217 = vpop.f32.mrb[0].mxu0
        %v4218 = vadd.f32 0.0, %v4217
        %v4219 = vpop.f32.mrb[0].mxu0
        %4220 = vdwg.mxu0
        %v4221 = vadd.f32 %v3935, %v4095
        %v4222 = vadd.f32 %v3936, %v4098
        %v4223 = vadd.f32 %v3937, %v4103
        %v4224 = vadd.f32 %v3938, %v4106
        %v4225 = vadd.f32 %v3939, %v4111
        %v4226 = vadd.f32 %v3940, %v4114
        %v4227 = vadd.f32 %v3941, %v4119
        %v4228 = vadd.f32 %v3942, %v4122
        %v4229 = vadd.f32 %v3943, %v4127
        %v4230 = vadd.f32 %v3944, %v4130
        %v4231 = vadd.f32 %v3945, %v4135
        %v4232 = vadd.f32 %v3946, %v4138
        %v4233 = vadd.f32 %v3947, %v4143
        %v4234 = vadd.f32 %v3948, %v4146
        %v4235 = vadd.f32 %v3949, %v4151
        %v4236 = vadd.f32 %v3950, %v4154
        %v4237 = vadd.f32 %v3951, %v4159
        %v4238 = vadd.f32 %v3952, %v4162
        %v4239 = vadd.f32 %v3953, %v4167
        %v4240 = vadd.f32 %v3954, %v4170
        %v4241 = vadd.f32 %v3955, %v4175
        %v4242 = vadd.f32 %v3956, %v4178
        %v4243 = vadd.f32 %v3957, %v4183
        %v4244 = vadd.f32 %v3958, %v4186
        %v4245 = vadd.f32 %v3959, %v4191
        %v4246 = vadd.f32 %v3960, %v4194
        %v4247 = vadd.f32 %v3961, %v4199
        %v4248 = vadd.f32 %v3962, %v4202
        %v4249 = vadd.f32 %v3963, %v4207
        %v4250 = vadd.f32 %v3964, %v4210
        %v4251 = vadd.f32 %v3965, %v4215
        %v4252 = vadd.f32 %v3966, %v4218
        %v4253 = vrot.slane %v1518, 5
        %v4254 = vrot.slane %v4253, 4
        %v4255 = vrot.slane %v1519, 5
        %v4256 = vsel %vm2457, %v4254, %v4255
        %v4257 = vrot.slane %v4255, 4
        %v4258 = vrot.slane %v1520, 5
        %v4259 = vsel %vm2457, %v4257, %v4258
        %s4260 = scalar_lea.vmem [#allocation5], 512
        %v4261 = vld [vmem:[%s4260] sm:$0xf]
        %v4262 = vld [vmem:[%s4260 + $0x4] sm:$0xf]
        %v4263 = vld [vmem:[%s4260 + $0x8] sm:$0xf]
        %v4264 = vld [vmem:[%s4260 + $0xc] sm:$0xf]
        %v4265 = vld [vmem:[%s4260 + $0x10] sm:$0xf]
        %v4266 = vld [vmem:[%s4260 + $0x14] sm:$0xf]
        %v4267 = vld [vmem:[%s4260 + $0x18] sm:$0xf]
        %v4268 = vld [vmem:[%s4260 + $0x1c] sm:$0xf]
        %v4269 = vld [vmem:[%s4260 + $0x20] sm:$0xf]
        %v4270 = vld [vmem:[%s4260 + $0x24] sm:$0xf]
        %v4271 = vld [vmem:[%s4260 + $0x28] sm:$0xf]
        %v4272 = vld [vmem:[%s4260 + $0x2c] sm:$0xf]
        %v4273 = vld [vmem:[%s4260 + $0x30] sm:$0xf]
        %v4274 = vld [vmem:[%s4260 + $0x34] sm:$0xf]
        %v4275 = vld [vmem:[%s4260 + $0x38] sm:$0xf]
        %v4276 = vld [vmem:[%s4260 + $0x3c] sm:$0xf]
        %v4277 = vunpack.c.l.b16 %v4256
        %v4278 = vunpack.c.l.b16 %v4259
        %v4279 = vpack.c.b16 %v4278, %v4277
        %v4297 = vunpack.c.l.b16 %v4261
        %v4298 = vunpack.c.l.b16 %v4262
        %v4299 = vunpack.c.l.b16 %v4263
        %v4300 = vunpack.c.l.b16 %v4264
        %v4301 = vunpack.c.l.b16 %v4265
        %v4302 = vunpack.c.l.b16 %v4266
        %v4303 = vunpack.c.l.b16 %v4267
        %v4304 = vunpack.c.l.b16 %v4268
        %v4305 = vunpack.c.l.b16 %v4269
        %v4306 = vunpack.c.l.b16 %v4270
        %v4307 = vunpack.c.l.b16 %v4271
        %v4308 = vunpack.c.l.b16 %v4272
        %v4309 = vunpack.c.l.b16 %v4273
        %v4310 = vunpack.c.l.b16 %v4274
        %v4311 = vunpack.c.l.b16 %v4275
        %v4312 = vunpack.c.l.b16 %v4276
        %v4313 = vpack.c.b16 %v4298, %v4297
        %v4314 = vpack.c.b16 %v4300, %v4299
        %v4315 = vpack.c.b16 %v4302, %v4301
        %v4316 = vpack.c.b16 %v4304, %v4303
        %v4317 = vpack.c.b16 %v4306, %v4305
        %v4318 = vpack.c.b16 %v4308, %v4307
        %v4319 = vpack.c.b16 %v4310, %v4309
        %v4320 = vpack.c.b16 %v4312, %v4311
        %4329 = vmatprep.subr.bf16.mxu0 0
        %4330 = vmatpush1.bf16.msra.mxu0 %v4313
        %4331 = vmatprep.subr.bf16.mxu0 0
        %4332 = vmatpush1.bf16.msra.mxu0 %v4314
        %4333 = vmatprep.subr.bf16.mxu0 0
        %4334 = vmatpush1.bf16.msra.mxu0 %v4315
        %4335 = vmatprep.subr.bf16.mxu0 0
        %4336 = vmatpush1.bf16.msra.mxu0 %v4316
        %4337 = vmatprep.subr.bf16.mxu0 0
        %4338 = vmatpush1.bf16.msra.mxu0 %v4317
        %4339 = vmatprep.subr.bf16.mxu0 0
        %4340 = vmatpush1.bf16.msra.mxu0 %v4318
        %4341 = vmatprep.subr.bf16.mxu0 0
        %4342 = vmatpush1.bf16.msra.mxu0 %v4319
        %4343 = vmatprep.subr.bf16.mxu0 0
        %4344 = vmatpush1.bf16.msra.mxu0 %v4320
        %4345 = vmatprep.subr.bf16.mxu0 0
        %4346 = vmatpush1.bf16.msra.mxu0 0
        %4347 = vmatprep.subr.bf16.mxu0 0
        %4348 = vmatpush1.bf16.msra.mxu0 0
        %4349 = vmatprep.subr.bf16.mxu0 0
        %4350 = vmatpush1.bf16.msra.mxu0 0
        %4351 = vmatprep.subr.bf16.mxu0 0
        %4352 = vmatpush1.bf16.msra.mxu0 0
        %4353 = vmatprep.subr.bf16.mxu0 0
        %4354 = vmatpush1.bf16.msra.mxu0 0
        %4355 = vmatprep.subr.bf16.mxu0 0
        %4356 = vmatpush1.bf16.msra.mxu0 0
        %4357 = vmatprep.subr.bf16.mxu0 0
        %4358 = vmatpush1.bf16.msra.mxu0 0
        %4359 = vmatprep.subr.bf16.mxu0 0
        %4360 = vmatpush1.bf16.msra.mxu0 0
        %4361 = vmatprep.mubr.bf16.mxu0 0
        %4362 = vmatmul.mubr.bf16.gmra.mrb[0].mxu0 %v2621
        %v4363 = vpop.f32.mrb[0].mxu0
        %v4364 = vadd.f32 0.0, %v4363
        %v4365 = vpop.f32.mrb[0].mxu0
        %v4366 = vpop.f32.mrb[0].mxu0
        %v4367 = vadd.f32 0.0, %v4366
        %v4368 = vpop.f32.mrb[0].mxu0
        %4369 = vmatprep.mubr.bf16.mxu0 0
        %4370 = vmatmul.mubr.bf16.gmra.mrb[0].mxu0 %v2622
        %v4371 = vpop.f32.mrb[0].mxu0
        %v4372 = vadd.f32 0.0, %v4371
        %v4373 = vpop.f32.mrb[0].mxu0
        %v4374 = vpop.f32.mrb[0].mxu0
        %v4375 = vadd.f32 0.0, %v4374
        %v4376 = vpop.f32.mrb[0].mxu0
        %4377 = vmatprep.mubr.bf16.mxu0 0
        %4378 = vmatmul.mubr.bf16.gmra.mrb[0].mxu0 %v2623
        %v4379 = vpop.f32.mrb[0].mxu0
        %v4380 = vadd.f32 0.0, %v4379
        %v4381 = vpop.f32.mrb[0].mxu0
        %v4382 = vpop.f32.mrb[0].mxu0
        %v4383 = vadd.f32 0.0, %v4382
        %v4384 = vpop.f32.mrb[0].mxu0
        %4385 = vmatprep.mubr.bf16.mxu0 0
        %4386 = vmatmul.mubr.bf16.gmra.mrb[0].mxu0 %v2624
        %v4387 = vpop.f32.mrb[0].mxu0
        %v4388 = vadd.f32 0.0, %v4387
        %v4389 = vpop.f32.mrb[0].mxu0
        %v4390 = vpop.f32.mrb[0].mxu0
        %v4391 = vadd.f32 0.0, %v4390
        %v4392 = vpop.f32.mrb[0].mxu0
        %4393 = vmatprep.mubr.bf16.mxu0 0
        %4394 = vmatmul.mubr.bf16.gmra.mrb[0].mxu0 %v2625
        %v4395 = vpop.f32.mrb[0].mxu0
        %v4396 = vadd.f32 0.0, %v4395
        %v4397 = vpop.f32.mrb[0].mxu0
        %v4398 = vpop.f32.mrb[0].mxu0
        %v4399 = vadd.f32 0.0, %v4398
        %v4400 = vpop.f32.mrb[0].mxu0
        %4401 = vmatprep.mubr.bf16.mxu0 0
        %4402 = vmatmul.mubr.bf16.gmra.mrb[0].mxu0 %v2626
        %v4403 = vpop.f32.mrb[0].mxu0
        %v4404 = vadd.f32 0.0, %v4403
        %v4405 = vpop.f32.mrb[0].mxu0
        %v4406 = vpop.f32.mrb[0].mxu0
        %v4407 = vadd.f32 0.0, %v4406
        %v4408 = vpop.f32.mrb[0].mxu0
        %4409 = vmatprep.mubr.bf16.mxu0 0
        %4410 = vmatmul.mubr.bf16.gmra.mrb[0].mxu0 %v2627
        %v4411 = vpop.f32.mrb[0].mxu0
        %v4412 = vadd.f32 0.0, %v4411
        %v4413 = vpop.f32.mrb[0].mxu0
        %v4414 = vpop.f32.mrb[0].mxu0
        %v4415 = vadd.f32 0.0, %v4414
        %v4416 = vpop.f32.mrb[0].mxu0
        %4417 = vmatprep.mubr.bf16.mxu0 0
        %4418 = vmatmul.mubr.bf16.gmra.mrb[0].mxu0 %v2628
        %v4419 = vpop.f32.mrb[0].mxu0
        %v4420 = vadd.f32 0.0, %v4419
        %v4421 = vpop.f32.mrb[0].mxu0
        %v4422 = vpop.f32.mrb[0].mxu0
        %v4423 = vadd.f32 0.0, %v4422
        %v4424 = vpop.f32.mrb[0].mxu0
        %4425 = vmatprep.mubr.bf16.mxu0 0
        %4426 = vmatmul.mubr.bf16.gmra.mrb[0].mxu0 %v2629
        %v4427 = vpop.f32.mrb[0].mxu0
        %v4428 = vadd.f32 0.0, %v4427
        %v4429 = vpop.f32.mrb[0].mxu0
        %v4430 = vpop.f32.mrb[0].mxu0
        %v4431 = vadd.f32 0.0, %v4430
        %v4432 = vpop.f32.mrb[0].mxu0
        %4433 = vmatprep.mubr.bf16.mxu0 0
        %4434 = vmatmul.mubr.bf16.gmra.mrb[0].mxu0 %v2630
        %v4435 = vpop.f32.mrb[0].mxu0
        %v4436 = vadd.f32 0.0, %v4435
        %v4437 = vpop.f32.mrb[0].mxu0
        %v4438 = vpop.f32.mrb[0].mxu0
        %v4439 = vadd.f32 0.0, %v4438
        %v4440 = vpop.f32.mrb[0].mxu0
        %4441 = vmatprep.mubr.bf16.mxu0 0
        %4442 = vmatmul.mubr.bf16.gmra.mrb[0].mxu0 %v2631
        %v4443 = vpop.f32.mrb[0].mxu0
        %v4444 = vadd.f32 0.0, %v4443
        %v4445 = vpop.f32.mrb[0].mxu0
        %v4446 = vpop.f32.mrb[0].mxu0
        %v4447 = vadd.f32 0.0, %v4446
        %v4448 = vpop.f32.mrb[0].mxu0
        %4449 = vmatprep.mubr.bf16.mxu0 0
        %4450 = vmatmul.mubr.bf16.gmra.mrb[0].mxu0 %v2632
        %v4451 = vpop.f32.mrb[0].mxu0
        %v4452 = vadd.f32 0.0, %v4451
        %v4453 = vpop.f32.mrb[0].mxu0
        %v4454 = vpop.f32.mrb[0].mxu0
        %v4455 = vadd.f32 0.0, %v4454
        %v4456 = vpop.f32.mrb[0].mxu0
        %4457 = vmatprep.mubr.bf16.mxu0 0
        %4458 = vmatmul.mubr.bf16.gmra.mrb[0].mxu0 %v2633
        %v4459 = vpop.f32.mrb[0].mxu0
        %v4460 = vadd.f32 0.0, %v4459
        %v4461 = vpop.f32.mrb[0].mxu0
        %v4462 = vpop.f32.mrb[0].mxu0
        %v4463 = vadd.f32 0.0, %v4462
        %v4464 = vpop.f32.mrb[0].mxu0
        %4465 = vmatprep.mubr.bf16.mxu0 0
        %4466 = vmatmul.mubr.bf16.gmra.mrb[0].mxu0 %v2634
        %v4467 = vpop.f32.mrb[0].mxu0
        %v4468 = vadd.f32 0.0, %v4467
        %v4469 = vpop.f32.mrb[0].mxu0
        %v4470 = vpop.f32.mrb[0].mxu0
        %v4471 = vadd.f32 0.0, %v4470
        %v4472 = vpop.f32.mrb[0].mxu0
        %4473 = vmatprep.mubr.bf16.mxu0 0
        %4474 = vmatmul.mubr.bf16.gmra.mrb[0].mxu0 %v3464
        %v4475 = vpop.f32.mrb[0].mxu0
        %v4476 = vadd.f32 0.0, %v4475
        %v4477 = vpop.f32.mrb[0].mxu0
        %v4478 = vpop.f32.mrb[0].mxu0
        %v4479 = vadd.f32 0.0, %v4478
        %v4480 = vpop.f32.mrb[0].mxu0
        %4481 = vmatprep.mubr.bf16.mxu0 0
        %4482 = vmatmul.mubr.bf16.gmra.mrb[0].mxu0 %v4279
        %v4483 = vpop.f32.mrb[0].mxu0
        %v4484 = vadd.f32 0.0, %v4483
        %v4485 = vpop.f32.mrb[0].mxu0
        %v4486 = vpop.f32.mrb[0].mxu0
        %v4487 = vadd.f32 0.0, %v4486
        %v4488 = vpop.f32.mrb[0].mxu0
        %4489 = vdwg.mxu0
        %v4490 = vadd.f32 %v4221, %v4364
        %v4491 = vadd.f32 %v4222, %v4367
        %v4492 = vadd.f32 %v4223, %v4372
        %v4493 = vadd.f32 %v4224, %v4375
        %v4494 = vadd.f32 %v4225, %v4380
        %v4495 = vadd.f32 %v4226, %v4383
        %v4496 = vadd.f32 %v4227, %v4388
        %v4497 = vadd.f32 %v4228, %v4391
        %v4498 = vadd.f32 %v4229, %v4396
        %v4499 = vadd.f32 %v4230, %v4399
        %v4500 = vadd.f32 %v4231, %v4404
        %v4501 = vadd.f32 %v4232, %v4407
        %v4502 = vadd.f32 %v4233, %v4412
        %v4503 = vadd.f32 %v4234, %v4415
        %v4504 = vadd.f32 %v4235, %v4420
        %v4505 = vadd.f32 %v4236, %v4423
        %v4506 = vadd.f32 %v4237, %v4428
        %v4507 = vadd.f32 %v4238, %v4431
        %v4508 = vadd.f32 %v4239, %v4436
        %v4509 = vadd.f32 %v4240, %v4439
        %v4510 = vadd.f32 %v4241, %v4444
        %v4511 = vadd.f32 %v4242, %v4447
        %v4512 = vadd.f32 %v4243, %v4452
        %v4513 = vadd.f32 %v4244, %v4455
        %v4514 = vadd.f32 %v4245, %v4460
        %v4515 = vadd.f32 %v4246, %v4463
        %v4516 = vadd.f32 %v4247, %v4468
        %v4517 = vadd.f32 %v4248, %v4471
        %v4518 = vadd.f32 %v4249, %v4476
        %v4519 = vadd.f32 %v4250, %v4479
        %v4520 = vadd.f32 %v4251, %v4484
        %v4521 = vadd.f32 %v4252, %v4487
        %v4522 = vld [vmem:[%s5] sm:$0x1]
        %v4524 = vlaneseq
        %v4525 = vshrl.u32 %v4524, 7
        %v4526 = vsub.s32 0, %v4525
        %v4527 = vrot.slane %v4522, %v4526
        %v4529 = vadd.f32 %v4490, %v4527
        %v4530 = vadd.f32 %v4491, %v4527
        %v4531 = vadd.f32 %v4492, %v4527
        %v4532 = vadd.f32 %v4493, %v4527
        %v4533 = vadd.f32 %v4494, %v4527
        %v4534 = vadd.f32 %v4495, %v4527
        %v4535 = vadd.f32 %v4496, %v4527
        %v4536 = vadd.f32 %v4497, %v4527
        %v4537 = vadd.f32 %v4498, %v4527
        %v4538 = vadd.f32 %v4499, %v4527
        %v4539 = vadd.f32 %v4500, %v4527
        %v4540 = vadd.f32 %v4501, %v4527
        %v4541 = vadd.f32 %v4502, %v4527
        %v4542 = vadd.f32 %v4503, %v4527
        %v4543 = vadd.f32 %v4504, %v4527
        %v4544 = vadd.f32 %v4505, %v4527
        %v4545 = vadd.f32 %v4506, %v4527
        %v4546 = vadd.f32 %v4507, %v4527
        %v4547 = vadd.f32 %v4508, %v4527
        %v4548 = vadd.f32 %v4509, %v4527
        %v4549 = vadd.f32 %v4510, %v4527
        %v4550 = vadd.f32 %v4511, %v4527
        %v4551 = vadd.f32 %v4512, %v4527
        %v4552 = vadd.f32 %v4513, %v4527
        %v4553 = vadd.f32 %v4514, %v4527
        %v4554 = vadd.f32 %v4515, %v4527
        %v4555 = vadd.f32 %v4516, %v4527
        %v4556 = vadd.f32 %v4517, %v4527
        %v4557 = vadd.f32 %v4518, %v4527
        %v4558 = vadd.f32 %v4519, %v4527
        %v4559 = vadd.f32 %v4520, %v4527
        %v4560 = vadd.f32 %v4521, %v4527
        %v4561 = vmax.f32 %v4529, 0.0
        %v4562 = vmax.f32 %v4530, 0.0
        %v4563 = vmax.f32 %v4531, 0.0
        %v4564 = vmax.f32 %v4532, 0.0
        %v4565 = vmax.f32 %v4533, 0.0
        %v4566 = vmax.f32 %v4534, 0.0
        %v4567 = vmax.f32 %v4535, 0.0
        %v4568 = vmax.f32 %v4536, 0.0
        %v4569 = vmax.f32 %v4537, 0.0
        %v4570 = vmax.f32 %v4538, 0.0
        %v4571 = vmax.f32 %v4539, 0.0
        %v4572 = vmax.f32 %v4540, 0.0
        %v4573 = vmax.f32 %v4541, 0.0
        %v4574 = vmax.f32 %v4542, 0.0
        %v4575 = vmax.f32 %v4543, 0.0
        %v4576 = vmax.f32 %v4544, 0.0
        %v4577 = vmax.f32 %v4545, 0.0
        %v4578 = vmax.f32 %v4546, 0.0
        %v4579 = vmax.f32 %v4547, 0.0
        %v4580 = vmax.f32 %v4548, 0.0
        %v4581 = vmax.f32 %v4549, 0.0
        %v4582 = vmax.f32 %v4550, 0.0
        %v4583 = vmax.f32 %v4551, 0.0
        %v4584 = vmax.f32 %v4552, 0.0
        %v4585 = vmax.f32 %v4553, 0.0
        %v4586 = vmax.f32 %v4554, 0.0
        %v4587 = vmax.f32 %v4555, 0.0
        %v4588 = vmax.f32 %v4556, 0.0
        %v4589 = vmax.f32 %v4557, 0.0
        %v4590 = vmax.f32 %v4558, 0.0
        %v4591 = vmax.f32 %v4559, 0.0
        %v4592 = vmax.f32 %v4560, 0.0
        %v4593 = vpack.c.bf16 %v4562, %v4561
        %v4594 = vpack.c.bf16 %v4564, %v4563
        %v4595 = vpack.c.bf16 %v4566, %v4565
        %v4596 = vpack.c.bf16 %v4568, %v4567
        %v4597 = vpack.c.bf16 %v4570, %v4569
        %v4598 = vpack.c.bf16 %v4572, %v4571
        %v4599 = vpack.c.bf16 %v4574, %v4573
        %v4600 = vpack.c.bf16 %v4576, %v4575
        %v4601 = vpack.c.bf16 %v4578, %v4577
        %v4602 = vpack.c.bf16 %v4580, %v4579
        %v4603 = vpack.c.bf16 %v4582, %v4581
        %v4604 = vpack.c.bf16 %v4584, %v4583
        %v4605 = vpack.c.bf16 %v4586, %v4585
        %v4606 = vpack.c.bf16 %v4588, %v4587
        %v4607 = vpack.c.bf16 %v4590, %v4589
        %v4608 = vpack.c.bf16 %v4592, %v4591
        %v4609 = vld [vmem:[#allocation7] sm:$0xf]
        %v4610 = vld [vmem:[#allocation7 + $0x4] sm:$0xf]
        %v4611 = vld [vmem:[#allocation7 + $0x8] sm:$0xf]
        %v4612 = vld [vmem:[#allocation7 + $0xc] sm:$0xf]
        %v4613 = vld [vmem:[#allocation7 + $0x10] sm:$0xf]
        %v4614 = vld [vmem:[#allocation7 + $0x14] sm:$0xf]
        %v4615 = vld [vmem:[#allocation7 + $0x18] sm:$0xf]
        %v4616 = vld [vmem:[#allocation7 + $0x1c] sm:$0xf]
        %v4617 = vld [vmem:[#allocation7 + $0x20] sm:$0xf]
        %v4618 = vld [vmem:[#allocation7 + $0x24] sm:$0xf]
        %v4619 = vld [vmem:[#allocation7 + $0x28] sm:$0xf]
        %v4620 = vld [vmem:[#allocation7 + $0x2c] sm:$0xf]
        %v4621 = vld [vmem:[#allocation7 + $0x30] sm:$0xf]
        %v4622 = vld [vmem:[#allocation7 + $0x34] sm:$0xf]
        %v4623 = vld [vmem:[#allocation7 + $0x38] sm:$0xf]
        %v4624 = vld [vmem:[#allocation7 + $0x3c] sm:$0xf]
        %v4626 = vshrl.u32 %v394, 16
        %v4628 = vrot.slane %v4626, 4
        %v4629 = vshll.u32 %v394, 16
        %v4631 = vrot.slane %v4629, 5
        %v4632 = vor.u32 %v4628, %v4631
        %v4633 = vrot.slane %v4632, 4
        %v4635 = vshll.u32 %v395, 16
        %v4637 = vrot.slane %v4635, 5
        %v4638 = vsel %vm1539, %v4633, %v4637
        %v4639 = vshrl.u32 %v395, 16
        %v4641 = vrot.slane %v4639, 4
        %v4642 = vor.u32 %v4641, %v4637
        %v4643 = vrot.slane %v4642, 4
        %v4645 = vshll.u32 %v396, 16
        %v4647 = vrot.slane %v4645, 5
        %v4648 = vsel %vm1539, %v4643, %v4647
        %v4650 = vshrl.u32 %v397, 16
        %v4652 = vrot.slane %v4650, 4
        %v4653 = vshll.u32 %v397, 16
        %v4655 = vrot.slane %v4653, 5
        %v4656 = vor.u32 %v4652, %v4655
        %v4657 = vrot.slane %v4656, 4
        %v4659 = vshll.u32 %v398, 16
        %v4661 = vrot.slane %v4659, 5
        %v4662 = vsel %vm1539, %v4657, %v4661
        %v4663 = vshrl.u32 %v398, 16
        %v4665 = vrot.slane %v4663, 4
        %v4666 = vor.u32 %v4665, %v4661
        %v4667 = vrot.slane %v4666, 4
        %v4669 = vshll.u32 %v399, 16
        %v4671 = vrot.slane %v4669, 5
        %v4672 = vsel %vm1539, %v4667, %v4671
        %v4674 = vshrl.u32 %v400, 16
        %v4676 = vrot.slane %v4674, 4
        %v4677 = vshll.u32 %v400, 16
        %v4679 = vrot.slane %v4677, 5
        %v4680 = vor.u32 %v4676, %v4679
        %v4681 = vrot.slane %v4680, 4
        %v4683 = vshll.u32 %v401, 16
        %v4685 = vrot.slane %v4683, 5
        %v4686 = vsel %vm1539, %v4681, %v4685
        %v4687 = vshrl.u32 %v401, 16
        %v4689 = vrot.slane %v4687, 4
        %v4690 = vor.u32 %v4689, %v4685
        %v4691 = vrot.slane %v4690, 4
        %v4693 = vshll.u32 %v402, 16
        %v4695 = vrot.slane %v4693, 5
        %v4696 = vsel %vm1539, %v4691, %v4695
        %v4698 = vshrl.u32 %v403, 16
        %v4700 = vrot.slane %v4698, 4
        %v4701 = vshll.u32 %v403, 16
        %v4703 = vrot.slane %v4701, 5
        %v4704 = vor.u32 %v4700, %v4703
        %v4705 = vrot.slane %v4704, 4
        %v4707 = vshll.u32 %v404, 16
        %v4709 = vrot.slane %v4707, 5
        %v4710 = vsel %vm1539, %v4705, %v4709
        %v4711 = vshrl.u32 %v404, 16
        %v4713 = vrot.slane %v4711, 4
        %v4714 = vor.u32 %v4713, %v4709
        %v4715 = vrot.slane %v4714, 4
        %v4717 = vshll.u32 %v405, 16
        %v4719 = vrot.slane %v4717, 5
        %v4720 = vsel %vm1539, %v4715, %v4719
        %v4722 = vshrl.u32 %v406, 16
        %v4724 = vrot.slane %v4722, 4
        %v4725 = vshll.u32 %v406, 16
        %v4727 = vrot.slane %v4725, 5
        %v4728 = vor.u32 %v4724, %v4727
        %v4729 = vrot.slane %v4728, 4
        %v4731 = vshll.u32 %v407, 16
        %v4733 = vrot.slane %v4731, 5
        %v4734 = vsel %vm1539, %v4729, %v4733
        %v4735 = vshrl.u32 %v407, 16
        %v4737 = vrot.slane %v4735, 4
        %v4738 = vor.u32 %v4737, %v4733
        %v4739 = vrot.slane %v4738, 4
        %v4741 = vshll.u32 %v408, 16
        %v4743 = vrot.slane %v4741, 5
        %v4744 = vsel %vm1539, %v4739, %v4743
        %v4746 = vshrl.u32 %v409, 16
        %v4748 = vrot.slane %v4746, 4
        %v4749 = vshll.u32 %v409, 16
        %v4751 = vrot.slane %v4749, 5
        %v4752 = vor.u32 %v4748, %v4751
        %v4753 = vrot.slane %v4752, 4
        %v4755 = vshll.u32 %v410, 16
        %v4757 = vrot.slane %v4755, 5
        %v4758 = vsel %vm1539, %v4753, %v4757
        %v4759 = vshrl.u32 %v410, 16
        %v4761 = vrot.slane %v4759, 4
        %v4762 = vor.u32 %v4761, %v4757
        %v4763 = vrot.slane %v4762, 4
        %v4765 = vshll.u32 %v411, 16
        %v4767 = vrot.slane %v4765, 5
        %v4768 = vsel %vm1539, %v4763, %v4767
        %v4770 = vshrl.u32 %v412, 16
        %v4772 = vrot.slane %v4770, 4
        %v4773 = vshll.u32 %v412, 16
        %v4775 = vrot.slane %v4773, 5
        %v4776 = vor.u32 %v4772, %v4775
        %v4777 = vrot.slane %v4776, 4
        %v4779 = vshll.u32 %v413, 16
        %v4781 = vrot.slane %v4779, 5
        %v4782 = vsel %vm1539, %v4777, %v4781
        %v4783 = vshrl.u32 %v413, 16
        %v4785 = vrot.slane %v4783, 4
        %v4786 = vor.u32 %v4785, %v4781
        %v4787 = vrot.slane %v4786, 4
        %v4789 = vshll.u32 %v414, 16
        %v4791 = vrot.slane %v4789, 5
        %v4792 = vsel %vm1539, %v4787, %v4791
        %v4794 = vshrl.u32 %v415, 16
        %v4796 = vrot.slane %v4794, 4
        %v4797 = vshll.u32 %v415, 16
        %v4799 = vrot.slane %v4797, 5
        %v4800 = vor.u32 %v4796, %v4799
        %v4801 = vrot.slane %v4800, 4
        %v4803 = vshll.u32 %v416, 16
        %v4805 = vrot.slane %v4803, 5
        %v4806 = vsel %vm1539, %v4801, %v4805
        %v4807 = vshrl.u32 %v416, 16
        %v4809 = vrot.slane %v4807, 4
        %v4810 = vor.u32 %v4809, %v4805
        %v4811 = vrot.slane %v4810, 4
        %v4813 = vshll.u32 %v417, 16
        %v4815 = vrot.slane %v4813, 5
        %v4816 = vsel %vm1539, %v4811, %v4815
        %v4818 = vshrl.u32 %v418, 16
        %v4820 = vrot.slane %v4818, 4
        %v4821 = vshll.u32 %v418, 16
        %v4823 = vrot.slane %v4821, 5
        %v4824 = vor.u32 %v4820, %v4823
        %v4825 = vrot.slane %v4824, 4
        %v4827 = vshll.u32 %v419, 16
        %v4829 = vrot.slane %v4827, 5
        %v4830 = vsel %vm1539, %v4825, %v4829
        %v4831 = vshrl.u32 %v419, 16
        %v4833 = vrot.slane %v4831, 4
        %v4834 = vor.u32 %v4833, %v4829
        %v4835 = vrot.slane %v4834, 4
        %v4837 = vshll.u32 %v420, 16
        %v4839 = vrot.slane %v4837, 5
        %v4840 = vsel %vm1539, %v4835, %v4839
        %v4842 = vshrl.u32 %v421, 16
        %v4844 = vrot.slane %v4842, 4
        %v4845 = vshll.u32 %v421, 16
        %v4847 = vrot.slane %v4845, 5
        %v4848 = vor.u32 %v4844, %v4847
        %v4849 = vrot.slane %v4848, 4
        %v4851 = vshll.u32 %v422, 16
        %v4853 = vrot.slane %v4851, 5
        %v4854 = vsel %vm1539, %v4849, %v4853
        %v4855 = vshrl.u32 %v422, 16
        %v4857 = vrot.slane %v4855, 4
        %v4858 = vor.u32 %v4857, %v4853
        %v4859 = vrot.slane %v4858, 4
        %v4861 = vshll.u32 %v423, 16
        %v4863 = vrot.slane %v4861, 5
        %v4864 = vsel %vm1539, %v4859, %v4863
        %v4866 = vshrl.u32 %v424, 16
        %v4868 = vrot.slane %v4866, 4
        %v4869 = vshll.u32 %v424, 16
        %v4871 = vrot.slane %v4869, 5
        %v4872 = vor.u32 %v4868, %v4871
        %v4873 = vrot.slane %v4872, 4
        %v4875 = vshll.u32 %v425, 16
        %v4877 = vrot.slane %v4875, 5
        %v4878 = vsel %vm1539, %v4873, %v4877
        %v4879 = vshrl.u32 %v425, 16
        %v4881 = vrot.slane %v4879, 4
        %v4882 = vor.u32 %v4881, %v4877
        %v4883 = vrot.slane %v4882, 4
        %v4885 = vshll.u32 %v426, 16
        %v4887 = vrot.slane %v4885, 5
        %v4888 = vsel %vm1539, %v4883, %v4887
        %v4890 = vshrl.u32 %v427, 16
        %v4892 = vrot.slane %v4890, 4
        %v4893 = vshll.u32 %v427, 16
        %v4895 = vrot.slane %v4893, 5
        %v4896 = vor.u32 %v4892, %v4895
        %v4897 = vrot.slane %v4896, 4
        %v4899 = vshll.u32 %v428, 16
        %v4901 = vrot.slane %v4899, 5
        %v4902 = vsel %vm1539, %v4897, %v4901
        %v4903 = vshrl.u32 %v428, 16
        %v4905 = vrot.slane %v4903, 4
        %v4906 = vor.u32 %v4905, %v4901
        %v4907 = vrot.slane %v4906, 4
        %v4909 = vshll.u32 %v429, 16
        %v4911 = vrot.slane %v4909, 5
        %v4912 = vsel %vm1539, %v4907, %v4911
        %v4914 = vshrl.u32 %v430, 16
        %v4916 = vrot.slane %v4914, 4
        %v4917 = vshll.u32 %v430, 16
        %v4919 = vrot.slane %v4917, 5
        %v4920 = vor.u32 %v4916, %v4919
        %v4921 = vrot.slane %v4920, 4
        %v4923 = vshll.u32 %v431, 16
        %v4925 = vrot.slane %v4923, 5
        %v4926 = vsel %vm1539, %v4921, %v4925
        %v4927 = vshrl.u32 %v431, 16
        %v4929 = vrot.slane %v4927, 4
        %v4930 = vor.u32 %v4929, %v4925
        %v4931 = vrot.slane %v4930, 4
        %v4933 = vshll.u32 %v432, 16
        %v4935 = vrot.slane %v4933, 5
        %v4936 = vsel %vm1539, %v4931, %v4935
        %v4938 = vshrl.u32 %v433, 16
        %v4940 = vrot.slane %v4938, 4
        %v4941 = vshll.u32 %v433, 16
        %v4943 = vrot.slane %v4941, 5
        %v4944 = vor.u32 %v4940, %v4943
        %v4945 = vrot.slane %v4944, 4
        %v4947 = vshll.u32 %v434, 16
        %v4949 = vrot.slane %v4947, 5
        %v4950 = vsel %vm1539, %v4945, %v4949
        %v4951 = vshrl.u32 %v434, 16
        %v4953 = vrot.slane %v4951, 4
        %v4954 = vor.u32 %v4953, %v4949
        %v4955 = vrot.slane %v4954, 4
        %v4957 = vshll.u32 %v435, 16
        %v4959 = vrot.slane %v4957, 5
        %v4960 = vsel %vm1539, %v4955, %v4959
        %v4962 = vshrl.u32 %v436, 16
        %v4964 = vrot.slane %v4962, 4
        %v4965 = vshll.u32 %v436, 16
        %v4967 = vrot.slane %v4965, 5
        %v4968 = vor.u32 %v4964, %v4967
        %v4969 = vrot.slane %v4968, 4
        %v4971 = vshll.u32 %v437, 16
        %v4973 = vrot.slane %v4971, 5
        %v4974 = vsel %vm1539, %v4969, %v4973
        %v4975 = vshrl.u32 %v437, 16
        %v4977 = vrot.slane %v4975, 4
        %v4978 = vor.u32 %v4977, %v4973
        %v4979 = vrot.slane %v4978, 4
        %v4981 = vshll.u32 %v438, 16
        %v4983 = vrot.slane %v4981, 5
        %v4984 = vsel %vm1539, %v4979, %v4983
        %v4986 = vshrl.u32 %v439, 16
        %v4988 = vrot.slane %v4986, 4
        %v4989 = vshll.u32 %v439, 16
        %v4991 = vrot.slane %v4989, 5
        %v4992 = vor.u32 %v4988, %v4991
        %v4993 = vrot.slane %v4992, 4
        %v4995 = vshll.u32 %v440, 16
        %v4997 = vrot.slane %v4995, 5
        %v4998 = vsel %vm1539, %v4993, %v4997
        %v4999 = vshrl.u32 %v440, 16
        %v5001 = vrot.slane %v4999, 4
        %v5002 = vor.u32 %v5001, %v4997
        %v5003 = vrot.slane %v5002, 4
        %v5005 = vshll.u32 %v441, 16
        %v5007 = vrot.slane %v5005, 5
        %v5008 = vsel %vm1539, %v5003, %v5007
        %v5009 = vld [vmem:[#allocation8] sm:$0xf]
        %v5010 = vld [vmem:[#allocation8 + $0x4] sm:$0xf]
        %v5011 = vld [vmem:[#allocation8 + $0x8] sm:$0xf]
        %v5012 = vld [vmem:[#allocation8 + $0xc] sm:$0xf]
        %v5013 = vld [vmem:[#allocation8 + $0x10] sm:$0xf]
        %v5014 = vld [vmem:[#allocation8 + $0x14] sm:$0xf]
        %v5015 = vld [vmem:[#allocation8 + $0x18] sm:$0xf]
        %v5016 = vld [vmem:[#allocation8 + $0x1c] sm:$0xf]
        %v5017 = vld [vmem:[#allocation8 + $0x20] sm:$0xf]
        %v5018 = vld [vmem:[#allocation8 + $0x24] sm:$0xf]
        %v5019 = vld [vmem:[#allocation8 + $0x28] sm:$0xf]
        %v5020 = vld [vmem:[#allocation8 + $0x2c] sm:$0xf]
        %v5021 = vld [vmem:[#allocation8 + $0x30] sm:$0xf]
        %v5022 = vld [vmem:[#allocation8 + $0x34] sm:$0xf]
        %v5023 = vld [vmem:[#allocation8 + $0x38] sm:$0xf]
        %v5024 = vld [vmem:[#allocation8 + $0x3c] sm:$0xf]
        %v5025 = vunpack.c.l.b16 %v4638
        %v5026 = vunpack.c.l.b16 %v4648
        %v5027 = vunpack.c.l.b16 %v4662
        %v5028 = vunpack.c.l.b16 %v4672
        %v5029 = vunpack.c.l.b16 %v4686
        %v5030 = vunpack.c.l.b16 %v4696
        %v5031 = vunpack.c.l.b16 %v4710
        %v5032 = vunpack.c.l.b16 %v4720
        %v5033 = vunpack.c.l.b16 %v4734
        %v5034 = vunpack.c.l.b16 %v4744
        %v5035 = vunpack.c.l.b16 %v4758
        %v5036 = vunpack.c.l.b16 %v4768
        %v5037 = vunpack.c.l.b16 %v4782
        %v5038 = vunpack.c.l.b16 %v4792
        %v5039 = vunpack.c.l.b16 %v4806
        %v5040 = vunpack.c.l.b16 %v4816
        %v5041 = vunpack.c.l.b16 %v4830
        %v5042 = vunpack.c.l.b16 %v4840
        %v5043 = vunpack.c.l.b16 %v4854
        %v5044 = vunpack.c.l.b16 %v4864
        %v5045 = vunpack.c.l.b16 %v4878
        %v5046 = vunpack.c.l.b16 %v4888
        %v5047 = vunpack.c.l.b16 %v4902
        %v5048 = vunpack.c.l.b16 %v4912
        %v5049 = vunpack.c.l.b16 %v4926
        %v5050 = vunpack.c.l.b16 %v4936
        %v5051 = vunpack.c.l.b16 %v4950
        %v5052 = vunpack.c.l.b16 %v4960
        %v5053 = vunpack.c.l.b16 %v4974
        %v5054 = vunpack.c.l.b16 %v4984
        %v5055 = vunpack.c.l.b16 %v4998
        %v5056 = vunpack.c.l.b16 %v5008
        %v5057 = vpack.c.b16 %v5026, %v5025
        %v5058 = vpack.c.b16 %v5028, %v5027
        %v5059 = vpack.c.b16 %v5030, %v5029
        %v5060 = vpack.c.b16 %v5032, %v5031
        %v5061 = vpack.c.b16 %v5034, %v5033
        %v5062 = vpack.c.b16 %v5036, %v5035
        %v5063 = vpack.c.b16 %v5038, %v5037
        %v5064 = vpack.c.b16 %v5040, %v5039
        %v5065 = vpack.c.b16 %v5042, %v5041
        %v5066 = vpack.c.b16 %v5044, %v5043
        %v5067 = vpack.c.b16 %v5046, %v5045
        %v5068 = vpack.c.b16 %v5048, %v5047
        %v5069 = vpack.c.b16 %v5050, %v5049
        %v5070 = vpack.c.b16 %v5052, %v5051
        %v5071 = vpack.c.b16 %v5054, %v5053
        %v5072 = vpack.c.b16 %v5056, %v5055
        %v5105 = vunpack.c.l.b16 %v5009
        %v5106 = vunpack.c.l.b16 %v5010
        %v5107 = vunpack.c.l.b16 %v5011
        %v5108 = vunpack.c.l.b16 %v5012
        %v5109 = vunpack.c.l.b16 %v5013
        %v5110 = vunpack.c.l.b16 %v5014
        %v5111 = vunpack.c.l.b16 %v5015
        %v5112 = vunpack.c.l.b16 %v5016
        %v5113 = vunpack.c.l.b16 %v5017
        %v5114 = vunpack.c.l.b16 %v5018
        %v5115 = vunpack.c.l.b16 %v5019
        %v5116 = vunpack.c.l.b16 %v5020
        %v5117 = vunpack.c.l.b16 %v5021
        %v5118 = vunpack.c.l.b16 %v5022
        %v5119 = vunpack.c.l.b16 %v5023
        %v5120 = vunpack.c.l.b16 %v5024
        %v5121 = vpack.c.b16 %v5106, %v5105
        %v5122 = vpack.c.b16 %v5108, %v5107
        %v5123 = vpack.c.b16 %v5110, %v5109
        %v5124 = vpack.c.b16 %v5112, %v5111
        %v5125 = vpack.c.b16 %v5114, %v5113
        %v5126 = vpack.c.b16 %v5116, %v5115
        %v5127 = vpack.c.b16 %v5118, %v5117
        %v5128 = vpack.c.b16 %v5120, %v5119
        %5137 = vmatprep.subr.bf16.mxu0 0
        %5138 = vmatpush1.bf16.msra.mxu0 %v5121
        %5139 = vmatprep.subr.bf16.mxu0 0
        %5140 = vmatpush1.bf16.msra.mxu0 %v5122
        %5141 = vmatprep.subr.bf16.mxu0 0
        %5142 = vmatpush1.bf16.msra.mxu0 %v5123
        %5143 = vmatprep.subr.bf16.mxu0 0
        %5144 = vmatpush1.bf16.msra.mxu0 %v5124
        %5145 = vmatprep.subr.bf16.mxu0 0
        %5146 = vmatpush1.bf16.msra.mxu0 %v5125
        %5147 = vmatprep.subr.bf16.mxu0 0
        %5148 = vmatpush1.bf16.msra.mxu0 %v5126
        %5149 = vmatprep.subr.bf16.mxu0 0
        %5150 = vmatpush1.bf16.msra.mxu0 %v5127
        %5151 = vmatprep.subr.bf16.mxu0 0
        %5152 = vmatpush1.bf16.msra.mxu0 %v5128
        %5153 = vmatprep.subr.bf16.mxu0 0
        %5154 = vmatpush1.bf16.msra.mxu0 0
        %5155 = vmatprep.subr.bf16.mxu0 0
        %5156 = vmatpush1.bf16.msra.mxu0 0
        %5157 = vmatprep.subr.bf16.mxu0 0
        %5158 = vmatpush1.bf16.msra.mxu0 0
        %5159 = vmatprep.subr.bf16.mxu0 0
        %5160 = vmatpush1.bf16.msra.mxu0 0
        %5161 = vmatprep.subr.bf16.mxu0 0
        %5162 = vmatpush1.bf16.msra.mxu0 0
        %5163 = vmatprep.subr.bf16.mxu0 0
        %5164 = vmatpush1.bf16.msra.mxu0 0
        %5165 = vmatprep.subr.bf16.mxu0 0
        %5166 = vmatpush1.bf16.msra.mxu0 0
        %5167 = vmatprep.subr.bf16.mxu0 0
        %5168 = vmatpush1.bf16.msra.mxu0 0
        %5169 = vmatprep.mubr.bf16.mxu0 0
        %5170 = vmatmul.mubr.bf16.gmra.mrb[0].mxu0 %v5057
        %v5171 = vpop.f32.mrb[0].mxu0
        %v5172 = vadd.f32 0.0, %v5171
        %v5173 = vpop.f32.mrb[0].mxu0
        %v5174 = vpop.f32.mrb[0].mxu0
        %v5175 = vadd.f32 0.0, %v5174
        %v5176 = vpop.f32.mrb[0].mxu0
        %5177 = vmatprep.mubr.bf16.mxu0 0
        %5178 = vmatmul.mubr.bf16.gmra.mrb[0].mxu0 %v5058
        %v5179 = vpop.f32.mrb[0].mxu0
        %v5180 = vadd.f32 0.0, %v5179
        %v5181 = vpop.f32.mrb[0].mxu0
        %v5182 = vpop.f32.mrb[0].mxu0
        %v5183 = vadd.f32 0.0, %v5182
        %v5184 = vpop.f32.mrb[0].mxu0
        %5185 = vmatprep.mubr.bf16.mxu0 0
        %5186 = vmatmul.mubr.bf16.gmra.mrb[0].mxu0 %v5059
        %v5187 = vpop.f32.mrb[0].mxu0
        %v5188 = vadd.f32 0.0, %v5187
        %v5189 = vpop.f32.mrb[0].mxu0
        %v5190 = vpop.f32.mrb[0].mxu0
        %v5191 = vadd.f32 0.0, %v5190
        %v5192 = vpop.f32.mrb[0].mxu0
        %5193 = vmatprep.mubr.bf16.mxu0 0
        %5194 = vmatmul.mubr.bf16.gmra.mrb[0].mxu0 %v5060
        %v5195 = vpop.f32.mrb[0].mxu0
        %v5196 = vadd.f32 0.0, %v5195
        %v5197 = vpop.f32.mrb[0].mxu0
        %v5198 = vpop.f32.mrb[0].mxu0
        %v5199 = vadd.f32 0.0, %v5198
        %v5200 = vpop.f32.mrb[0].mxu0
        %5201 = vmatprep.mubr.bf16.mxu0 0
        %5202 = vmatmul.mubr.bf16.gmra.mrb[0].mxu0 %v5061
        %v5203 = vpop.f32.mrb[0].mxu0
        %v5204 = vadd.f32 0.0, %v5203
        %v5205 = vpop.f32.mrb[0].mxu0
        %v5206 = vpop.f32.mrb[0].mxu0
        %v5207 = vadd.f32 0.0, %v5206
        %v5208 = vpop.f32.mrb[0].mxu0
        %5209 = vmatprep.mubr.bf16.mxu0 0
        %5210 = vmatmul.mubr.bf16.gmra.mrb[0].mxu0 %v5062
        %v5211 = vpop.f32.mrb[0].mxu0
        %v5212 = vadd.f32 0.0, %v5211
        %v5213 = vpop.f32.mrb[0].mxu0
        %v5214 = vpop.f32.mrb[0].mxu0
        %v5215 = vadd.f32 0.0, %v5214
        %v5216 = vpop.f32.mrb[0].mxu0
        %5217 = vmatprep.mubr.bf16.mxu0 0
        %5218 = vmatmul.mubr.bf16.gmra.mrb[0].mxu0 %v5063
        %v5219 = vpop.f32.mrb[0].mxu0
        %v5220 = vadd.f32 0.0, %v5219
        %v5221 = vpop.f32.mrb[0].mxu0
        %v5222 = vpop.f32.mrb[0].mxu0
        %v5223 = vadd.f32 0.0, %v5222
        %v5224 = vpop.f32.mrb[0].mxu0
        %5225 = vmatprep.mubr.bf16.mxu0 0
        %5226 = vmatmul.mubr.bf16.gmra.mrb[0].mxu0 %v5064
        %v5227 = vpop.f32.mrb[0].mxu0
        %v5228 = vadd.f32 0.0, %v5227
        %v5229 = vpop.f32.mrb[0].mxu0
        %v5230 = vpop.f32.mrb[0].mxu0
        %v5231 = vadd.f32 0.0, %v5230
        %v5232 = vpop.f32.mrb[0].mxu0
        %5233 = vmatprep.mubr.bf16.mxu0 0
        %5234 = vmatmul.mubr.bf16.gmra.mrb[0].mxu0 %v5065
        %v5235 = vpop.f32.mrb[0].mxu0
        %v5236 = vadd.f32 0.0, %v5235
        %v5237 = vpop.f32.mrb[0].mxu0
        %v5238 = vpop.f32.mrb[0].mxu0
        %v5239 = vadd.f32 0.0, %v5238
        %v5240 = vpop.f32.mrb[0].mxu0
        %5241 = vmatprep.mubr.bf16.mxu0 0
        %5242 = vmatmul.mubr.bf16.gmra.mrb[0].mxu0 %v5066
        %v5243 = vpop.f32.mrb[0].mxu0
        %v5244 = vadd.f32 0.0, %v5243
        %v5245 = vpop.f32.mrb[0].mxu0
        %v5246 = vpop.f32.mrb[0].mxu0
        %v5247 = vadd.f32 0.0, %v5246
        %v5248 = vpop.f32.mrb[0].mxu0
        %5249 = vmatprep.mubr.bf16.mxu0 0
        %5250 = vmatmul.mubr.bf16.gmra.mrb[0].mxu0 %v5067
        %v5251 = vpop.f32.mrb[0].mxu0
        %v5252 = vadd.f32 0.0, %v5251
        %v5253 = vpop.f32.mrb[0].mxu0
        %v5254 = vpop.f32.mrb[0].mxu0
        %v5255 = vadd.f32 0.0, %v5254
        %v5256 = vpop.f32.mrb[0].mxu0
        %5257 = vmatprep.mubr.bf16.mxu0 0
        %5258 = vmatmul.mubr.bf16.gmra.mrb[0].mxu0 %v5068
        %v5259 = vpop.f32.mrb[0].mxu0
        %v5260 = vadd.f32 0.0, %v5259
        %v5261 = vpop.f32.mrb[0].mxu0
        %v5262 = vpop.f32.mrb[0].mxu0
        %v5263 = vadd.f32 0.0, %v5262
        %v5264 = vpop.f32.mrb[0].mxu0
        %5265 = vmatprep.mubr.bf16.mxu0 0
        %5266 = vmatmul.mubr.bf16.gmra.mrb[0].mxu0 %v5069
        %v5267 = vpop.f32.mrb[0].mxu0
        %v5268 = vadd.f32 0.0, %v5267
        %v5269 = vpop.f32.mrb[0].mxu0
        %v5270 = vpop.f32.mrb[0].mxu0
        %v5271 = vadd.f32 0.0, %v5270
        %v5272 = vpop.f32.mrb[0].mxu0
        %5273 = vmatprep.mubr.bf16.mxu0 0
        %5274 = vmatmul.mubr.bf16.gmra.mrb[0].mxu0 %v5070
        %v5275 = vpop.f32.mrb[0].mxu0
        %v5276 = vadd.f32 0.0, %v5275
        %v5277 = vpop.f32.mrb[0].mxu0
        %v5278 = vpop.f32.mrb[0].mxu0
        %v5279 = vadd.f32 0.0, %v5278
        %v5280 = vpop.f32.mrb[0].mxu0
        %5281 = vmatprep.mubr.bf16.mxu0 0
        %5282 = vmatmul.mubr.bf16.gmra.mrb[0].mxu0 %v5071
        %v5283 = vpop.f32.mrb[0].mxu0
        %v5284 = vadd.f32 0.0, %v5283
        %v5285 = vpop.f32.mrb[0].mxu0
        %v5286 = vpop.f32.mrb[0].mxu0
        %v5287 = vadd.f32 0.0, %v5286
        %v5288 = vpop.f32.mrb[0].mxu0
        %5289 = vmatprep.mubr.bf16.mxu0 0
        %5290 = vmatmul.mubr.bf16.gmra.mrb[0].mxu0 %v5072
        %v5291 = vpop.f32.mrb[0].mxu0
        %v5292 = vadd.f32 0.0, %v5291
        %v5293 = vpop.f32.mrb[0].mxu0
        %v5294 = vpop.f32.mrb[0].mxu0
        %v5295 = vadd.f32 0.0, %v5294
        %v5296 = vpop.f32.mrb[0].mxu0
        %5297 = vdwg.mxu0
        %v5314 = vunpack.c.l.b16 %v4609
        %v5315 = vunpack.c.l.b16 %v4610
        %v5316 = vunpack.c.l.b16 %v4611
        %v5317 = vunpack.c.l.b16 %v4612
        %v5318 = vunpack.c.l.b16 %v4613
        %v5319 = vunpack.c.l.b16 %v4614
        %v5320 = vunpack.c.l.b16 %v4615
        %v5321 = vunpack.c.l.b16 %v4616
        %v5322 = vunpack.c.l.b16 %v4617
        %v5323 = vunpack.c.l.b16 %v4618
        %v5324 = vunpack.c.l.b16 %v4619
        %v5325 = vunpack.c.l.b16 %v4620
        %v5326 = vunpack.c.l.b16 %v4621
        %v5327 = vunpack.c.l.b16 %v4622
        %v5328 = vunpack.c.l.b16 %v4623
        %v5329 = vunpack.c.l.b16 %v4624
        %v5330 = vpack.c.b16 %v5315, %v5314
        %v5331 = vpack.c.b16 %v5317, %v5316
        %v5332 = vpack.c.b16 %v5319, %v5318
        %v5333 = vpack.c.b16 %v5321, %v5320
        %v5334 = vpack.c.b16 %v5323, %v5322
        %v5335 = vpack.c.b16 %v5325, %v5324
        %v5336 = vpack.c.b16 %v5327, %v5326
        %v5337 = vpack.c.b16 %v5329, %v5328
        %5346 = vmatprep.subr.bf16.mxu0 0
        %5347 = vmatpush1.bf16.msra.mxu0 %v5330
        %5348 = vmatprep.subr.bf16.mxu0 0
        %5349 = vmatpush1.bf16.msra.mxu0 %v5331
        %5350 = vmatprep.subr.bf16.mxu0 0
        %5351 = vmatpush1.bf16.msra.mxu0 %v5332
        %5352 = vmatprep.subr.bf16.mxu0 0
        %5353 = vmatpush1.bf16.msra.mxu0 %v5333
        %5354 = vmatprep.subr.bf16.mxu0 0
        %5355 = vmatpush1.bf16.msra.mxu0 %v5334
        %5356 = vmatprep.subr.bf16.mxu0 0
        %5357 = vmatpush1.bf16.msra.mxu0 %v5335
        %5358 = vmatprep.subr.bf16.mxu0 0
        %5359 = vmatpush1.bf16.msra.mxu0 %v5336
        %5360 = vmatprep.subr.bf16.mxu0 0
        %5361 = vmatpush1.bf16.msra.mxu0 %v5337
        %5362 = vmatprep.subr.bf16.mxu0 0
        %5363 = vmatpush1.bf16.msra.mxu0 0
        %5364 = vmatprep.subr.bf16.mxu0 0
        %5365 = vmatpush1.bf16.msra.mxu0 0
        %5366 = vmatprep.subr.bf16.mxu0 0
        %5367 = vmatpush1.bf16.msra.mxu0 0
        %5368 = vmatprep.subr.bf16.mxu0 0
        %5369 = vmatpush1.bf16.msra.mxu0 0
        %5370 = vmatprep.subr.bf16.mxu0 0
        %5371 = vmatpush1.bf16.msra.mxu0 0
        %5372 = vmatprep.subr.bf16.mxu0 0
        %5373 = vmatpush1.bf16.msra.mxu0 0
        %5374 = vmatprep.subr.bf16.mxu0 0
        %5375 = vmatpush1.bf16.msra.mxu0 0
        %5376 = vmatprep.subr.bf16.mxu0 0
        %5377 = vmatpush1.bf16.msra.mxu0 0
        %5378 = vmatprep.mubr.bf16.mxu0 0
        %5379 = vmatmul.mubr.bf16.gmra.mrb[0].mxu0 %v4593
        %v5380 = vpop.f32.mrb[0].mxu0
        %v5381 = vadd.f32 %v5172, %v5380
        %v5382 = vpop.f32.mrb[0].mxu0
        %v5383 = vpop.f32.mrb[0].mxu0
        %v5384 = vadd.f32 %v5175, %v5383
        %v5385 = vpop.f32.mrb[0].mxu0
        %5386 = vmatprep.mubr.bf16.mxu0 0
        %5387 = vmatmul.mubr.bf16.gmra.mrb[0].mxu0 %v4594
        %v5388 = vpop.f32.mrb[0].mxu0
        %v5389 = vadd.f32 %v5180, %v5388
        %v5390 = vpop.f32.mrb[0].mxu0
        %v5391 = vpop.f32.mrb[0].mxu0
        %v5392 = vadd.f32 %v5183, %v5391
        %v5393 = vpop.f32.mrb[0].mxu0
        %5394 = vmatprep.mubr.bf16.mxu0 0
        %5395 = vmatmul.mubr.bf16.gmra.mrb[0].mxu0 %v4595
        %v5396 = vpop.f32.mrb[0].mxu0
        %v5397 = vadd.f32 %v5188, %v5396
        %v5398 = vpop.f32.mrb[0].mxu0
        %v5399 = vpop.f32.mrb[0].mxu0
        %v5400 = vadd.f32 %v5191, %v5399
        %v5401 = vpop.f32.mrb[0].mxu0
        %5402 = vmatprep.mubr.bf16.mxu0 0
        %5403 = vmatmul.mubr.bf16.gmra.mrb[0].mxu0 %v4596
        %v5404 = vpop.f32.mrb[0].mxu0
        %v5405 = vadd.f32 %v5196, %v5404
        %v5406 = vpop.f32.mrb[0].mxu0
        %v5407 = vpop.f32.mrb[0].mxu0
        %v5408 = vadd.f32 %v5199, %v5407
        %v5409 = vpop.f32.mrb[0].mxu0
        %5410 = vmatprep.mubr.bf16.mxu0 0
        %5411 = vmatmul.mubr.bf16.gmra.mrb[0].mxu0 %v4597
        %v5412 = vpop.f32.mrb[0].mxu0
        %v5413 = vadd.f32 %v5204, %v5412
        %v5414 = vpop.f32.mrb[0].mxu0
        %v5415 = vpop.f32.mrb[0].mxu0
        %v5416 = vadd.f32 %v5207, %v5415
        %v5417 = vpop.f32.mrb[0].mxu0
        %5418 = vmatprep.mubr.bf16.mxu0 0
        %5419 = vmatmul.mubr.bf16.gmra.mrb[0].mxu0 %v4598
        %v5420 = vpop.f32.mrb[0].mxu0
        %v5421 = vadd.f32 %v5212, %v5420
        %v5422 = vpop.f32.mrb[0].mxu0
        %v5423 = vpop.f32.mrb[0].mxu0
        %v5424 = vadd.f32 %v5215, %v5423
        %v5425 = vpop.f32.mrb[0].mxu0
        %5426 = vmatprep.mubr.bf16.mxu0 0
        %5427 = vmatmul.mubr.bf16.gmra.mrb[0].mxu0 %v4599
        %v5428 = vpop.f32.mrb[0].mxu0
        %v5429 = vadd.f32 %v5220, %v5428
        %v5430 = vpop.f32.mrb[0].mxu0
        %v5431 = vpop.f32.mrb[0].mxu0
        %v5432 = vadd.f32 %v5223, %v5431
        %v5433 = vpop.f32.mrb[0].mxu0
        %5434 = vmatprep.mubr.bf16.mxu0 0
        %5435 = vmatmul.mubr.bf16.gmra.mrb[0].mxu0 %v4600
        %v5436 = vpop.f32.mrb[0].mxu0
        %v5437 = vadd.f32 %v5228, %v5436
        %v5438 = vpop.f32.mrb[0].mxu0
        %v5439 = vpop.f32.mrb[0].mxu0
        %v5440 = vadd.f32 %v5231, %v5439
        %v5441 = vpop.f32.mrb[0].mxu0
        %5442 = vmatprep.mubr.bf16.mxu0 0
        %5443 = vmatmul.mubr.bf16.gmra.mrb[0].mxu0 %v4601
        %v5444 = vpop.f32.mrb[0].mxu0
        %v5445 = vadd.f32 %v5236, %v5444
        %v5446 = vpop.f32.mrb[0].mxu0
        %v5447 = vpop.f32.mrb[0].mxu0
        %v5448 = vadd.f32 %v5239, %v5447
        %v5449 = vpop.f32.mrb[0].mxu0
        %5450 = vmatprep.mubr.bf16.mxu0 0
        %5451 = vmatmul.mubr.bf16.gmra.mrb[0].mxu0 %v4602
        %v5452 = vpop.f32.mrb[0].mxu0
        %v5453 = vadd.f32 %v5244, %v5452
        %v5454 = vpop.f32.mrb[0].mxu0
        %v5455 = vpop.f32.mrb[0].mxu0
        %v5456 = vadd.f32 %v5247, %v5455
        %v5457 = vpop.f32.mrb[0].mxu0
        %5458 = vmatprep.mubr.bf16.mxu0 0
        %5459 = vmatmul.mubr.bf16.gmra.mrb[0].mxu0 %v4603
        %v5460 = vpop.f32.mrb[0].mxu0
        %v5461 = vadd.f32 %v5252, %v5460
        %v5462 = vpop.f32.mrb[0].mxu0
        %v5463 = vpop.f32.mrb[0].mxu0
        %v5464 = vadd.f32 %v5255, %v5463
        %v5465 = vpop.f32.mrb[0].mxu0
        %5466 = vmatprep.mubr.bf16.mxu0 0
        %5467 = vmatmul.mubr.bf16.gmra.mrb[0].mxu0 %v4604
        %v5468 = vpop.f32.mrb[0].mxu0
        %v5469 = vadd.f32 %v5260, %v5468
        %v5470 = vpop.f32.mrb[0].mxu0
        %v5471 = vpop.f32.mrb[0].mxu0
        %v5472 = vadd.f32 %v5263, %v5471
        %v5473 = vpop.f32.mrb[0].mxu0
        %5474 = vmatprep.mubr.bf16.mxu0 0
        %5475 = vmatmul.mubr.bf16.gmra.mrb[0].mxu0 %v4605
        %v5476 = vpop.f32.mrb[0].mxu0
        %v5477 = vadd.f32 %v5268, %v5476
        %v5478 = vpop.f32.mrb[0].mxu0
        %v5479 = vpop.f32.mrb[0].mxu0
        %v5480 = vadd.f32 %v5271, %v5479
        %v5481 = vpop.f32.mrb[0].mxu0
        %5482 = vmatprep.mubr.bf16.mxu0 0
        %5483 = vmatmul.mubr.bf16.gmra.mrb[0].mxu0 %v4606
        %v5484 = vpop.f32.mrb[0].mxu0
        %v5485 = vadd.f32 %v5276, %v5484
        %v5486 = vpop.f32.mrb[0].mxu0
        %v5487 = vpop.f32.mrb[0].mxu0
        %v5488 = vadd.f32 %v5279, %v5487
        %v5489 = vpop.f32.mrb[0].mxu0
        %5490 = vmatprep.mubr.bf16.mxu0 0
        %5491 = vmatmul.mubr.bf16.gmra.mrb[0].mxu0 %v4607
        %v5492 = vpop.f32.mrb[0].mxu0
        %v5493 = vadd.f32 %v5284, %v5492
        %v5494 = vpop.f32.mrb[0].mxu0
        %v5495 = vpop.f32.mrb[0].mxu0
        %v5496 = vadd.f32 %v5287, %v5495
        %v5497 = vpop.f32.mrb[0].mxu0
        %5498 = vmatprep.mubr.bf16.mxu0 0
        %5499 = vmatmul.mubr.bf16.gmra.mrb[0].mxu0 %v4608
        %v5500 = vpop.f32.mrb[0].mxu0
        %v5501 = vadd.f32 %v5292, %v5500
        %v5502 = vpop.f32.mrb[0].mxu0
        %v5503 = vpop.f32.mrb[0].mxu0
        %v5504 = vadd.f32 %v5295, %v5503
        %v5505 = vpop.f32.mrb[0].mxu0
        %5506 = vdwg.mxu0
        %v5507 = vld [vmem:[%s7] sm:$0x1]
        %v5509 = vlaneseq
        %v5510 = vshrl.u32 %v5509, 7
        %v5511 = vsub.s32 0, %v5510
        %v5512 = vrot.slane %v5507, %v5511
        %v5514 = vadd.f32 %v5381, %v5512
        %v5515 = vadd.f32 %v5384, %v5512
        %v5516 = vadd.f32 %v5389, %v5512
        %v5517 = vadd.f32 %v5392, %v5512
        %v5518 = vadd.f32 %v5397, %v5512
        %v5519 = vadd.f32 %v5400, %v5512
        %v5520 = vadd.f32 %v5405, %v5512
        %v5521 = vadd.f32 %v5408, %v5512
        %v5522 = vadd.f32 %v5413, %v5512
        %v5523 = vadd.f32 %v5416, %v5512
        %v5524 = vadd.f32 %v5421, %v5512
        %v5525 = vadd.f32 %v5424, %v5512
        %v5526 = vadd.f32 %v5429, %v5512
        %v5527 = vadd.f32 %v5432, %v5512
        %v5528 = vadd.f32 %v5437, %v5512
        %v5529 = vadd.f32 %v5440, %v5512
        %v5530 = vadd.f32 %v5445, %v5512
        %v5531 = vadd.f32 %v5448, %v5512
        %v5532 = vadd.f32 %v5453, %v5512
        %v5533 = vadd.f32 %v5456, %v5512
        %v5534 = vadd.f32 %v5461, %v5512
        %v5535 = vadd.f32 %v5464, %v5512
        %v5536 = vadd.f32 %v5469, %v5512
        %v5537 = vadd.f32 %v5472, %v5512
        %v5538 = vadd.f32 %v5477, %v5512
        %v5539 = vadd.f32 %v5480, %v5512
        %v5540 = vadd.f32 %v5485, %v5512
        %v5541 = vadd.f32 %v5488, %v5512
        %v5542 = vadd.f32 %v5493, %v5512
        %v5543 = vadd.f32 %v5496, %v5512
        %v5544 = vadd.f32 %v5501, %v5512
        %v5545 = vadd.f32 %v5504, %v5512
        %v5546 = vmax.f32 %v5514, 0.0
        %v5547 = vmax.f32 %v5515, 0.0
        %v5548 = vmax.f32 %v5516, 0.0
        %v5549 = vmax.f32 %v5517, 0.0
        %v5550 = vmax.f32 %v5518, 0.0
        %v5551 = vmax.f32 %v5519, 0.0
        %v5552 = vmax.f32 %v5520, 0.0
        %v5553 = vmax.f32 %v5521, 0.0
        %v5554 = vmax.f32 %v5522, 0.0
        %v5555 = vmax.f32 %v5523, 0.0
        %v5556 = vmax.f32 %v5524, 0.0
        %v5557 = vmax.f32 %v5525, 0.0
        %v5558 = vmax.f32 %v5526, 0.0
        %v5559 = vmax.f32 %v5527, 0.0
        %v5560 = vmax.f32 %v5528, 0.0
        %v5561 = vmax.f32 %v5529, 0.0
        %v5562 = vmax.f32 %v5530, 0.0
        %v5563 = vmax.f32 %v5531, 0.0
        %v5564 = vmax.f32 %v5532, 0.0
        %v5565 = vmax.f32 %v5533, 0.0
        %v5566 = vmax.f32 %v5534, 0.0
        %v5567 = vmax.f32 %v5535, 0.0
        %v5568 = vmax.f32 %v5536, 0.0
        %v5569 = vmax.f32 %v5537, 0.0
        %v5570 = vmax.f32 %v5538, 0.0
        %v5571 = vmax.f32 %v5539, 0.0
        %v5572 = vmax.f32 %v5540, 0.0
        %v5573 = vmax.f32 %v5541, 0.0
        %v5574 = vmax.f32 %v5542, 0.0
        %v5575 = vmax.f32 %v5543, 0.0
        %v5576 = vmax.f32 %v5544, 0.0
        %v5577 = vmax.f32 %v5545, 0.0
        %v5578 = vpack.c.bf16 %v5547, %v5546
        %v5579 = vpack.c.bf16 %v5549, %v5548
        %v5580 = vpack.c.bf16 %v5551, %v5550
        %v5581 = vpack.c.bf16 %v5553, %v5552
        %v5582 = vpack.c.bf16 %v5555, %v5554
        %v5583 = vpack.c.bf16 %v5557, %v5556
        %v5584 = vpack.c.bf16 %v5559, %v5558
        %v5585 = vpack.c.bf16 %v5561, %v5560
        %v5586 = vpack.c.bf16 %v5563, %v5562
        %v5587 = vpack.c.bf16 %v5565, %v5564
        %v5588 = vpack.c.bf16 %v5567, %v5566
        %v5589 = vpack.c.bf16 %v5569, %v5568
        %v5590 = vpack.c.bf16 %v5571, %v5570
        %v5591 = vpack.c.bf16 %v5573, %v5572
        %v5592 = vpack.c.bf16 %v5575, %v5574
        %v5593 = vpack.c.bf16 %v5577, %v5576
        %v5610 = vunpack.c.l.b16 %v5578
        %v5611 = vunpack.c.h.b16 %v5578
        %v5612 = vunpack.c.l.b16 %v5579
        %v5613 = vunpack.c.h.b16 %v5579
        %v5614 = vunpack.c.l.b16 %v5580
        %v5615 = vunpack.c.h.b16 %v5580
        %v5616 = vunpack.c.l.b16 %v5581
        %v5617 = vunpack.c.h.b16 %v5581
        %v5618 = vunpack.c.l.b16 %v5582
        %v5619 = vunpack.c.h.b16 %v5582
        %v5620 = vunpack.c.l.b16 %v5583
        %v5621 = vunpack.c.h.b16 %v5583
        %v5622 = vunpack.c.l.b16 %v5584
        %v5623 = vunpack.c.h.b16 %v5584
        %v5624 = vunpack.c.l.b16 %v5585
        %v5625 = vunpack.c.h.b16 %v5585
        %v5626 = vunpack.c.l.b16 %v5586
        %v5627 = vunpack.c.h.b16 %v5586
        %v5628 = vunpack.c.l.b16 %v5587
        %v5629 = vunpack.c.h.b16 %v5587
        %v5630 = vunpack.c.l.b16 %v5588
        %v5631 = vunpack.c.h.b16 %v5588
        %v5632 = vunpack.c.l.b16 %v5589
        %v5633 = vunpack.c.h.b16 %v5589
        %v5634 = vunpack.c.l.b16 %v5590
        %v5635 = vunpack.c.h.b16 %v5590
        %v5636 = vunpack.c.l.b16 %v5591
        %v5637 = vunpack.c.h.b16 %v5591
        %v5638 = vunpack.c.l.b16 %v5592
        %v5639 = vunpack.c.h.b16 %v5592
        %v5640 = vunpack.c.l.b16 %v5593
        %v5641 = vunpack.c.h.b16 %v5593
        %v5642 = vpack.c.b16 %v5610, %v5610
        %v5643 = vpack.c.b16 %v5611, %v5611
        %v5644 = vpack.c.b16 %v5612, %v5612
        %v5645 = vpack.c.b16 %v5613, %v5613
        %v5646 = vpack.c.b16 %v5614, %v5614
        %v5647 = vpack.c.b16 %v5615, %v5615
        %v5648 = vpack.c.b16 %v5616, %v5616
        %v5649 = vpack.c.b16 %v5617, %v5617
        %v5650 = vpack.c.b16 %v5618, %v5618
        %v5651 = vpack.c.b16 %v5619, %v5619
        %v5652 = vpack.c.b16 %v5620, %v5620
        %v5653 = vpack.c.b16 %v5621, %v5621
        %v5654 = vpack.c.b16 %v5622, %v5622
        %v5655 = vpack.c.b16 %v5623, %v5623
        %v5656 = vpack.c.b16 %v5624, %v5624
        %v5657 = vpack.c.b16 %v5625, %v5625
        %v5658 = vpack.c.b16 %v5626, %v5626
        %v5659 = vpack.c.b16 %v5627, %v5627
        %v5660 = vpack.c.b16 %v5628, %v5628
        %v5661 = vpack.c.b16 %v5629, %v5629
        %v5662 = vpack.c.b16 %v5630, %v5630
        %v5663 = vpack.c.b16 %v5631, %v5631
        %v5664 = vpack.c.b16 %v5632, %v5632
        %v5665 = vpack.c.b16 %v5633, %v5633
        %v5666 = vpack.c.b16 %v5634, %v5634
        %v5667 = vpack.c.b16 %v5635, %v5635
        %v5668 = vpack.c.b16 %v5636, %v5636
        %v5669 = vpack.c.b16 %v5637, %v5637
        %v5670 = vpack.c.b16 %v5638, %v5638
        %v5671 = vpack.c.b16 %v5639, %v5639
        %v5672 = vpack.c.b16 %v5640, %v5640
        %v5673 = vpack.c.b16 %v5641, %v5641
        %5706 = vst [vmem:[%s384] sm:$0xf] %v5642
        %5707 = vst [vmem:[%s384 + $0x4] sm:$0xf] %v5643
        %5708 = vst [vmem:[%s384 + $0x8] sm:$0xf] %v5644
        %5709 = vst [vmem:[%s384 + $0xc] sm:$0xf] %v5645
        %5710 = vst [vmem:[%s384 + $0x10] sm:$0xf] %v5646
        %5711 = vst [vmem:[%s384 + $0x14] sm:$0xf] %v5647
        %5712 = vst [vmem:[%s384 + $0x18] sm:$0xf] %v5648
        %5713 = vst [vmem:[%s384 + $0x1c] sm:$0xf] %v5649
        %5714 = vst [vmem:[%s384 + $0x20] sm:$0xf] %v5650
        %5715 = vst [vmem:[%s384 + $0x24] sm:$0xf] %v5651
        %5716 = vst [vmem:[%s384 + $0x28] sm:$0xf] %v5652
        %5717 = vst [vmem:[%s384 + $0x2c] sm:$0xf] %v5653
        %5718 = vst [vmem:[%s384 + $0x30] sm:$0xf] %v5654
        %5719 = vst [vmem:[%s384 + $0x34] sm:$0xf] %v5655
        %5720 = vst [vmem:[%s384 + $0x38] sm:$0xf] %v5656
        %5721 = vst [vmem:[%s384 + $0x3c] sm:$0xf] %v5657
        %5722 = vst [vmem:[%s384 + $0x40] sm:$0xf] %v5658
        %5723 = vst [vmem:[%s384 + $0x44] sm:$0xf] %v5659
        %5724 = vst [vmem:[%s384 + $0x48] sm:$0xf] %v5660
        %5725 = vst [vmem:[%s384 + $0x4c] sm:$0xf] %v5661
        %5726 = vst [vmem:[%s384 + $0x50] sm:$0xf] %v5662
        %5727 = vst [vmem:[%s384 + $0x54] sm:$0xf] %v5663
        %5728 = vst [vmem:[%s384 + $0x58] sm:$0xf] %v5664
        %5729 = vst [vmem:[%s384 + $0x5c] sm:$0xf] %v5665
        %5730 = vst [vmem:[%s384 + $0x60] sm:$0xf] %v5666
        %5731 = vst [vmem:[%s384 + $0x64] sm:$0xf] %v5667
        %5732 = vst [vmem:[%s384 + $0x68] sm:$0xf] %v5668
        %5733 = vst [vmem:[%s384 + $0x6c] sm:$0xf] %v5669
        %5734 = vst [vmem:[%s384 + $0x70] sm:$0xf] %v5670
        %5735 = vst [vmem:[%s384 + $0x74] sm:$0xf] %v5671
        %5736 = vst [vmem:[%s384 + $0x78] sm:$0xf] %v5672
        %5737 = vst [vmem:[%s384 + $0x7c] sm:$0xf] %v5673
        %s5738 = sand.u32 %s228, 1
        %s5739 = scalar_lea.sflag [#allocation4], %s5738
        %s5740 = sand.u32 %s228, 1
        %s5741 = smul.addr %s5740, 128
        %s5742 = scalar_lea.vmem [#allocation10], %s5741
        // Predicated region
        $region73: #{tpu_custom_call.1} parent=55 // pred_check
          %p5743 = pneg %p238
        $region74: #{tpu_custom_call.1} parent=55 // pred_check_branch
          %5745 = sbr.rel (%p5743) target = $region76
        $region75: #{tpu_custom_call.1} parent=55 // pred_region
          %s5747 = ssub.s32 2048, 2048
          %5748 = vsyncadd %s5739, %s5747
          %s5749 = smul.addr %s26, 32
          %s5750 = smul.addr %s5749, 64
          %s5751 = scalar_lea.hbm %s9, %s5750
          %s5752 = sshll.u32 %s5742, 4
          %s5753 = int_to_ptr.vmem [resolvable:$true] %s5752
          %5758 = dma.vmem_to_hbm [thread:$0]  %s5753, 2048, %s5751, %s5739, 64, 64, 4
        $region76: #{tpu_custom_call.1} parent=55 // pred_fallthru
          _
      $region56: #{tpu_custom_call.1} parent=5 // pred_fallthru
        _
      %p5759 = scmp.le.s32.totalorder 2, %s21
      // Predicated region
      $region77: #{tpu_custom_call.1} parent=5 // pred_check
        %p5760 = pneg %p5759
      $region78: #{tpu_custom_call.1} parent=5 // pred_check_branch
        %5762 = sbr.rel (%p5760) target = $region80
      $region79: #{tpu_custom_call.1} parent=5 // pred_region
        %s5763 = ssub.s32 %s21, 2
        // Predicated region
        $region81: #{tpu_custom_call.1} parent=79 // pred_check
          %p5764 = pneg %p244
        $region82: #{tpu_custom_call.1} parent=79 // pred_check_branch
          %5766 = sbr.rel (%p5764) target = $region84
        $region83: #{tpu_custom_call.1} parent=79 // pred_region
          %s5767 = sand.u32 %s229, 1
          %s5768 = scalar_lea.sflag [#allocation4], %s5767
          %s5769 = sand.u32 %s229, 1
          %s5770 = smul.addr %s5769, 128
          %s5771 = scalar_lea.vmem [#allocation10], %s5770
          %5772 = dma.done %s5768, 2048
        $region84: #{tpu_custom_call.1} parent=79 // pred_fallthru
          _
      $region80: #{tpu_custom_call.1} parent=5 // pred_fallthru
        _
    $region6: #{tpu_custom_call.1} parent=1 // loop_footer
      %s25 = sadd.s32 1, %s21
    $region7: #{tpu_custom_call.1} parent=1 // loop_footer_branch
      %20 = sbr.rel target = $region3
    $region8: #{tpu_custom_call.1} parent=1 // loop_exit
      _
    %5773 = vsyncpa [#allocation3], 1
    %s5774 = scalar_lea.sflag [#allocation3], 1
    %5775 = vsyncpa %s5774, 1
    %5776 = vsyncpa [#allocation6], 1
    %5777 = vsyncpa [#allocation9], 1
    %5778 = vsyncpa [#allocation4], 1
    %s5779 = scalar_lea.sflag [#allocation4], 1
    %5780 = vsyncpa %s5779, 1

</llo_original>
